<compile_context>
chip_gen: v7x
topology: tpu7x:2x2x1
jax: 0.10.0
libtpu: 0.0.40
codegen_flags: <defaults>
</compile_context>

<pallas_src>
import functools

import jax
import jax.numpy as jnp
import numpy as np
from jax.experimental import pallas as pl
from jax.experimental.pallas import tpu as pltpu


# ---------------------------------------------------------------------------
# Fused Pallas kernel: embedding gather + all layers + final vocab projection
# ---------------------------------------------------------------------------

def fused_model_kernel(ids_ref,                                    # (B, S) int32 in SMEM (scalar prefetch)
                       emb_ref,                                    # (V, D) embedding table (VMEM)
                       wqkv_ref, bqkv_ref, wo_ref, bo_ref,         # (L,D,3D) (L,1,3D) (L,D,D) (L,1,D)
                       lnw_ref, lnb_ref,                           # (L,1,D) (L,1,D)
                       ow_ref, ob_ref,                             # (D,Vpad) (1,Vpad)
                       logits_ref,                                 # (1, S, Vpad) output block
                       x_scratch,                                  # (S, D) f32 VMEM scratch
                       *, num_heads, head_dim, hidden_dim, seq_len, num_layers):
    b = pl.program_id(0)
    D, H, Dh, S = hidden_dim, num_heads, head_dim, seq_len
    scale = 1.0 / float(Dh) ** 0.5

    # ---- fused embedding gather: token ids from SMEM, rows from the VMEM table ----
    for s in range(S):                                   # static unroll, S is small
        tok = ids_ref[b, s]
        x_scratch[pl.ds(s, 1), :] = emb_ref[pl.ds(tok, 1), :]
    h = x_scratch[...]                                   # (S, D) f32

    # ---- transformer layers: weights are VMEM-resident, indexed statically by layer ----
    for l in range(num_layers):                          # static unroll over layers
        # fused QKV projection: one (S, D) @ (D, 3D) MXU matmul
        qkv = jnp.dot(h, wqkv_ref[l], preferred_element_type=jnp.float32) + bqkv_ref[l]
        q = qkv[:, 0 * D:1 * D].reshape(S, H, Dh)
        k = qkv[:, 1 * D:2 * D].reshape(S, H, Dh)
        v = qkv[:, 2 * D:3 * D].reshape(S, H, Dh)

        # batched-head attention (no per-head lane slicing / concatenation)
        scores = jnp.einsum("qhd,khd->hqk", q, k,
                            preferred_element_type=jnp.float32) * scale       # (H, S, S)
        scores = scores - jnp.max(scores, axis=-1, keepdims=True)
        p = jnp.exp(scores)
        p = p / jnp.sum(p, axis=-1, keepdims=True)        # exact division (tight numerics)
        ctx = jnp.einsum("hqk,khd->qhd", p, v,
                         preferred_element_type=jnp.float32).reshape(S, D)     # (S, D)

        # out-projection + residual + LayerNorm (biased variance, eps=1e-5 like PyTorch)
        att = jnp.dot(ctx, wo_ref[l], preferred_element_type=jnp.float32) + bo_ref[l]
        res = h + att
        mean = jnp.mean(res, axis=-1, keepdims=True)
        var = jnp.mean((res - mean) ** 2, axis=-1, keepdims=True)
        h = (res - mean) * jax.lax.rsqrt(var + 1e-5) * lnw_ref[l] + lnb_ref[l]

    # ---- final vocab projection, lane-dense store (Vpad is a multiple of 128) ----
    logits = jnp.dot(h, ow_ref[...], preferred_element_type=jnp.float32) + ob_ref[...]
    logits_ref[0] = logits.astype(logits_ref.dtype)


# ---------------------------------------------------------------------------
# Wrapper: one pallas_call for the whole model
# ---------------------------------------------------------------------------

def model_forward(token_ids, params, num_heads):
    kp = params["stacked"]
    emb = params["embedding"]
    B, S = token_ids.shape
    V, D = emb.shape
    L = kp["wqkv"].shape[0]
    V_pad = kp["ow_pad"].shape[1]
    Dh = D // num_heads

    kernel = functools.partial(fused_model_kernel, num_heads=num_heads, head_dim=Dh,
                               hidden_dim=D, seq_len=S, num_layers=L)

    grid_spec = pltpu.PrefetchScalarGridSpec(
        num_scalar_prefetch=1,           # token_ids -> SMEM, available to kernel + index_maps
        grid=(B,),
        in_specs=[
            # Constant block indices => each operand is DMA'd once and stays VMEM-resident.
            pl.BlockSpec((V, D), lambda b, ids: (0, 0)),              # embedding table
            pl.BlockSpec((L, D, 3 * D), lambda b, ids: (0, 0, 0)),    # stacked in_proj W^T
            pl.BlockSpec((L, 1, 3 * D), lambda b, ids: (0, 0, 0)),    # stacked in_proj bias
            pl.BlockSpec((L, D, D), lambda b, ids: (0, 0, 0)),        # stacked out_proj W^T
            pl.BlockSpec((L, 1, D), lambda b, ids: (0, 0, 0)),        # stacked out_proj bias
            pl.BlockSpec((L, 1, D), lambda b, ids: (0, 0, 0)),        # stacked LN weight
            pl.BlockSpec((L, 1, D), lambda b, ids: (0, 0, 0)),        # stacked LN bias
            pl.BlockSpec((D, V_pad), lambda b, ids: (0, 0)),          # output proj W^T (padded)
            pl.BlockSpec((1, V_pad), lambda b, ids: (0, 0)),          # output proj bias (padded)
        ],
        out_specs=pl.BlockSpec((1, S, V_pad), lambda b, ids: (b, 0, 0)),
        scratch_shapes=[pltpu.VMEM((S, D), jnp.float32)],
    )

    logits_pad = pl.pallas_call(
        kernel,
        out_shape=jax.ShapeDtypeStruct((B, S, V_pad), jnp.float32),
        grid_spec=grid_spec,
        compiler_params=pltpu.CompilerParams(dimension_semantics=("parallel",)),
    )(token_ids.astype(jnp.int32), emb, kp["wqkv"], kp["bqkv"], kp["wo"], kp["bo"],
      kp["lnw"], kp["lnb"], kp["ow_pad"], kp["ob_pad"])

    return logits_pad[:, :, :V]


# ---------------------------------------------------------------------------
# Deterministic parameter construction (mirrors the nn.Module __init__ shapes)
# ---------------------------------------------------------------------------

def make_params(key, vocab_size, hidden_dim, num_heads, num_layers):
    D, V = hidden_dim, vocab_size
    V_pad = ((V + 127) // 128) * 128
    keys = jax.random.split(key, 4 * num_layers + 3)
    ki = iter(range(len(keys)))

    def nrm(shape, scale=0.05):
        return (scale * jax.random.normal(keys[next(ki)], shape)).astype(jnp.float32)

    params = {"embedding": nrm((V, D)), "layers_raw": []}
    wqkv, bqkv, wo, bo, lnw, lnb = [], [], [], [], [], []

    for _ in range(num_layers):
        in_proj_w = nrm((3 * D, D))          # nn.MultiheadAttention.in_proj_weight
        in_proj_b = nrm((3 * D,))            # in_proj_bias
        out_proj_w = nrm((D, D))             # out_proj.weight
        out_proj_b = nrm((D,))               # out_proj.bias
        ln_w = jnp.ones((D,), jnp.float32)   # nn.LayerNorm defaults
        ln_b = jnp.zeros((D,), jnp.float32)

        params["layers_raw"].append({"in_w": in_proj_w, "in_b": in_proj_b,
                                     "out_w": out_proj_w, "out_b": out_proj_b,
                                     "ln_w": ln_w, "ln_b": ln_b})
        wqkv.append(in_proj_w.T)                       # (D, 3D), columns ordered q|k|v
        bqkv.append(in_proj_b.reshape(1, 3 * D))
        wo.append(out_proj_w.T)                        # (D, D)
        bo.append(out_proj_b.reshape(1, D))
        lnw.append(ln_w.reshape(1, D))
        lnb.append(ln_b.reshape(1, D))

    out_w = nrm((V, D))                      # nn.Linear(hidden_dim, vocab_size).weight
    out_b = nrm((V,))
    params["out_w_raw"] = out_w
    params["out_b_raw"] = out_b

    # Zero-pad the vocab axis to a 128 multiple so the kernel's logits store is lane-dense.
    ow_pad = jnp.zeros((D, V_pad), jnp.float32).at[:, :V].set(out_w.T)
    ob_pad = jnp.zeros((1, V_pad), jnp.float32).at[:, :V].set(out_b)

    params["stacked"] = {
        "wqkv": jnp.stack(wqkv), "bqkv": jnp.stack(bqkv),
        "wo": jnp.stack(wo), "bo": jnp.stack(bo),
        "lnw": jnp.stack(lnw), "lnb": jnp.stack(lnb),
        "ow_pad": ow_pad, "ob_pad": ob_pad,
    }
    return params


# ---------------------------------------------------------------------------
# Pure-JAX reference (PyTorch semantics) for the correctness check
# ---------------------------------------------------------------------------

def reference_forward(token_ids, params, num_heads):
    hp = jax.lax.Precision.HIGHEST
    x = jnp.take(params["embedding"], token_ids, axis=0)
    B, S, D = x.shape
    H, Dh = num_heads, D // num_heads
    for r in params["layers_raw"]:
        qkv = jnp.matmul(x, r["in_w"].T, precision=hp) + r["in_b"]
        q, k, v = jnp.split(qkv, 3, axis=-1)
        sp = lambda t: t.reshape(B, S, H, Dh).transpose(0, 2, 1, 3)
        q, k, v = sp(q), sp(k), sp(v)
        s = jnp.einsum("bhqd,bhkd->bhqk", q, k, precision=hp) / jnp.sqrt(jnp.float32(Dh))
        p = jax.nn.softmax(s, axis=-1)
        ctx = jnp.einsum("bhqk,bhkd->bhqd", p, v,
                         precision=hp).transpose(0, 2, 1, 3).reshape(B, S, D)
        att = jnp.matmul(ctx, r["out_w"].T, precision=hp) + r["out_b"]
        res = x + att
        mean = res.mean(-1, keepdims=True)
        var = ((res - mean) ** 2).mean(-1, keepdims=True)
        x = (res - mean) / jnp.sqrt(var + 1e-5) * r["ln_w"] + r["ln_b"]
    return jnp.matmul(x, params["out_w_raw"].T, precision=hp) + params["out_b_raw"]


# ---------------------------------------------------------------------------
# Main
# ---------------------------------------------------------------------------

if __name__ == "__main__":
    vocab_size, hidden_dim, num_heads, num_layers = 50, 32, 4, 2
    batch, seq = 2, 8

    key = jax.random.PRNGKey(0)
    k_ids, k_params = jax.random.split(key)
    token_ids = jax.random.randint(k_ids, (batch, seq), 0, vocab_size, dtype=jnp.int32)

    params = make_params(k_params, vocab_size, hidden_dim, num_heads, num_layers)

    logits = jax.block_until_ready(model_forward(token_ids, params, num_heads))
    ref = jax.block_until_ready(reference_forward(token_ids, params, num_heads))

    # Exact softmax division (no approx reciprocal) lets the tolerance drop from 1e-2
    # to 2e-3; the remaining slack covers matmul-precision differences between the
    # MXU path and the XLA reference.
    np.testing.assert_allclose(np.asarray(logits), np.asarray(ref), rtol=2e-3, atol=2e-3)

    assert logits.shape == (batch, seq, vocab_size)
    print("KERNEL_OK")
</pallas_src>

<mosaic_0001>
module attributes {stable_mosaic.version = 11 : i64} {
  func.func @fused_model_kernel(%arg0: i32, %arg1: memref<2x8xi32, #tpu.memory_space<smem>>, %arg2: memref<50x32xf32, #tpu.memory_space<vmem>>, %arg3: memref<2x32x96xf32, #tpu.memory_space<vmem>>, %arg4: memref<2x1x96xf32, #tpu.memory_space<vmem>>, %arg5: memref<2x32x32xf32, #tpu.memory_space<vmem>>, %arg6: memref<2x1x32xf32, #tpu.memory_space<vmem>>, %arg7: memref<2x1x32xf32, #tpu.memory_space<vmem>>, %arg8: memref<2x1x32xf32, #tpu.memory_space<vmem>>, %arg9: memref<32x128xf32, #tpu.memory_space<vmem>>, %arg10: memref<1x128xf32, #tpu.memory_space<vmem>>, %arg11: memref<1x8x128xf32, #tpu.memory_space<vmem>>, %arg12: memref<8x32xf32, #tpu.memory_space<vmem>>) attributes {dimension_semantics = [#tpu.dimension_semantics<parallel>], iteration_bounds = array<i64: 2>, scalar_prefetch = 1 : i64, scratch_operands = 1 : i64, tpu.core_type = #tpu.core_type<tc>, window_params = [{pipeline_mode = #tpu.pipeline_mode<synchronous>, transform_indices = @transform_0, window_bounds = array<i64: 50, 32>}, {pipeline_mode = #tpu.pipeline_mode<synchronous>, transform_indices = @transform_1, window_bounds = array<i64: 2, 32, 96>}, {pipeline_mode = #tpu.pipeline_mode<synchronous>, transform_indices = @transform_2, window_bounds = array<i64: 2, 1, 96>}, {pipeline_mode = #tpu.pipeline_mode<synchronous>, transform_indices = @transform_3, window_bounds = array<i64: 2, 32, 32>}, {pipeline_mode = #tpu.pipeline_mode<synchronous>, transform_indices = @transform_4, window_bounds = array<i64: 2, 1, 32>}, {pipeline_mode = #tpu.pipeline_mode<synchronous>, transform_indices = @transform_5, window_bounds = array<i64: 2, 1, 32>}, {pipeline_mode = #tpu.pipeline_mode<synchronous>, transform_indices = @transform_6, window_bounds = array<i64: 2, 1, 32>}, {pipeline_mode = #tpu.pipeline_mode<synchronous>, transform_indices = @transform_7, window_bounds = array<i64: 32, 128>}, {pipeline_mode = #tpu.pipeline_mode<synchronous>, transform_indices = @transform_8, window_bounds = array<i64: 1, 128>}, {transform_indices = @transform_9, window_bounds = array<i64: 1, 8, 128>}]} {
    %0 = arith.index_cast %arg0 : i32 to index
    %c0 = arith.constant 0 : index
    %1 = memref.load %arg1[%0, %c0] : memref<2x8xi32, #tpu.memory_space<smem>>
    %2 = arith.index_cast %1 : i32 to index
    %c0_0 = arith.constant 0 : index
    %3 = vector.load %arg2[%2, %c0_0] : memref<50x32xf32, #tpu.memory_space<vmem>>, vector<1x32xf32>
    %c0_1 = arith.constant 0 : index
    %c0_2 = arith.constant 0 : index
    %4 = vector.load %arg12[%c0_1, %c0_2] : memref<8x32xf32, #tpu.memory_space<vmem>>, vector<1x32xf32>
    tpu.vector_store %arg12[%c0_1, %c0_2], %3 {strides = array<i32>} : memref<8x32xf32, #tpu.memory_space<vmem>>, vector<1x32xf32>,
    %5 = arith.index_cast %arg0 : i32 to index
    %c1 = arith.constant 1 : index
    %6 = memref.load %arg1[%5, %c1] : memref<2x8xi32, #tpu.memory_space<smem>>
    %7 = arith.index_cast %6 : i32 to index
    %c0_3 = arith.constant 0 : index
    %8 = vector.load %arg2[%7, %c0_3] : memref<50x32xf32, #tpu.memory_space<vmem>>, vector<1x32xf32>
    %c1_4 = arith.constant 1 : index
    %c0_5 = arith.constant 0 : index
    %9 = vector.load %arg12[%c1_4, %c0_5] : memref<8x32xf32, #tpu.memory_space<vmem>>, vector<1x32xf32>
    tpu.vector_store %arg12[%c1_4, %c0_5], %8 {strides = array<i32>} : memref<8x32xf32, #tpu.memory_space<vmem>>, vector<1x32xf32>,
    %10 = arith.index_cast %arg0 : i32 to index
    %c2 = arith.constant 2 : index
    %11 = memref.load %arg1[%10, %c2] : memref<2x8xi32, #tpu.memory_space<smem>>
    %12 = arith.index_cast %11 : i32 to index
    %c0_6 = arith.constant 0 : index
    %13 = vector.load %arg2[%12, %c0_6] : memref<50x32xf32, #tpu.memory_space<vmem>>, vector<1x32xf32>
    %c2_7 = arith.constant 2 : index
    %c0_8 = arith.constant 0 : index
    %14 = vector.load %arg12[%c2_7, %c0_8] : memref<8x32xf32, #tpu.memory_space<vmem>>, vector<1x32xf32>
    tpu.vector_store %arg12[%c2_7, %c0_8], %13 {strides = array<i32>} : memref<8x32xf32, #tpu.memory_space<vmem>>, vector<1x32xf32>,
    %15 = arith.index_cast %arg0 : i32 to index
    %c3 = arith.constant 3 : index
    %16 = memref.load %arg1[%15, %c3] : memref<2x8xi32, #tpu.memory_space<smem>>
    %17 = arith.index_cast %16 : i32 to index
    %c0_9 = arith.constant 0 : index
    %18 = vector.load %arg2[%17, %c0_9] : memref<50x32xf32, #tpu.memory_space<vmem>>, vector<1x32xf32>
    %c3_10 = arith.constant 3 : index
    %c0_11 = arith.constant 0 : index
    %19 = vector.load %arg12[%c3_10, %c0_11] : memref<8x32xf32, #tpu.memory_space<vmem>>, vector<1x32xf32>
    tpu.vector_store %arg12[%c3_10, %c0_11], %18 {strides = array<i32>} : memref<8x32xf32, #tpu.memory_space<vmem>>, vector<1x32xf32>,
    %20 = arith.index_cast %arg0 : i32 to index
    %c4 = arith.constant 4 : index
    %21 = memref.load %arg1[%20, %c4] : memref<2x8xi32, #tpu.memory_space<smem>>
    %22 = arith.index_cast %21 : i32 to index
    %c0_12 = arith.constant 0 : index
    %23 = vector.load %arg2[%22, %c0_12] : memref<50x32xf32, #tpu.memory_space<vmem>>, vector<1x32xf32>
    %c4_13 = arith.constant 4 : index
    %c0_14 = arith.constant 0 : index
    %24 = vector.load %arg12[%c4_13, %c0_14] : memref<8x32xf32, #tpu.memory_space<vmem>>, vector<1x32xf32>
    tpu.vector_store %arg12[%c4_13, %c0_14], %23 {strides = array<i32>} : memref<8x32xf32, #tpu.memory_space<vmem>>, vector<1x32xf32>,
    %25 = arith.index_cast %arg0 : i32 to index
    %c5 = arith.constant 5 : index
    %26 = memref.load %arg1[%25, %c5] : memref<2x8xi32, #tpu.memory_space<smem>>
    %27 = arith.index_cast %26 : i32 to index
    %c0_15 = arith.constant 0 : index
    %28 = vector.load %arg2[%27, %c0_15] : memref<50x32xf32, #tpu.memory_space<vmem>>, vector<1x32xf32>
    %c5_16 = arith.constant 5 : index
    %c0_17 = arith.constant 0 : index
    %29 = vector.load %arg12[%c5_16, %c0_17] : memref<8x32xf32, #tpu.memory_space<vmem>>, vector<1x32xf32>
    tpu.vector_store %arg12[%c5_16, %c0_17], %28 {strides = array<i32>} : memref<8x32xf32, #tpu.memory_space<vmem>>, vector<1x32xf32>,
    %30 = arith.index_cast %arg0 : i32 to index
    %c6 = arith.constant 6 : index
    %31 = memref.load %arg1[%30, %c6] : memref<2x8xi32, #tpu.memory_space<smem>>
    %32 = arith.index_cast %31 : i32 to index
    %c0_18 = arith.constant 0 : index
    %33 = vector.load %arg2[%32, %c0_18] : memref<50x32xf32, #tpu.memory_space<vmem>>, vector<1x32xf32>
    %c6_19 = arith.constant 6 : index
    %c0_20 = arith.constant 0 : index
    %34 = vector.load %arg12[%c6_19, %c0_20] : memref<8x32xf32, #tpu.memory_space<vmem>>, vector<1x32xf32>
    tpu.vector_store %arg12[%c6_19, %c0_20], %33 {strides = array<i32>} : memref<8x32xf32, #tpu.memory_space<vmem>>, vector<1x32xf32>,
    %35 = arith.index_cast %arg0 : i32 to index
    %c7 = arith.constant 7 : index
    %36 = memref.load %arg1[%35, %c7] : memref<2x8xi32, #tpu.memory_space<smem>>
    %37 = arith.index_cast %36 : i32 to index
    %c0_21 = arith.constant 0 : index
    %38 = vector.load %arg2[%37, %c0_21] : memref<50x32xf32, #tpu.memory_space<vmem>>, vector<1x32xf32>
    %c7_22 = arith.constant 7 : index
    %c0_23 = arith.constant 0 : index
    %39 = vector.load %arg12[%c7_22, %c0_23] : memref<8x32xf32, #tpu.memory_space<vmem>>, vector<1x32xf32>
    tpu.vector_store %arg12[%c7_22, %c0_23], %38 {strides = array<i32>} : memref<8x32xf32, #tpu.memory_space<vmem>>, vector<1x32xf32>,
    %c0_24 = arith.constant 0 : index
    %c0_25 = arith.constant 0 : index
    %40 = vector.load %arg12[%c0_24, %c0_25] : memref<8x32xf32, #tpu.memory_space<vmem>>, vector<8x32xf32>
    %c0_26 = arith.constant 0 : index
    %c0_27 = arith.constant 0 : index
    %c0_28 = arith.constant 0 : index
    %41 = vector.load %arg3[%c0_26, %c0_27, %c0_28] : memref<2x32x96xf32, #tpu.memory_space<vmem>>, vector<1x32x96xf32>
    %42 = vector.shape_cast %41 : vector<1x32x96xf32> to vector<32x96xf32>
    %cst = arith.constant dense<0.000000e+00> : vector<8x96xf32>
    %43 = tpu.matmul %40, %42, %cst {dimension_numbers = #tpu.dot_dimension_numbers<[1], [0], [0], [1], [0, 0, 1, 1], [], []>} : vector<8x32xf32>, vector<32x96xf32>, vector<8x96xf32> -> vector<8x96xf32>
    %c0_29 = arith.constant 0 : index
    %c0_30 = arith.constant 0 : index
    %c0_31 = arith.constant 0 : index
    %44 = vector.load %arg4[%c0_29, %c0_30, %c0_31] : memref<2x1x96xf32, #tpu.memory_space<vmem>>, vector<1x1x96xf32>
    %45 = vector.shape_cast %44 : vector<1x1x96xf32> to vector<1x96xf32>
    %46 = vector.broadcast %45 : vector<1x96xf32> to vector<8x96xf32>
    %47 = arith.addf %43, %46 : vector<8x96xf32>
    %48 = vector.extract_strided_slice %47 {offsets = [0, 0], sizes = [8, 32], strides = [1, 1]} : vector<8x96xf32> to vector<8x32xf32>
    %49 = vector.shape_cast %48 : vector<8x32xf32> to vector<8x4x8xf32>
    %50 = vector.extract_strided_slice %47 {offsets = [0, 32], sizes = [8, 32], strides = [1, 1]} : vector<8x96xf32> to vector<8x32xf32>
    %51 = vector.shape_cast %50 : vector<8x32xf32> to vector<8x4x8xf32>
    %52 = vector.extract_strided_slice %47 {offsets = [0, 64], sizes = [8, 32], strides = [1, 1]} : vector<8x96xf32> to vector<8x32xf32>
    %53 = vector.shape_cast %52 : vector<8x32xf32> to vector<8x4x8xf32>
    "tpu.trace_start"() <{level = 10 : i32, message = "qhd,khd->hqk"}> : () -> ()
    %cst_32 = arith.constant dense<0.000000e+00> : vector<4x8x8xf32>
    %54 = tpu.matmul %49, %51, %cst_32 {dimension_numbers = #tpu.dot_dimension_numbers<[2], [2], [0], [0], [0, 1, 0, 0, 1, 0], [1], [1]>} : vector<8x4x8xf32>, vector<8x4x8xf32>, vector<4x8x8xf32> -> vector<4x8x8xf32>
    "tpu.trace_stop"() : () -> ()
    %cst_33 = arith.constant 0.353553385 : f32
    %55 = vector.broadcast %cst_33 : f32 to vector<4x8x8xf32>
    %56 = arith.mulf %54, %55 : vector<4x8x8xf32>
    %cst_34 = arith.constant dense<0xFF800000> : vector<4x8xf32>
    %57 = vector.multi_reduction <maximumf>, %56, %cst_34 [2] : vector<4x8x8xf32> to vector<4x8xf32>
    %58 = vector.shape_cast %57 : vector<4x8xf32> to vector<4x8x1xf32>
    %59 = vector.broadcast %58 : vector<4x8x1xf32> to vector<4x8x8xf32>
    %60 = arith.subf %56, %59 : vector<4x8x8xf32>
    %61 = math.exp %60 : vector<4x8x8xf32>
    %cst_35 = arith.constant dense<0.000000e+00> : vector<4x8xf32>
    %62 = vector.multi_reduction <add>, %61, %cst_35 [2] : vector<4x8x8xf32> to vector<4x8xf32>
    %63 = vector.shape_cast %62 : vector<4x8xf32> to vector<4x8x1xf32>
    %64 = vector.broadcast %63 : vector<4x8x1xf32> to vector<4x8x8xf32>
    %65 = arith.divf %61, %64 : vector<4x8x8xf32>
    "tpu.trace_start"() <{level = 10 : i32, message = "hqk,khd->qhd"}> : () -> ()
    %cst_36 = arith.constant dense<0.000000e+00> : vector<4x8x8xf32>
    %66 = tpu.matmul %53, %65, %cst_36 {dimension_numbers = #tpu.dot_dimension_numbers<[0], [2], [2], [1], [0, 1, 0, 2, 1, 1], [1], [0]>} : vector<8x4x8xf32>, vector<4x8x8xf32>, vector<4x8x8xf32> -> vector<4x8x8xf32>
    %67 = tpu.transpose %66, [2, 0, 1] : vector<4x8x8xf32> -> vector<8x4x8xf32>
    "tpu.trace_stop"() : () -> ()
    %68 = vector.shape_cast %67 : vector<8x4x8xf32> to vector<8x32xf32>
    %c0_37 = arith.constant 0 : index
    %c0_38 = arith.constant 0 : index
    %c0_39 = arith.constant 0 : index
    %69 = vector.load %arg5[%c0_37, %c0_38, %c0_39] : memref<2x32x32xf32, #tpu.memory_space<vmem>>, vector<1x32x32xf32>
    %70 = vector.shape_cast %69 : vector<1x32x32xf32> to vector<32x32xf32>
    %cst_40 = arith.constant dense<0.000000e+00> : vector<8x32xf32>
    %71 = tpu.matmul %68, %70, %cst_40 {dimension_numbers = #tpu.dot_dimension_numbers<[1], [0], [0], [1], [0, 0, 1, 1], [], []>} : vector<8x32xf32>, vector<32x32xf32>, vector<8x32xf32> -> vector<8x32xf32>
    %c0_41 = arith.constant 0 : index
    %c0_42 = arith.constant 0 : index
    %c0_43 = arith.constant 0 : index
    %72 = vector.load %arg6[%c0_41, %c0_42, %c0_43] : memref<2x1x32xf32, #tpu.memory_space<vmem>>, vector<1x1x32xf32>
    %73 = vector.shape_cast %72 : vector<1x1x32xf32> to vector<1x32xf32>
    %74 = vector.broadcast %73 : vector<1x32xf32> to vector<8x32xf32>
    %75 = arith.addf %71, %74 : vector<8x32xf32>
    %76 = arith.addf %40, %75 : vector<8x32xf32>
    %cst_44 = arith.constant dense<0.000000e+00> : vector<8xf32>
    %77 = vector.multi_reduction <add>, %76, %cst_44 [1] : vector<8x32xf32> to vector<8xf32>
    %78 = vector.shape_cast %77 : vector<8xf32> to vector<8x1xf32>
    %cst_45 = arith.constant 3.200000e+01 : f32
    %79 = vector.broadcast %cst_45 : f32 to vector<8x1xf32>
    %80 = arith.divf %78, %79 : vector<8x1xf32>
    %81 = vector.broadcast %80 : vector<8x1xf32> to vector<8x32xf32>
    %82 = arith.subf %76, %81 : vector<8x32xf32>
    %83 = arith.mulf %82, %82 : vector<8x32xf32>
    %cst_46 = arith.constant dense<0.000000e+00> : vector<8xf32>
    %84 = vector.multi_reduction <add>, %83, %cst_46 [1] : vector<8x32xf32> to vector<8xf32>
    %85 = vector.shape_cast %84 : vector<8xf32> to vector<8x1xf32>
    %cst_47 = arith.constant 3.200000e+01 : f32
    %86 = vector.broadcast %cst_47 : f32 to vector<8x1xf32>
    %87 = arith.divf %85, %86 : vector<8x1xf32>
    %88 = vector.broadcast %80 : vector<8x1xf32> to vector<8x32xf32>
    %89 = arith.subf %76, %88 : vector<8x32xf32>
    %cst_48 = arith.constant 9.99999974E-6 : f32
    %90 = vector.broadcast %cst_48 : f32 to vector<8x1xf32>
    %91 = arith.addf %87, %90 : vector<8x1xf32>
    %92 = math.rsqrt %91 : vector<8x1xf32>
    %93 = vector.broadcast %92 : vector<8x1xf32> to vector<8x32xf32>
    %94 = arith.mulf %89, %93 : vector<8x32xf32>
    %c0_49 = arith.constant 0 : index
    %c0_50 = arith.constant 0 : index
    %c0_51 = arith.constant 0 : index
    %95 = vector.load %arg7[%c0_49, %c0_50, %c0_51] : memref<2x1x32xf32, #tpu.memory_space<vmem>>, vector<1x1x32xf32>
    %96 = vector.shape_cast %95 : vector<1x1x32xf32> to vector<1x32xf32>
    %97 = vector.broadcast %96 : vector<1x32xf32> to vector<8x32xf32>
    %98 = arith.mulf %94, %97 : vector<8x32xf32>
    %c0_52 = arith.constant 0 : index
    %c0_53 = arith.constant 0 : index
    %c0_54 = arith.constant 0 : index
    %99 = vector.load %arg8[%c0_52, %c0_53, %c0_54] : memref<2x1x32xf32, #tpu.memory_space<vmem>>, vector<1x1x32xf32>
    %100 = vector.shape_cast %99 : vector<1x1x32xf32> to vector<1x32xf32>
    %101 = vector.broadcast %100 : vector<1x32xf32> to vector<8x32xf32>
    %102 = arith.addf %98, %101 : vector<8x32xf32>
    %c1_55 = arith.constant 1 : index
    %c0_56 = arith.constant 0 : index
    %c0_57 = arith.constant 0 : index
    %103 = vector.load %arg3[%c1_55, %c0_56, %c0_57] : memref<2x32x96xf32, #tpu.memory_space<vmem>>, vector<1x32x96xf32>
    %104 = vector.shape_cast %103 : vector<1x32x96xf32> to vector<32x96xf32>
    %cst_58 = arith.constant dense<0.000000e+00> : vector<8x96xf32>
    %105 = tpu.matmul %102, %104, %cst_58 {dimension_numbers = #tpu.dot_dimension_numbers<[1], [0], [0], [1], [0, 0, 1, 1], [], []>} : vector<8x32xf32>, vector<32x96xf32>, vector<8x96xf32> -> vector<8x96xf32>
    %c1_59 = arith.constant 1 : index
    %c0_60 = arith.constant 0 : index
    %c0_61 = arith.constant 0 : index
    %106 = vector.load %arg4[%c1_59, %c0_60, %c0_61] : memref<2x1x96xf32, #tpu.memory_space<vmem>>, vector<1x1x96xf32>
    %107 = vector.shape_cast %106 : vector<1x1x96xf32> to vector<1x96xf32>
    %108 = vector.broadcast %107 : vector<1x96xf32> to vector<8x96xf32>
    %109 = arith.addf %105, %108 : vector<8x96xf32>
    %110 = vector.extract_strided_slice %109 {offsets = [0, 0], sizes = [8, 32], strides = [1, 1]} : vector<8x96xf32> to vector<8x32xf32>
    %111 = vector.shape_cast %110 : vector<8x32xf32> to vector<8x4x8xf32>
    %112 = vector.extract_strided_slice %109 {offsets = [0, 32], sizes = [8, 32], strides = [1, 1]} : vector<8x96xf32> to vector<8x32xf32>
    %113 = vector.shape_cast %112 : vector<8x32xf32> to vector<8x4x8xf32>
    %114 = vector.extract_strided_slice %109 {offsets = [0, 64], sizes = [8, 32], strides = [1, 1]} : vector<8x96xf32> to vector<8x32xf32>
    %115 = vector.shape_cast %114 : vector<8x32xf32> to vector<8x4x8xf32>
    "tpu.trace_start"() <{level = 10 : i32, message = "qhd,khd->hqk"}> : () -> ()
    %cst_62 = arith.constant dense<0.000000e+00> : vector<4x8x8xf32>
    %116 = tpu.matmul %111, %113, %cst_62 {dimension_numbers = #tpu.dot_dimension_numbers<[2], [2], [0], [0], [0, 1, 0, 0, 1, 0], [1], [1]>} : vector<8x4x8xf32>, vector<8x4x8xf32>, vector<4x8x8xf32> -> vector<4x8x8xf32>
    "tpu.trace_stop"() : () -> ()
    %cst_63 = arith.constant 0.353553385 : f32
    %117 = vector.broadcast %cst_63 : f32 to vector<4x8x8xf32>
    %118 = arith.mulf %116, %117 : vector<4x8x8xf32>
    %cst_64 = arith.constant dense<0xFF800000> : vector<4x8xf32>
    %119 = vector.multi_reduction <maximumf>, %118, %cst_64 [2] : vector<4x8x8xf32> to vector<4x8xf32>
    %120 = vector.shape_cast %119 : vector<4x8xf32> to vector<4x8x1xf32>
    %121 = vector.broadcast %120 : vector<4x8x1xf32> to vector<4x8x8xf32>
    %122 = arith.subf %118, %121 : vector<4x8x8xf32>
    %123 = math.exp %122 : vector<4x8x8xf32>
    %cst_65 = arith.constant dense<0.000000e+00> : vector<4x8xf32>
    %124 = vector.multi_reduction <add>, %123, %cst_65 [2] : vector<4x8x8xf32> to vector<4x8xf32>
    %125 = vector.shape_cast %124 : vector<4x8xf32> to vector<4x8x1xf32>
    %126 = vector.broadcast %125 : vector<4x8x1xf32> to vector<4x8x8xf32>
    %127 = arith.divf %123, %126 : vector<4x8x8xf32>
    "tpu.trace_start"() <{level = 10 : i32, message = "hqk,khd->qhd"}> : () -> ()
    %cst_66 = arith.constant dense<0.000000e+00> : vector<4x8x8xf32>
    %128 = tpu.matmul %115, %127, %cst_66 {dimension_numbers = #tpu.dot_dimension_numbers<[0], [2], [2], [1], [0, 1, 0, 2, 1, 1], [1], [0]>} : vector<8x4x8xf32>, vector<4x8x8xf32>, vector<4x8x8xf32> -> vector<4x8x8xf32>
    %129 = tpu.transpose %128, [2, 0, 1] : vector<4x8x8xf32> -> vector<8x4x8xf32>
    "tpu.trace_stop"() : () -> ()
    %130 = vector.shape_cast %129 : vector<8x4x8xf32> to vector<8x32xf32>
    %c1_67 = arith.constant 1 : index
    %c0_68 = arith.constant 0 : index
    %c0_69 = arith.constant 0 : index
    %131 = vector.load %arg5[%c1_67, %c0_68, %c0_69] : memref<2x32x32xf32, #tpu.memory_space<vmem>>, vector<1x32x32xf32>
    %132 = vector.shape_cast %131 : vector<1x32x32xf32> to vector<32x32xf32>
    %cst_70 = arith.constant dense<0.000000e+00> : vector<8x32xf32>
    %133 = tpu.matmul %130, %132, %cst_70 {dimension_numbers = #tpu.dot_dimension_numbers<[1], [0], [0], [1], [0, 0, 1, 1], [], []>} : vector<8x32xf32>, vector<32x32xf32>, vector<8x32xf32> -> vector<8x32xf32>
    %c1_71 = arith.constant 1 : index
    %c0_72 = arith.constant 0 : index
    %c0_73 = arith.constant 0 : index
    %134 = vector.load %arg6[%c1_71, %c0_72, %c0_73] : memref<2x1x32xf32, #tpu.memory_space<vmem>>, vector<1x1x32xf32>
    %135 = vector.shape_cast %134 : vector<1x1x32xf32> to vector<1x32xf32>
    %136 = vector.broadcast %135 : vector<1x32xf32> to vector<8x32xf32>
    %137 = arith.addf %133, %136 : vector<8x32xf32>
    %138 = arith.addf %102, %137 : vector<8x32xf32>
    %cst_74 = arith.constant dense<0.000000e+00> : vector<8xf32>
    %139 = vector.multi_reduction <add>, %138, %cst_74 [1] : vector<8x32xf32> to vector<8xf32>
    %140 = vector.shape_cast %139 : vector<8xf32> to vector<8x1xf32>
    %cst_75 = arith.constant 3.200000e+01 : f32
    %141 = vector.broadcast %cst_75 : f32 to vector<8x1xf32>
    %142 = arith.divf %140, %141 : vector<8x1xf32>
    %143 = vector.broadcast %142 : vector<8x1xf32> to vector<8x32xf32>
    %144 = arith.subf %138, %143 : vector<8x32xf32>
    %145 = arith.mulf %144, %144 : vector<8x32xf32>
    %cst_76 = arith.constant dense<0.000000e+00> : vector<8xf32>
    %146 = vector.multi_reduction <add>, %145, %cst_76 [1] : vector<8x32xf32> to vector<8xf32>
    %147 = vector.shape_cast %146 : vector<8xf32> to vector<8x1xf32>
    %cst_77 = arith.constant 3.200000e+01 : f32
    %148 = vector.broadcast %cst_77 : f32 to vector<8x1xf32>
    %149 = arith.divf %147, %148 : vector<8x1xf32>
    %150 = vector.broadcast %142 : vector<8x1xf32> to vector<8x32xf32>
    %151 = arith.subf %138, %150 : vector<8x32xf32>
    %cst_78 = arith.constant 9.99999974E-6 : f32
    %152 = vector.broadcast %cst_78 : f32 to vector<8x1xf32>
    %153 = arith.addf %149, %152 : vector<8x1xf32>
    %154 = math.rsqrt %153 : vector<8x1xf32>
    %155 = vector.broadcast %154 : vector<8x1xf32> to vector<8x32xf32>
    %156 = arith.mulf %151, %155 : vector<8x32xf32>
    %c1_79 = arith.constant 1 : index
    %c0_80 = arith.constant 0 : index
    %c0_81 = arith.constant 0 : index
    %157 = vector.load %arg7[%c1_79, %c0_80, %c0_81] : memref<2x1x32xf32, #tpu.memory_space<vmem>>, vector<1x1x32xf32>
    %158 = vector.shape_cast %157 : vector<1x1x32xf32> to vector<1x32xf32>
    %159 = vector.broadcast %158 : vector<1x32xf32> to vector<8x32xf32>
    %160 = arith.mulf %156, %159 : vector<8x32xf32>
    %c1_82 = arith.constant 1 : index
    %c0_83 = arith.constant 0 : index
    %c0_84 = arith.constant 0 : index
    %161 = vector.load %arg8[%c1_82, %c0_83, %c0_84] : memref<2x1x32xf32, #tpu.memory_space<vmem>>, vector<1x1x32xf32>
    %162 = vector.shape_cast %161 : vector<1x1x32xf32> to vector<1x32xf32>
    %163 = vector.broadcast %162 : vector<1x32xf32> to vector<8x32xf32>
    %164 = arith.addf %160, %163 : vector<8x32xf32>
    %c0_85 = arith.constant 0 : index
    %c0_86 = arith.constant 0 : index
    %165 = vector.load %arg9[%c0_85, %c0_86] : memref<32x128xf32, #tpu.memory_space<vmem>>, vector<32x128xf32>
    %cst_87 = arith.constant dense<0.000000e+00> : vector<8x128xf32>
    %166 = tpu.matmul %164, %165, %cst_87 {dimension_numbers = #tpu.dot_dimension_numbers<[1], [0], [0], [1], [0, 0, 1, 1], [], []>} : vector<8x32xf32>, vector<32x128xf32>, vector<8x128xf32> -> vector<8x128xf32>
    %c0_88 = arith.constant 0 : index
    %c0_89 = arith.constant 0 : index
    %167 = vector.load %arg10[%c0_88, %c0_89] : memref<1x128xf32, #tpu.memory_space<vmem>>, vector<1x128xf32>
    %168 = vector.broadcast %167 : vector<1x128xf32> to vector<8x128xf32>
    %169 = arith.addf %166, %168 : vector<8x128xf32>
    %c0_90 = arith.constant 0 : index
    %c0_91 = arith.constant 0 : index
    %c0_92 = arith.constant 0 : index
    %170 = vector.load %arg11[%c0_90, %c0_91, %c0_92] : memref<1x8x128xf32, #tpu.memory_space<vmem>>, vector<1x8x128xf32>
    %171 = vector.shape_cast %170 : vector<1x8x128xf32> to vector<8x128xf32>
    %172 = vector.shape_cast %169 : vector<8x128xf32> to vector<1x8x128xf32>
    tpu.vector_store %arg11[%c0_90, %c0_91, %c0_92], %172 {strides = array<i32>} : memref<1x8x128xf32, #tpu.memory_space<vmem>>, vector<1x8x128xf32>,
    return
  }
  func.func @transform_0(%arg0: i32, %arg1: memref<2x8xi32, #tpu.memory_space<smem>>) -> (i32, i32) {
    %c0_i32 = arith.constant 0 : i32
    %c0_i32_0 = arith.constant 0 : i32
    %c0_i32_1 = arith.constant 0 : i32
    return %c0_i32, %c0_i32_0 : i32, i32
  }
  func.func @transform_1(%arg0: i32, %arg1: memref<2x8xi32, #tpu.memory_space<smem>>) -> (i32, i32, i32) {
    %c0_i32 = arith.constant 0 : i32
    %c0_i32_0 = arith.constant 0 : i32
    %c0_i32_1 = arith.constant 0 : i32
    %c0_i32_2 = arith.constant 0 : i32
    return %c0_i32, %c0_i32_0, %c0_i32_1 : i32, i32, i32
  }
  func.func @transform_2(%arg0: i32, %arg1: memref<2x8xi32, #tpu.memory_space<smem>>) -> (i32, i32, i32) {
    %c0_i32 = arith.constant 0 : i32
    %c0_i32_0 = arith.constant 0 : i32
    %c0_i32_1 = arith.constant 0 : i32
    %c0_i32_2 = arith.constant 0 : i32
    return %c0_i32, %c0_i32_0, %c0_i32_1 : i32, i32, i32
  }
  func.func @transform_3(%arg0: i32, %arg1: memref<2x8xi32, #tpu.memory_space<smem>>) -> (i32, i32, i32) {
    %c0_i32 = arith.constant 0 : i32
    %c0_i32_0 = arith.constant 0 : i32
    %c0_i32_1 = arith.constant 0 : i32
    %c0_i32_2 = arith.constant 0 : i32
    return %c0_i32, %c0_i32_0, %c0_i32_1 : i32, i32, i32
  }
  func.func @transform_4(%arg0: i32, %arg1: memref<2x8xi32, #tpu.memory_space<smem>>) -> (i32, i32, i32) {
    %c0_i32 = arith.constant 0 : i32
    %c0_i32_0 = arith.constant 0 : i32
    %c0_i32_1 = arith.constant 0 : i32
    %c0_i32_2 = arith.constant 0 : i32
    return %c0_i32, %c0_i32_0, %c0_i32_1 : i32, i32, i32
  }
  func.func @transform_5(%arg0: i32, %arg1: memref<2x8xi32, #tpu.memory_space<smem>>) -> (i32, i32, i32) {
    %c0_i32 = arith.constant 0 : i32
    %c0_i32_0 = arith.constant 0 : i32
    %c0_i32_1 = arith.constant 0 : i32
    %c0_i32_2 = arith.constant 0 : i32
    return %c0_i32, %c0_i32_0, %c0_i32_1 : i32, i32, i32
  }
  func.func @transform_6(%arg0: i32, %arg1: memref<2x8xi32, #tpu.memory_space<smem>>) -> (i32, i32, i32) {
    %c0_i32 = arith.constant 0 : i32
    %c0_i32_0 = arith.constant 0 : i32
    %c0_i32_1 = arith.constant 0 : i32
    %c0_i32_2 = arith.constant 0 : i32
    return %c0_i32, %c0_i32_0, %c0_i32_1 : i32, i32, i32
  }
  func.func @transform_7(%arg0: i32, %arg1: memref<2x8xi32, #tpu.memory_space<smem>>) -> (i32, i32) {
    %c0_i32 = arith.constant 0 : i32
    %c0_i32_0 = arith.constant 0 : i32
    %c0_i32_1 = arith.constant 0 : i32
    return %c0_i32, %c0_i32_0 : i32, i32
  }
  func.func @transform_8(%arg0: i32, %arg1: memref<2x8xi32, #tpu.memory_space<smem>>) -> (i32, i32) {
    %c0_i32 = arith.constant 0 : i32
    %c0_i32_0 = arith.constant 0 : i32
    %c0_i32_1 = arith.constant 0 : i32
    return %c0_i32, %c0_i32_0 : i32, i32
  }
  func.func @transform_9(%arg0: i32, %arg1: memref<2x8xi32, #tpu.memory_space<smem>>) -> (i32, i32, i32) {
    %c0_i32 = arith.constant 0 : i32
    %c0_i32_0 = arith.constant 0 : i32
    %c0_i32_1 = arith.constant 0 : i32
    return %arg0, %c0_i32, %c0_i32_0 : i32, i32, i32
  }
}

</mosaic_0001>

<llo_original>
// kernel: tpu_custom_call.1
$region0: #{tpu_custom_call.1}
  #allocation0 [shape = 'u32[]', space=smem, size = 0x4, offset = 0x4, fixed_abs, tag = 'smem constant byte address 0x4 - core index']
  #allocation1 [shape = 'u32[144,128]{1,0:T(1,128)}', space=vmem, size = 0x12000, scoped, tag = 'internal scratch']
  #allocation2 [shape = 'f32[8,32]{1,0:T(8,128)}', space=vmem, size = 0x1000, scoped, tag = 'scratch operand']
  #allocation3 [shape = 's32[1]{0}', space=sflag, size = 0x4, scoped, tag = 'scoped memory for tpu_custom_call.1']
  #allocation4 [shape = 'u8[1024]{0}', space=smem, size = 0x400, scoped, tag = 'prefetched SMEM operand 0']
  %s0 = inlined_call_operand.vmem [shape: s32[2,8], index: 0, kind: input, shape index: {}]
  %s1 = inlined_call_operand.vmem [shape: f32[50,32], index: 1, kind: input, shape index: {}]
  %s2 = inlined_call_operand.vmem [shape: f32[2,32,96], index: 2, kind: input, shape index: {}]
  %s3 = inlined_call_operand.hbm [shape: f32[2,1,96], index: 3, kind: input, shape index: {}]
  %s4 = inlined_call_operand.hbm [shape: f32[2,32,32], index: 4, kind: input, shape index: {}]
  %s5 = inlined_call_operand.vmem [shape: f32[2,1,32], index: 5, kind: input, shape index: {}]
  %s6 = inlined_call_operand.vmem [shape: f32[2,1,32], index: 6, kind: input, shape index: {}]
  %s7 = inlined_call_operand.vmem [shape: f32[2,1,32], index: 7, kind: input, shape index: {}]
  %s8 = inlined_call_operand.vmem [shape: f32[32,128], index: 8, kind: input, shape index: {}]
  %s9 = inlined_call_operand.vmem [shape: f32[1,128], index: 9, kind: input, shape index: {}]
  %s10 = inlined_call_operand.hbm [shape: f32[2,8,128], index: 10, kind: output, shape index: {}]
  %s11 = sld [smem:[#allocation0]]
  $region77: #{tpu_custom_call.1} parent=0
    _
  %s13 = ssub.s32 1, %s11
  %s14 = scalar_select 0, %s13, %s11
  %s15 = sshll.u32 %s0, 4
  %s16 = int_to_ptr.vmem [resolvable:$true] %s15
  %18 = dma.vmem_to_smem %s16, 32, [#allocation4], [#allocation3]
  %19 = dma.done [#allocation3], 32
  %20 = sfence
  $region1: #{tpu_custom_call.1} parent=0
    #allocation5 [shape = 'u8[1024]{0}', space=vmem, size = 0x400, scoped, tag = 'input window, operand 3, single buffered']
    #allocation6 [shape = 's32[2]{0}', space=sflag, size = 0x8, scoped, tag = 'scoped memory for tpu_custom_call.1']
    #allocation7 [shape = 's32[2]{0}', space=sflag, size = 0x8, scoped, tag = 'scoped memory for tpu_custom_call.1']
    #allocation8 [shape = 'u8[32768]{0}', space=vmem, size = 0x8000, scoped, tag = 'input window, operand 4, single buffered']
    #allocation9 [shape = 's32[1]{0}', space=sflag, size = 0x4, scoped, tag = 'scoped memory for tpu_custom_call.1']
    #allocation10 [shape = 'u8[8192]{0}', space=vmem, size = 0x2000, scoped, tag = 'output window, operand 0']
    %21 = vsyncpa [#allocation6], 0
    %22 = vsyncpa [#allocation9], 0
    %23 = vsyncpa [#allocation7], 0
    %s24 = scalar_lea.sflag [#allocation7], 1
    %25 = vsyncpa %s24, 0
    loop: start=0, step=1, limit=4
    $region2: #{tpu_custom_call.1} parent=1 // loop_pre_header
      _
    $region3: #{tpu_custom_call.1} parent=1 // loop_header
      %s27 = sphi 0, %s31
      %p28 = scmp.ge.s32.totalorder %s27, 4
      %s35 = sphi 0, %s35
      %s37 = sphi 0, %s35
      %s38 = sphi 0, %s37
      %s52 = sphi 0, %s38
      %s56 = sphi 0, %s56
      %s58 = sphi 0, %s56
      %s59 = sphi 0, %s58
      %s73 = sphi 0, %s59
      %s77 = sphi 0, %s77
      %s79 = sphi 0, %s77
      %s80 = sphi 0, %s79
      %s94 = sphi 0, %s80
      %s98 = sphi 0, %s98
      %s100 = sphi 0, %s98
      %s101 = sphi 0, %s100
      %s115 = sphi 0, %s101
      %s119 = sphi 0, %s119
      %s121 = sphi 0, %s119
      %s122 = sphi 0, %s121
      %s136 = sphi 0, %s122
      %s140 = sphi 0, %s140
      %s142 = sphi 0, %s140
      %s143 = sphi 0, %s142
      %s157 = sphi 0, %s143
      %s161 = sphi 0, %s161
      %s163 = sphi 0, %s161
      %s164 = sphi 0, %s163
      %s178 = sphi 0, %s164
      %s182 = sphi 0, %s182
      %s184 = sphi 0, %s182
      %s185 = sphi 0, %s184
      %s199 = sphi 0, %s185
      %s203 = sphi 0, %s203
      %s205 = sphi 0, %s203
      %s206 = sphi 0, %s205
      %s220 = sphi 0, %s206
      %s226 = sphi 0, %s228
      %s229 = sphi 0, %s226
      %s230 = sphi 0, %s229
      %s246 = sphi 0, %s230
    $region4: #{tpu_custom_call.1} parent=1 // loop_header_branch
      %30 = sbr.rel (%p28) target = $region8
    $region5: #{tpu_custom_call.1} parent=1 // loop_body
      %s32 = ssub.s32 %s27, 1
      %s33 = ssub.s32 %s27, 2
      %s34 = sadd.s32 %s27, 1
      %s36 = sadd.s32 %s35, 1
      %p39 = scmp.eq.s32.totalorder %s27, 1
      %p40 = scmp.ne.s32.totalorder %s35, %s37
      %p41 = scmp.eq.s32.totalorder %s27, 0
      %p42 = por %p40, %p41
      %p43 = scmp.ne.s32.totalorder %s35, %s37
      %p44 = scmp.eq.s32.totalorder %s32, 1
      %p45 = por %p43, %p44
      %p46 = scmp.ne.s32.totalorder %s37, %s38
      %p47 = scmp.eq.s32.totalorder %s32, 0
      %p48 = por %p46, %p47
      %p49 = scmp.ne.s32.totalorder %s37, %s38
      %p50 = scmp.eq.s32.totalorder %s33, 1
      %p51 = por %p49, %p50
      %p53 = scmp.ne.s32.totalorder %s38, %s52
      %p54 = scmp.eq.s32.totalorder %s33, 0
      %p55 = por %p53, %p54
      %s57 = sadd.s32 %s56, 1
      %p60 = scmp.eq.s32.totalorder %s27, 1
      %p61 = scmp.ne.s32.totalorder %s56, %s58
      %p62 = scmp.eq.s32.totalorder %s27, 0
      %p63 = por %p61, %p62
      %p64 = scmp.ne.s32.totalorder %s56, %s58
      %p65 = scmp.eq.s32.totalorder %s32, 1
      %p66 = por %p64, %p65
      %p67 = scmp.ne.s32.totalorder %s58, %s59
      %p68 = scmp.eq.s32.totalorder %s32, 0
      %p69 = por %p67, %p68
      %p70 = scmp.ne.s32.totalorder %s58, %s59
      %p71 = scmp.eq.s32.totalorder %s33, 1
      %p72 = por %p70, %p71
      %p74 = scmp.ne.s32.totalorder %s59, %s73
      %p75 = scmp.eq.s32.totalorder %s33, 0
      %p76 = por %p74, %p75
      %s78 = sadd.s32 %s77, 1
      %p81 = scmp.eq.s32.totalorder %s27, 1
      %p82 = scmp.ne.s32.totalorder %s77, %s79
      %p83 = scmp.eq.s32.totalorder %s27, 0
      %p84 = por %p82, %p83
      %p85 = scmp.ne.s32.totalorder %s77, %s79
      %p86 = scmp.eq.s32.totalorder %s32, 1
      %p87 = por %p85, %p86
      %p88 = scmp.ne.s32.totalorder %s79, %s80
      %p89 = scmp.eq.s32.totalorder %s32, 0
      %p90 = por %p88, %p89
      %p91 = scmp.ne.s32.totalorder %s79, %s80
      %p92 = scmp.eq.s32.totalorder %s33, 1
      %p93 = por %p91, %p92
      %p95 = scmp.ne.s32.totalorder %s80, %s94
      %p96 = scmp.eq.s32.totalorder %s33, 0
      %p97 = por %p95, %p96
      %s99 = sadd.s32 %s98, 1
      %p102 = scmp.eq.s32.totalorder %s27, 1
      %p103 = scmp.ne.s32.totalorder %s98, %s100
      %p104 = scmp.eq.s32.totalorder %s27, 0
      %p105 = por %p103, %p104
      %p106 = scmp.ne.s32.totalorder %s98, %s100
      %p107 = scmp.eq.s32.totalorder %s32, 1
      %p108 = por %p106, %p107
      %p109 = scmp.ne.s32.totalorder %s100, %s101
      %p110 = scmp.eq.s32.totalorder %s32, 0
      %p111 = por %p109, %p110
      %p112 = scmp.ne.s32.totalorder %s100, %s101
      %p113 = scmp.eq.s32.totalorder %s33, 1
      %p114 = por %p112, %p113
      %p116 = scmp.ne.s32.totalorder %s101, %s115
      %p117 = scmp.eq.s32.totalorder %s33, 0
      %p118 = por %p116, %p117
      %s120 = sadd.s32 %s119, 1
      %p123 = scmp.eq.s32.totalorder %s27, 1
      %p124 = scmp.ne.s32.totalorder %s119, %s121
      %p125 = scmp.eq.s32.totalorder %s27, 0
      %p126 = por %p124, %p125
      %p127 = scmp.ne.s32.totalorder %s119, %s121
      %p128 = scmp.eq.s32.totalorder %s32, 1
      %p129 = por %p127, %p128
      %p130 = scmp.ne.s32.totalorder %s121, %s122
      %p131 = scmp.eq.s32.totalorder %s32, 0
      %p132 = por %p130, %p131
      %p133 = scmp.ne.s32.totalorder %s121, %s122
      %p134 = scmp.eq.s32.totalorder %s33, 1
      %p135 = por %p133, %p134
      %p137 = scmp.ne.s32.totalorder %s122, %s136
      %p138 = scmp.eq.s32.totalorder %s33, 0
      %p139 = por %p137, %p138
      %s141 = sadd.s32 %s140, 1
      %p144 = scmp.eq.s32.totalorder %s27, 1
      %p145 = scmp.ne.s32.totalorder %s140, %s142
      %p146 = scmp.eq.s32.totalorder %s27, 0
      %p147 = por %p145, %p146
      %p148 = scmp.ne.s32.totalorder %s140, %s142
      %p149 = scmp.eq.s32.totalorder %s32, 1
      %p150 = por %p148, %p149
      %p151 = scmp.ne.s32.totalorder %s142, %s143
      %p152 = scmp.eq.s32.totalorder %s32, 0
      %p153 = por %p151, %p152
      %p154 = scmp.ne.s32.totalorder %s142, %s143
      %p155 = scmp.eq.s32.totalorder %s33, 1
      %p156 = por %p154, %p155
      %p158 = scmp.ne.s32.totalorder %s143, %s157
      %p159 = scmp.eq.s32.totalorder %s33, 0
      %p160 = por %p158, %p159
      %s162 = sadd.s32 %s161, 1
      %p165 = scmp.eq.s32.totalorder %s27, 1
      %p166 = scmp.ne.s32.totalorder %s161, %s163
      %p167 = scmp.eq.s32.totalorder %s27, 0
      %p168 = por %p166, %p167
      %p169 = scmp.ne.s32.totalorder %s161, %s163
      %p170 = scmp.eq.s32.totalorder %s32, 1
      %p171 = por %p169, %p170
      %p172 = scmp.ne.s32.totalorder %s163, %s164
      %p173 = scmp.eq.s32.totalorder %s32, 0
      %p174 = por %p172, %p173
      %p175 = scmp.ne.s32.totalorder %s163, %s164
      %p176 = scmp.eq.s32.totalorder %s33, 1
      %p177 = por %p175, %p176
      %p179 = scmp.ne.s32.totalorder %s164, %s178
      %p180 = scmp.eq.s32.totalorder %s33, 0
      %p181 = por %p179, %p180
      %s183 = sadd.s32 %s182, 1
      %p186 = scmp.eq.s32.totalorder %s27, 1
      %p187 = scmp.ne.s32.totalorder %s182, %s184
      %p188 = scmp.eq.s32.totalorder %s27, 0
      %p189 = por %p187, %p188
      %p190 = scmp.ne.s32.totalorder %s182, %s184
      %p191 = scmp.eq.s32.totalorder %s32, 1
      %p192 = por %p190, %p191
      %p193 = scmp.ne.s32.totalorder %s184, %s185
      %p194 = scmp.eq.s32.totalorder %s32, 0
      %p195 = por %p193, %p194
      %p196 = scmp.ne.s32.totalorder %s184, %s185
      %p197 = scmp.eq.s32.totalorder %s33, 1
      %p198 = por %p196, %p197
      %p200 = scmp.ne.s32.totalorder %s185, %s199
      %p201 = scmp.eq.s32.totalorder %s33, 0
      %p202 = por %p200, %p201
      %s204 = sadd.s32 %s203, 1
      %p207 = scmp.eq.s32.totalorder %s27, 1
      %p208 = scmp.ne.s32.totalorder %s203, %s205
      %p209 = scmp.eq.s32.totalorder %s27, 0
      %p210 = por %p208, %p209
      %p211 = scmp.ne.s32.totalorder %s203, %s205
      %p212 = scmp.eq.s32.totalorder %s32, 1
      %p213 = por %p211, %p212
      %p214 = scmp.ne.s32.totalorder %s205, %s206
      %p215 = scmp.eq.s32.totalorder %s32, 0
      %p216 = por %p214, %p215
      %p217 = scmp.ne.s32.totalorder %s205, %s206
      %p218 = scmp.eq.s32.totalorder %s33, 1
      %p219 = por %p217, %p218
      %p221 = scmp.ne.s32.totalorder %s206, %s220
      %p222 = scmp.eq.s32.totalorder %s33, 0
      %p223 = por %p221, %p222
      %s224 = ssub.s32 %s27, %s34
      %p225 = scmp.eq.s32.totalorder %s224, 0
      %s227 = sadd.s32 %s226, 1
      %s228 = scalar_select %p225, %s226, %s227
      %p231 = pneg %p225
      %p232 = scmp.eq.s32.totalorder %s27, 1
      %p233 = por %p231, %p232
      %p234 = scmp.ne.s32.totalorder %s226, %s229
      %p235 = scmp.eq.s32.totalorder %s27, 0
      %p236 = por %p234, %p235
      %p237 = scmp.ne.s32.totalorder %s226, %s229
      %p238 = scmp.eq.s32.totalorder %s32, 1
      %p239 = por %p237, %p238
      %p240 = scmp.ne.s32.totalorder %s229, %s230
      %p241 = scmp.eq.s32.totalorder %s32, 0
      %p242 = por %p240, %p241
      %p243 = scmp.ne.s32.totalorder %s229, %s230
      %p244 = scmp.eq.s32.totalorder %s33, 1
      %p245 = por %p243, %p244
      %p247 = scmp.ne.s32.totalorder %s230, %s246
      %p248 = scmp.eq.s32.totalorder %s33, 0
      %p249 = por %p247, %p248
      %p250 = scmp.le.s32.totalorder 1, %s27
      %p251 = scmp.lt.s32.totalorder %s27, 3
      %p252 = pnand %p250, %p251
      %p253 = pneg %p252
      // Predicated region
      $region9: #{tpu_custom_call.1} parent=5 // pred_check
        _
      $region10: #{tpu_custom_call.1} parent=5 // pred_check_branch
        %255 = sbr.rel (%p252) target = $region12
      $region11: #{tpu_custom_call.1} parent=5 // pred_region
        %s256 = ssub.s32 %s27, 1
        // Predicated region
        $region13: #{tpu_custom_call.1} parent=11 // pred_check
          %p257 = pneg %p48
        $region14: #{tpu_custom_call.1} parent=11 // pred_check_branch
          %259 = sbr.rel (%p257) target = $region16
        $region15: #{tpu_custom_call.1} parent=11 // pred_region
          _
        $region16: #{tpu_custom_call.1} parent=11 // pred_fallthru
          _
        // Predicated region
        $region17: #{tpu_custom_call.1} parent=11 // pred_check
          %p260 = pneg %p69
        $region18: #{tpu_custom_call.1} parent=11 // pred_check_branch
          %262 = sbr.rel (%p260) target = $region20
        $region19: #{tpu_custom_call.1} parent=11 // pred_region
          _
        $region20: #{tpu_custom_call.1} parent=11 // pred_fallthru
          _
        // Predicated region
        $region21: #{tpu_custom_call.1} parent=11 // pred_check
          %p263 = pneg %p90
        $region22: #{tpu_custom_call.1} parent=11 // pred_check_branch
          %265 = sbr.rel (%p263) target = $region24
        $region23: #{tpu_custom_call.1} parent=11 // pred_region
          %s267 = ssub.s32 32, 32
          %268 = vsyncadd [#allocation6], %s267
          %s269 = sshll.u32 [#allocation5], 4
          %s270 = int_to_ptr.vmem [resolvable:$true] %s269
          %275 = dma.hbm_to_vmem [thread:$0]  %s3, 32, %s270, [#allocation6], 16, 16, 1
        $region24: #{tpu_custom_call.1} parent=11 // pred_fallthru
          _
        // Predicated region
        $region25: #{tpu_custom_call.1} parent=11 // pred_check
          %p276 = pneg %p111
        $region26: #{tpu_custom_call.1} parent=11 // pred_check_branch
          %278 = sbr.rel (%p276) target = $region28
        $region27: #{tpu_custom_call.1} parent=11 // pred_region
          %s280 = ssub.s32 1024, 1024
          %281 = vsyncadd [#allocation9], %s280
          %s282 = sshll.u32 [#allocation8], 4
          %s283 = int_to_ptr.vmem [resolvable:$true] %s282
          %288 = dma.hbm_to_vmem [thread:$0]  %s4, 1024, %s283, [#allocation9], 128, 128, 8
        $region28: #{tpu_custom_call.1} parent=11 // pred_fallthru
          _
        // Predicated region
        $region29: #{tpu_custom_call.1} parent=11 // pred_check
          %p289 = pneg %p132
        $region30: #{tpu_custom_call.1} parent=11 // pred_check_branch
          %291 = sbr.rel (%p289) target = $region32
        $region31: #{tpu_custom_call.1} parent=11 // pred_region
          _
        $region32: #{tpu_custom_call.1} parent=11 // pred_fallthru
          _
        // Predicated region
        $region33: #{tpu_custom_call.1} parent=11 // pred_check
          %p292 = pneg %p153
        $region34: #{tpu_custom_call.1} parent=11 // pred_check_branch
          %294 = sbr.rel (%p292) target = $region36
        $region35: #{tpu_custom_call.1} parent=11 // pred_region
          _
        $region36: #{tpu_custom_call.1} parent=11 // pred_fallthru
          _
        // Predicated region
        $region37: #{tpu_custom_call.1} parent=11 // pred_check
          %p295 = pneg %p174
        $region38: #{tpu_custom_call.1} parent=11 // pred_check_branch
          %297 = sbr.rel (%p295) target = $region40
        $region39: #{tpu_custom_call.1} parent=11 // pred_region
          _
        $region40: #{tpu_custom_call.1} parent=11 // pred_fallthru
          _
        // Predicated region
        $region41: #{tpu_custom_call.1} parent=11 // pred_check
          %p298 = pneg %p195
        $region42: #{tpu_custom_call.1} parent=11 // pred_check_branch
          %300 = sbr.rel (%p298) target = $region44
        $region43: #{tpu_custom_call.1} parent=11 // pred_region
          _
        $region44: #{tpu_custom_call.1} parent=11 // pred_fallthru
          _
        // Predicated region
        $region45: #{tpu_custom_call.1} parent=11 // pred_check
          %p301 = pneg %p216
        $region46: #{tpu_custom_call.1} parent=11 // pred_check_branch
          %303 = sbr.rel (%p301) target = $region48
        $region47: #{tpu_custom_call.1} parent=11 // pred_region
          _
        $region48: #{tpu_custom_call.1} parent=11 // pred_fallthru
          _
      $region12: #{tpu_custom_call.1} parent=5 // pred_fallthru
        _
      %p304 = scmp.lt.s32.totalorder %s27, 2
      // Predicated region
      $region49: #{tpu_custom_call.1} parent=5 // pred_check
        %p305 = pneg %p304
      $region50: #{tpu_custom_call.1} parent=5 // pred_check_branch
        %307 = sbr.rel (%p305) target = $region52
      $region51: #{tpu_custom_call.1} parent=5 // pred_region
        _
      $region52: #{tpu_custom_call.1} parent=5 // pred_fallthru
        _
      %p308 = scmp.le.s32.totalorder 1, %s27
      %p309 = scmp.lt.s32.totalorder %s27, 3
      %p310 = pnand %p308, %p309
      %p311 = pneg %p310
      // Predicated region
      $region53: #{tpu_custom_call.1} parent=5 // pred_check
        _
      $region54: #{tpu_custom_call.1} parent=5 // pred_check_branch
        %313 = sbr.rel (%p310) target = $region56
      $region55: #{tpu_custom_call.1} parent=5 // pred_region
        %s314 = ssub.s32 %s27, 1
        // Predicated region
        $region57: #{tpu_custom_call.1} parent=55 // pred_check
          %p315 = pneg %p90
        $region58: #{tpu_custom_call.1} parent=55 // pred_check_branch
          %317 = sbr.rel (%p315) target = $region60
        $region59: #{tpu_custom_call.1} parent=55 // pred_region
          %318 = dma.done [#allocation6], 32
        $region60: #{tpu_custom_call.1} parent=55 // pred_fallthru
          _
        // Predicated region
        $region61: #{tpu_custom_call.1} parent=55 // pred_check
          %p319 = pneg %p111
        $region62: #{tpu_custom_call.1} parent=55 // pred_check_branch
          %321 = sbr.rel (%p319) target = $region64
        $region63: #{tpu_custom_call.1} parent=55 // pred_region
          %322 = dma.done [#allocation9], 1024
        $region64: #{tpu_custom_call.1} parent=55 // pred_fallthru
          _
        %p323 = pneg %p48
        %p324 = pneg %p45
        %p325 = pneg %p69
        %p326 = pneg %p66
        %p327 = pneg %p90
        %p328 = pneg %p87
        %p329 = pneg %p111
        %p330 = pneg %p108
        %p331 = pneg %p132
        %p332 = pneg %p129
        %p333 = pneg %p153
        %p334 = pneg %p150
        %p335 = pneg %p174
        %p336 = pneg %p171
        %p337 = pneg %p195
        %p338 = pneg %p192
        %p339 = pneg %p216
        %p340 = pneg %p213
        %p341 = pneg %p242
        %p342 = pneg %p239
        %s343 = sand.u32 %s229, 1
        %s344 = scalar_lea.sflag [#allocation7], %s343
        %s345 = sand.u32 %s229, 1
        %s346 = smul.addr %s345, 8
        %s347 = scalar_lea.vmem [#allocation10], %s346
        %s348 = smul.u32 %s32, 128
        %s349 = sld [smem:[#allocation4 + %s348]]
        %s350 = scalar_lea.vmem %s1, %s349
        %v351 = vld [vmem:[%s350] sm:$0x1]
        %vm352 = vcmask 253952
        %353 = vst.msk [vmem:[#allocation2] sm:$0x1] %vm352, %v351
        %s354 = sadd.s32 %s348, 1
        %s355 = sld [smem:[#allocation4 + %s354]]
        %s356 = scalar_lea.vmem %s1, %s355
        %v357 = vld [vmem:[%s356] sm:$0x1]
        %358 = vst.msk [vmem:[#allocation2 + $0x1] sm:$0x1] %vm352, %v357
        %s359 = sadd.s32 %s348, 2
        %s360 = sld [smem:[#allocation4 + %s359]]
        %s361 = scalar_lea.vmem %s1, %s360
        %v362 = vld [vmem:[%s361] sm:$0x1]
        %363 = vst.msk [vmem:[#allocation2 + $0x2] sm:$0x1] %vm352, %v362
        %s364 = sadd.s32 %s348, 3
        %s365 = sld [smem:[#allocation4 + %s364]]
        %s366 = scalar_lea.vmem %s1, %s365
        %v367 = vld [vmem:[%s366] sm:$0x1]
        %368 = vst.msk [vmem:[#allocation2 + $0x3] sm:$0x1] %vm352, %v367
        %s369 = sadd.s32 %s348, 4
        %s370 = sld [smem:[#allocation4 + %s369]]
        %s371 = scalar_lea.vmem %s1, %s370
        %v372 = vld [vmem:[%s371] sm:$0x1]
        %373 = vst.msk [vmem:[#allocation2 + $0x4] sm:$0x1] %vm352, %v372
        %s374 = sadd.s32 %s348, 5
        %s375 = sld [smem:[#allocation4 + %s374]]
        %s376 = scalar_lea.vmem %s1, %s375
        %v377 = vld [vmem:[%s376] sm:$0x1]
        %378 = vst.msk [vmem:[#allocation2 + $0x5] sm:$0x1] %vm352, %v377
        %s379 = sadd.s32 %s348, 6
        %s380 = sld [smem:[#allocation4 + %s379]]
        %s381 = scalar_lea.vmem %s1, %s380
        %v382 = vld [vmem:[%s381] sm:$0x1]
        %383 = vst.msk [vmem:[#allocation2 + $0x6] sm:$0x1] %vm352, %v382
        %s384 = sadd.s32 %s348, 7
        %s385 = sld [smem:[#allocation4 + %s384]]
        %s386 = scalar_lea.vmem %s1, %s385
        %v387 = vld [vmem:[%s386] sm:$0x1]
        %388 = vst.msk [vmem:[#allocation2 + $0x7] sm:$0x1] %vm352, %v387
        %v389 = vld [vmem:[#allocation2] sm:$0xff]
        %v390 = vld [vmem:[%s2] sm:$0xff]
        %v391 = vld [vmem:[%s2 + $0x8] sm:$0xff]
        %v392 = vld [vmem:[%s2 + $0x10] sm:$0xff]
        %v393 = vld [vmem:[%s2 + $0x18] sm:$0xff]
        %v394 = vld [vmem:[#allocation5] sm:$0x1]
        %v396 = vlaneseq
        %v397 = vshrl.u32 %v396, 7
        %v398 = vsub.s32 0, %v397
        %v399 = vrot.slane %v394, %v398
        %vm401 = vcmask 261120
        %v403 = vsel %vm401, %v389, 0
        %405 = vmatprep.subr.mxu0 0.0
        %406 = vmatpush1.msra.mxu0 %v390
        %407 = vmatprep.subr.mxu0 0.0
        %408 = vmatpush1.msra.mxu0 %v391
        %409 = vmatprep.subr.mxu0 0.0
        %410 = vmatpush1.msra.mxu0 %v392
        %411 = vmatprep.subr.mxu0 0.0
        %412 = vmatpush1.msra.mxu0 %v393
        %413 = vmatprep.subr.mxu0 0.0
        %414 = vmatpush1.msra.mxu0 0.0
        %415 = vmatprep.subr.mxu0 0.0
        %416 = vmatpush1.msra.mxu0 0.0
        %417 = vmatprep.subr.mxu0 0.0
        %418 = vmatpush1.msra.mxu0 0.0
        %419 = vmatprep.subr.mxu0 0.0
        %420 = vmatpush1.msra.mxu0 0.0
        %421 = vmatprep.subr.mxu0 0.0
        %422 = vmatpush1.msra.mxu0 0.0
        %423 = vmatprep.subr.mxu0 0.0
        %424 = vmatpush1.msra.mxu0 0.0
        %425 = vmatprep.subr.mxu0 0.0
        %426 = vmatpush1.msra.mxu0 0.0
        %427 = vmatprep.subr.mxu0 0.0
        %428 = vmatpush1.msra.mxu0 0.0
        %429 = vmatprep.subr.mxu0 0.0
        %430 = vmatpush1.msra.mxu0 0.0
        %431 = vmatprep.subr.mxu0 0.0
        %432 = vmatpush1.msra.mxu0 0.0
        %433 = vmatprep.subr.mxu0 0.0
        %434 = vmatpush1.msra.mxu0 0.0
        %435 = vmatprep.subr.mxu0 0.0
        %436 = vmatpush1.msra.mxu0 0.0
        %437 = vmatprep.subr.mxu0 0.0
        %438 = vmatpush1.msra.mxu0 0.0
        %439 = vmatprep.subr.mxu0 0.0
        %440 = vmatpush1.msra.mxu0 0.0
        %441 = vmatprep.subr.mxu0 0.0
        %442 = vmatpush1.msra.mxu0 0.0
        %443 = vmatprep.subr.mxu0 0.0
        %444 = vmatpush1.msra.mxu0 0.0
        %445 = vmatprep.subr.mxu0 0.0
        %446 = vmatpush1.msra.mxu0 0.0
        %447 = vmatprep.subr.mxu0 0.0
        %448 = vmatpush1.msra.mxu0 0.0
        %449 = vmatprep.subr.mxu0 0.0
        %450 = vmatpush1.msra.mxu0 0.0
        %451 = vmatprep.subr.mxu0 0.0
        %452 = vmatpush1.msra.mxu0 0.0
        %453 = vmatprep.subr.mxu0 0.0
        %454 = vmatpush1.msra.mxu0 0.0
        %455 = vmatprep.subr.mxu0 0.0
        %456 = vmatpush1.msra.mxu0 0.0
        %457 = vmatprep.subr.mxu0 0.0
        %458 = vmatpush1.msra.mxu0 0.0
        %459 = vmatprep.subr.mxu0 0.0
        %460 = vmatpush1.msra.mxu0 0.0
        %461 = vmatprep.subr.mxu0 0.0
        %462 = vmatpush1.msra.mxu0 0.0
        %463 = vmatprep.subr.mxu0 0.0
        %464 = vmatpush1.msra.mxu0 0.0
        %465 = vmatprep.subr.mxu0 0.0
        %466 = vmatpush1.msra.mxu0 0.0
        %467 = vmatprep.subr.mxu0 0.0
        %468 = vmatpush1.msra.mxu0 0.0
        %469 = vmatprep.mubr.f32.mxu0 0.0
        %470 = vmatmul.mubr.f32.gmra.mrb[0].mxu0 %v403
        %v471 = vpop.f32.mrb[0].mxu0
        %v472 = vadd.f32 %v399, %v471
        %v473 = vpop.f32.mrb[0].mxu0
        %474 = vdwg.mxu0
        %476 = vrot.lane.b32.xlu0 %v472, 120
        %v477 = vpop.permute.xlu0 %476
        %478 = vrot.lane.b32.xlu0 %v472, 112
        %v479 = vpop.permute.xlu0 %478
        %480 = vrot.lane.b32.xlu0 %v472, 104
        %v481 = vpop.permute.xlu0 %480
        %482 = vrot.lane.b32.xlu0 %v472, 96
        %v483 = vpop.permute.xlu0 %482
        %484 = vrot.lane.b32.xlu0 %v477, 96
        %v485 = vpop.permute.xlu0 %484
        %486 = vrot.lane.b32.xlu0 %v479, 96
        %v487 = vpop.permute.xlu0 %486
        %488 = vrot.lane.b32.xlu0 %v481, 96
        %v489 = vpop.permute.xlu0 %488
        %494 = vxpose.xlu0.b32.start [1/16] %v483, 128
        %495 = vxpose.xlu0.b32.cont [2/16] 0.0, 128
        %496 = vxpose.xlu0.b32.cont [3/16] 0.0, 128
        %497 = vxpose.xlu0.b32.cont [4/16] 0.0, 128
        %498 = vxpose.xlu0.b32.cont [5/16] 0.0, 128
        %499 = vxpose.xlu0.b32.cont [6/16] 0.0, 128
        %500 = vxpose.xlu0.b32.cont [7/16] 0.0, 128
        %501 = vxpose.xlu0.b32.cont [8/16] 0.0, 128
        %502 = vxpose.xlu0.b32.cont [9/16] 0.0, 128
        %503 = vxpose.xlu0.b32.cont [10/16] 0.0, 128
        %504 = vxpose.xlu0.b32.cont [11/16] 0.0, 128
        %505 = vxpose.xlu0.b32.cont [12/16] 0.0, 128
        %506 = vxpose.xlu0.b32.cont [13/16] 0.0, 128
        %507 = vxpose.xlu0.b32.cont [14/16] 0.0, 128
        %508 = vxpose.xlu0.b32.cont [15/16] 0.0, 128
        %509 = vxpose.xlu0.b32.end [16/16] 0.0, 128
        %v510 = vpop.trf.xlu0
        %v511 = vpop.trf.xlu0
        %v512 = vpop.trf.xlu0
        %v513 = vpop.trf.xlu0
        %v514 = vpop.trf.xlu0
        %v515 = vpop.trf.xlu0
        %v516 = vpop.trf.xlu0
        %v517 = vpop.trf.xlu0
        %v518 = vpop.trf.xlu0
        %v519 = vpop.trf.xlu0
        %v520 = vpop.trf.xlu0
        %v521 = vpop.trf.xlu0
        %v522 = vpop.trf.xlu0
        %v523 = vpop.trf.xlu0
        %v524 = vpop.trf.xlu0
        %v525 = vpop.trf.xlu0
        %526 = vxpose.xlu0.b32.start [1/16] %v485, 128
        %527 = vxpose.xlu0.b32.cont [2/16] 0.0, 128
        %528 = vxpose.xlu0.b32.cont [3/16] 0.0, 128
        %529 = vxpose.xlu0.b32.cont [4/16] 0.0, 128
        %530 = vxpose.xlu0.b32.cont [5/16] 0.0, 128
        %531 = vxpose.xlu0.b32.cont [6/16] 0.0, 128
        %532 = vxpose.xlu0.b32.cont [7/16] 0.0, 128
        %533 = vxpose.xlu0.b32.cont [8/16] 0.0, 128
        %534 = vxpose.xlu0.b32.cont [9/16] 0.0, 128
        %535 = vxpose.xlu0.b32.cont [10/16] 0.0, 128
        %536 = vxpose.xlu0.b32.cont [11/16] 0.0, 128
        %537 = vxpose.xlu0.b32.cont [12/16] 0.0, 128
        %538 = vxpose.xlu0.b32.cont [13/16] 0.0, 128
        %539 = vxpose.xlu0.b32.cont [14/16] 0.0, 128
        %540 = vxpose.xlu0.b32.cont [15/16] 0.0, 128
        %541 = vxpose.xlu0.b32.end [16/16] 0.0, 128
        %v542 = vpop.trf.xlu0
        %v543 = vpop.trf.xlu0
        %v544 = vpop.trf.xlu0
        %v545 = vpop.trf.xlu0
        %v546 = vpop.trf.xlu0
        %v547 = vpop.trf.xlu0
        %v548 = vpop.trf.xlu0
        %v549 = vpop.trf.xlu0
        %v550 = vpop.trf.xlu0
        %v551 = vpop.trf.xlu0
        %v552 = vpop.trf.xlu0
        %v553 = vpop.trf.xlu0
        %v554 = vpop.trf.xlu0
        %v555 = vpop.trf.xlu0
        %v556 = vpop.trf.xlu0
        %v557 = vpop.trf.xlu0
        %558 = vxpose.xlu0.b32.start [1/16] %v487, 128
        %559 = vxpose.xlu0.b32.cont [2/16] 0.0, 128
        %560 = vxpose.xlu0.b32.cont [3/16] 0.0, 128
        %561 = vxpose.xlu0.b32.cont [4/16] 0.0, 128
        %562 = vxpose.xlu0.b32.cont [5/16] 0.0, 128
        %563 = vxpose.xlu0.b32.cont [6/16] 0.0, 128
        %564 = vxpose.xlu0.b32.cont [7/16] 0.0, 128
        %565 = vxpose.xlu0.b32.cont [8/16] 0.0, 128
        %566 = vxpose.xlu0.b32.cont [9/16] 0.0, 128
        %567 = vxpose.xlu0.b32.cont [10/16] 0.0, 128
        %568 = vxpose.xlu0.b32.cont [11/16] 0.0, 128
        %569 = vxpose.xlu0.b32.cont [12/16] 0.0, 128
        %570 = vxpose.xlu0.b32.cont [13/16] 0.0, 128
        %571 = vxpose.xlu0.b32.cont [14/16] 0.0, 128
        %572 = vxpose.xlu0.b32.cont [15/16] 0.0, 128
        %573 = vxpose.xlu0.b32.end [16/16] 0.0, 128
        %v574 = vpop.trf.xlu0
        %v575 = vpop.trf.xlu0
        %v576 = vpop.trf.xlu0
        %v577 = vpop.trf.xlu0
        %v578 = vpop.trf.xlu0
        %v579 = vpop.trf.xlu0
        %v580 = vpop.trf.xlu0
        %v581 = vpop.trf.xlu0
        %v582 = vpop.trf.xlu0
        %v583 = vpop.trf.xlu0
        %v584 = vpop.trf.xlu0
        %v585 = vpop.trf.xlu0
        %v586 = vpop.trf.xlu0
        %v587 = vpop.trf.xlu0
        %v588 = vpop.trf.xlu0
        %v589 = vpop.trf.xlu0
        %590 = vxpose.xlu0.b32.start [1/16] %v489, 128
        %591 = vxpose.xlu0.b32.cont [2/16] 0.0, 128
        %592 = vxpose.xlu0.b32.cont [3/16] 0.0, 128
        %593 = vxpose.xlu0.b32.cont [4/16] 0.0, 128
        %594 = vxpose.xlu0.b32.cont [5/16] 0.0, 128
        %595 = vxpose.xlu0.b32.cont [6/16] 0.0, 128
        %596 = vxpose.xlu0.b32.cont [7/16] 0.0, 128
        %597 = vxpose.xlu0.b32.cont [8/16] 0.0, 128
        %598 = vxpose.xlu0.b32.cont [9/16] 0.0, 128
        %599 = vxpose.xlu0.b32.cont [10/16] 0.0, 128
        %600 = vxpose.xlu0.b32.cont [11/16] 0.0, 128
        %601 = vxpose.xlu0.b32.cont [12/16] 0.0, 128
        %602 = vxpose.xlu0.b32.cont [13/16] 0.0, 128
        %603 = vxpose.xlu0.b32.cont [14/16] 0.0, 128
        %604 = vxpose.xlu0.b32.cont [15/16] 0.0, 128
        %605 = vxpose.xlu0.b32.end [16/16] 0.0, 128
        %v606 = vpop.trf.xlu0
        %v607 = vpop.trf.xlu0
        %v608 = vpop.trf.xlu0
        %v609 = vpop.trf.xlu0
        %v610 = vpop.trf.xlu0
        %v611 = vpop.trf.xlu0
        %v612 = vpop.trf.xlu0
        %v613 = vpop.trf.xlu0
        %v614 = vpop.trf.xlu0
        %v615 = vpop.trf.xlu0
        %v616 = vpop.trf.xlu0
        %v617 = vpop.trf.xlu0
        %v618 = vpop.trf.xlu0
        %v619 = vpop.trf.xlu0
        %v620 = vpop.trf.xlu0
        %v621 = vpop.trf.xlu0
        %vm622 = vcmask 64512
        %v623 = vsel %vm622, %v472, 0
        %625 = vmatprep.subr.mxu0 0.0
        %626 = vmatpush1.msra.mxu0 %v510
        %627 = vmatprep.subr.mxu0 0.0
        %628 = vmatpush1.msra.mxu0 0.0
        %629 = vmatprep.subr.mxu0 0.0
        %630 = vmatpush1.msra.mxu0 0.0
        %631 = vmatprep.subr.mxu0 0.0
        %632 = vmatpush1.msra.mxu0 0.0
        %633 = vmatprep.subr.mxu0 0.0
        %634 = vmatpush1.msra.mxu0 0.0
        %635 = vmatprep.subr.mxu0 0.0
        %636 = vmatpush1.msra.mxu0 0.0
        %637 = vmatprep.subr.mxu0 0.0
        %638 = vmatpush1.msra.mxu0 0.0
        %639 = vmatprep.subr.mxu0 0.0
        %640 = vmatpush1.msra.mxu0 0.0
        %641 = vmatprep.subr.mxu0 0.0
        %642 = vmatpush1.msra.mxu0 0.0
        %643 = vmatprep.subr.mxu0 0.0
        %644 = vmatpush1.msra.mxu0 0.0
        %645 = vmatprep.subr.mxu0 0.0
        %646 = vmatpush1.msra.mxu0 0.0
        %647 = vmatprep.subr.mxu0 0.0
        %648 = vmatpush1.msra.mxu0 0.0
        %649 = vmatprep.subr.mxu0 0.0
        %650 = vmatpush1.msra.mxu0 0.0
        %651 = vmatprep.subr.mxu0 0.0
        %652 = vmatpush1.msra.mxu0 0.0
        %653 = vmatprep.subr.mxu0 0.0
        %654 = vmatpush1.msra.mxu0 0.0
        %655 = vmatprep.subr.mxu0 0.0
        %656 = vmatpush1.msra.mxu0 0.0
        %657 = vmatprep.subr.mxu0 0.0
        %658 = vmatpush1.msra.mxu0 0.0
        %659 = vmatprep.subr.mxu0 0.0
        %660 = vmatpush1.msra.mxu0 0.0
        %661 = vmatprep.subr.mxu0 0.0
        %662 = vmatpush1.msra.mxu0 0.0
        %663 = vmatprep.subr.mxu0 0.0
        %664 = vmatpush1.msra.mxu0 0.0
        %665 = vmatprep.subr.mxu0 0.0
        %666 = vmatpush1.msra.mxu0 0.0
        %667 = vmatprep.subr.mxu0 0.0
        %668 = vmatpush1.msra.mxu0 0.0
        %669 = vmatprep.subr.mxu0 0.0
        %670 = vmatpush1.msra.mxu0 0.0
        %671 = vmatprep.subr.mxu0 0.0
        %672 = vmatpush1.msra.mxu0 0.0
        %673 = vmatprep.subr.mxu0 0.0
        %674 = vmatpush1.msra.mxu0 0.0
        %675 = vmatprep.subr.mxu0 0.0
        %676 = vmatpush1.msra.mxu0 0.0
        %677 = vmatprep.subr.mxu0 0.0
        %678 = vmatpush1.msra.mxu0 0.0
        %679 = vmatprep.subr.mxu0 0.0
        %680 = vmatpush1.msra.mxu0 0.0
        %681 = vmatprep.subr.mxu0 0.0
        %682 = vmatpush1.msra.mxu0 0.0
        %683 = vmatprep.subr.mxu0 0.0
        %684 = vmatpush1.msra.mxu0 0.0
        %685 = vmatprep.subr.mxu0 0.0
        %686 = vmatpush1.msra.mxu0 0.0
        %687 = vmatprep.subr.mxu0 0.0
        %688 = vmatpush1.msra.mxu0 0.0
        %689 = vmatprep.mubr.f32.mxu0 0.0
        %690 = vmatmul.mubr.f32.gmra.mrb[0].mxu0 %v623
        %v691 = vpop.f32.mrb[0].mxu0
        %v692 = vadd.f32 0.0, %v691
        %v693 = vpop.f32.mrb[0].mxu0
        %694 = vdwg.mxu0
        %v695 = vsel %vm622, %v477, 0
        %697 = vmatprep.subr.mxu0 0.0
        %698 = vmatpush1.msra.mxu0 %v542
        %699 = vmatprep.subr.mxu0 0.0
        %700 = vmatpush1.msra.mxu0 0.0
        %701 = vmatprep.subr.mxu0 0.0
        %702 = vmatpush1.msra.mxu0 0.0
        %703 = vmatprep.subr.mxu0 0.0
        %704 = vmatpush1.msra.mxu0 0.0
        %705 = vmatprep.subr.mxu0 0.0
        %706 = vmatpush1.msra.mxu0 0.0
        %707 = vmatprep.subr.mxu0 0.0
        %708 = vmatpush1.msra.mxu0 0.0
        %709 = vmatprep.subr.mxu0 0.0
        %710 = vmatpush1.msra.mxu0 0.0
        %711 = vmatprep.subr.mxu0 0.0
        %712 = vmatpush1.msra.mxu0 0.0
        %713 = vmatprep.subr.mxu0 0.0
        %714 = vmatpush1.msra.mxu0 0.0
        %715 = vmatprep.subr.mxu0 0.0
        %716 = vmatpush1.msra.mxu0 0.0
        %717 = vmatprep.subr.mxu0 0.0
        %718 = vmatpush1.msra.mxu0 0.0
        %719 = vmatprep.subr.mxu0 0.0
        %720 = vmatpush1.msra.mxu0 0.0
        %721 = vmatprep.subr.mxu0 0.0
        %722 = vmatpush1.msra.mxu0 0.0
        %723 = vmatprep.subr.mxu0 0.0
        %724 = vmatpush1.msra.mxu0 0.0
        %725 = vmatprep.subr.mxu0 0.0
        %726 = vmatpush1.msra.mxu0 0.0
        %727 = vmatprep.subr.mxu0 0.0
        %728 = vmatpush1.msra.mxu0 0.0
        %729 = vmatprep.subr.mxu0 0.0
        %730 = vmatpush1.msra.mxu0 0.0
        %731 = vmatprep.subr.mxu0 0.0
        %732 = vmatpush1.msra.mxu0 0.0
        %733 = vmatprep.subr.mxu0 0.0
        %734 = vmatpush1.msra.mxu0 0.0
        %735 = vmatprep.subr.mxu0 0.0
        %736 = vmatpush1.msra.mxu0 0.0
        %737 = vmatprep.subr.mxu0 0.0
        %738 = vmatpush1.msra.mxu0 0.0
        %739 = vmatprep.subr.mxu0 0.0
        %740 = vmatpush1.msra.mxu0 0.0
        %741 = vmatprep.subr.mxu0 0.0
        %742 = vmatpush1.msra.mxu0 0.0
        %743 = vmatprep.subr.mxu0 0.0
        %744 = vmatpush1.msra.mxu0 0.0
        %745 = vmatprep.subr.mxu0 0.0
        %746 = vmatpush1.msra.mxu0 0.0
        %747 = vmatprep.subr.mxu0 0.0
        %748 = vmatpush1.msra.mxu0 0.0
        %749 = vmatprep.subr.mxu0 0.0
        %750 = vmatpush1.msra.mxu0 0.0
        %751 = vmatprep.subr.mxu0 0.0
        %752 = vmatpush1.msra.mxu0 0.0
        %753 = vmatprep.subr.mxu0 0.0
        %754 = vmatpush1.msra.mxu0 0.0
        %755 = vmatprep.subr.mxu0 0.0
        %756 = vmatpush1.msra.mxu0 0.0
        %757 = vmatprep.subr.mxu0 0.0
        %758 = vmatpush1.msra.mxu0 0.0
        %759 = vmatprep.subr.mxu0 0.0
        %760 = vmatpush1.msra.mxu0 0.0
        %761 = vmatprep.mubr.f32.mxu0 0.0
        %762 = vmatmul.mubr.f32.gmra.mrb[0].mxu0 %v695
        %v763 = vpop.f32.mrb[0].mxu0
        %v764 = vadd.f32 0.0, %v763
        %v765 = vpop.f32.mrb[0].mxu0
        %766 = vdwg.mxu0
        %v767 = vsel %vm622, %v479, 0
        %769 = vmatprep.subr.mxu0 0.0
        %770 = vmatpush1.msra.mxu0 %v574
        %771 = vmatprep.subr.mxu0 0.0
        %772 = vmatpush1.msra.mxu0 0.0
        %773 = vmatprep.subr.mxu0 0.0
        %774 = vmatpush1.msra.mxu0 0.0
        %775 = vmatprep.subr.mxu0 0.0
        %776 = vmatpush1.msra.mxu0 0.0
        %777 = vmatprep.subr.mxu0 0.0
        %778 = vmatpush1.msra.mxu0 0.0
        %779 = vmatprep.subr.mxu0 0.0
        %780 = vmatpush1.msra.mxu0 0.0
        %781 = vmatprep.subr.mxu0 0.0
        %782 = vmatpush1.msra.mxu0 0.0
        %783 = vmatprep.subr.mxu0 0.0
        %784 = vmatpush1.msra.mxu0 0.0
        %785 = vmatprep.subr.mxu0 0.0
        %786 = vmatpush1.msra.mxu0 0.0
        %787 = vmatprep.subr.mxu0 0.0
        %788 = vmatpush1.msra.mxu0 0.0
        %789 = vmatprep.subr.mxu0 0.0
        %790 = vmatpush1.msra.mxu0 0.0
        %791 = vmatprep.subr.mxu0 0.0
        %792 = vmatpush1.msra.mxu0 0.0
        %793 = vmatprep.subr.mxu0 0.0
        %794 = vmatpush1.msra.mxu0 0.0
        %795 = vmatprep.subr.mxu0 0.0
        %796 = vmatpush1.msra.mxu0 0.0
        %797 = vmatprep.subr.mxu0 0.0
        %798 = vmatpush1.msra.mxu0 0.0
        %799 = vmatprep.subr.mxu0 0.0
        %800 = vmatpush1.msra.mxu0 0.0
        %801 = vmatprep.subr.mxu0 0.0
        %802 = vmatpush1.msra.mxu0 0.0
        %803 = vmatprep.subr.mxu0 0.0
        %804 = vmatpush1.msra.mxu0 0.0
        %805 = vmatprep.subr.mxu0 0.0
        %806 = vmatpush1.msra.mxu0 0.0
        %807 = vmatprep.subr.mxu0 0.0
        %808 = vmatpush1.msra.mxu0 0.0
        %809 = vmatprep.subr.mxu0 0.0
        %810 = vmatpush1.msra.mxu0 0.0
        %811 = vmatprep.subr.mxu0 0.0
        %812 = vmatpush1.msra.mxu0 0.0
        %813 = vmatprep.subr.mxu0 0.0
        %814 = vmatpush1.msra.mxu0 0.0
        %815 = vmatprep.subr.mxu0 0.0
        %816 = vmatpush1.msra.mxu0 0.0
        %817 = vmatprep.subr.mxu0 0.0
        %818 = vmatpush1.msra.mxu0 0.0
        %819 = vmatprep.subr.mxu0 0.0
        %820 = vmatpush1.msra.mxu0 0.0
        %821 = vmatprep.subr.mxu0 0.0
        %822 = vmatpush1.msra.mxu0 0.0
        %823 = vmatprep.subr.mxu0 0.0
        %824 = vmatpush1.msra.mxu0 0.0
        %825 = vmatprep.subr.mxu0 0.0
        %826 = vmatpush1.msra.mxu0 0.0
        %827 = vmatprep.subr.mxu0 0.0
        %828 = vmatpush1.msra.mxu0 0.0
        %829 = vmatprep.subr.mxu0 0.0
        %830 = vmatpush1.msra.mxu0 0.0
        %831 = vmatprep.subr.mxu0 0.0
        %832 = vmatpush1.msra.mxu0 0.0
        %833 = vmatprep.mubr.f32.mxu0 0.0
        %834 = vmatmul.mubr.f32.gmra.mrb[0].mxu0 %v767
        %v835 = vpop.f32.mrb[0].mxu0
        %v836 = vadd.f32 0.0, %v835
        %v837 = vpop.f32.mrb[0].mxu0
        %838 = vdwg.mxu0
        %v839 = vsel %vm622, %v481, 0
        %841 = vmatprep.subr.mxu0 0.0
        %842 = vmatpush1.msra.mxu0 %v606
        %843 = vmatprep.subr.mxu0 0.0
        %844 = vmatpush1.msra.mxu0 0.0
        %845 = vmatprep.subr.mxu0 0.0
        %846 = vmatpush1.msra.mxu0 0.0
        %847 = vmatprep.subr.mxu0 0.0
        %848 = vmatpush1.msra.mxu0 0.0
        %849 = vmatprep.subr.mxu0 0.0
        %850 = vmatpush1.msra.mxu0 0.0
        %851 = vmatprep.subr.mxu0 0.0
        %852 = vmatpush1.msra.mxu0 0.0
        %853 = vmatprep.subr.mxu0 0.0
        %854 = vmatpush1.msra.mxu0 0.0
        %855 = vmatprep.subr.mxu0 0.0
        %856 = vmatpush1.msra.mxu0 0.0
        %857 = vmatprep.subr.mxu0 0.0
        %858 = vmatpush1.msra.mxu0 0.0
        %859 = vmatprep.subr.mxu0 0.0
        %860 = vmatpush1.msra.mxu0 0.0
        %861 = vmatprep.subr.mxu0 0.0
        %862 = vmatpush1.msra.mxu0 0.0
        %863 = vmatprep.subr.mxu0 0.0
        %864 = vmatpush1.msra.mxu0 0.0
        %865 = vmatprep.subr.mxu0 0.0
        %866 = vmatpush1.msra.mxu0 0.0
        %867 = vmatprep.subr.mxu0 0.0
        %868 = vmatpush1.msra.mxu0 0.0
        %869 = vmatprep.subr.mxu0 0.0
        %870 = vmatpush1.msra.mxu0 0.0
        %871 = vmatprep.subr.mxu0 0.0
        %872 = vmatpush1.msra.mxu0 0.0
        %873 = vmatprep.subr.mxu0 0.0
        %874 = vmatpush1.msra.mxu0 0.0
        %875 = vmatprep.subr.mxu0 0.0
        %876 = vmatpush1.msra.mxu0 0.0
        %877 = vmatprep.subr.mxu0 0.0
        %878 = vmatpush1.msra.mxu0 0.0
        %879 = vmatprep.subr.mxu0 0.0
        %880 = vmatpush1.msra.mxu0 0.0
        %881 = vmatprep.subr.mxu0 0.0
        %882 = vmatpush1.msra.mxu0 0.0
        %883 = vmatprep.subr.mxu0 0.0
        %884 = vmatpush1.msra.mxu0 0.0
        %885 = vmatprep.subr.mxu0 0.0
        %886 = vmatpush1.msra.mxu0 0.0
        %887 = vmatprep.subr.mxu0 0.0
        %888 = vmatpush1.msra.mxu0 0.0
        %889 = vmatprep.subr.mxu0 0.0
        %890 = vmatpush1.msra.mxu0 0.0
        %891 = vmatprep.subr.mxu0 0.0
        %892 = vmatpush1.msra.mxu0 0.0
        %893 = vmatprep.subr.mxu0 0.0
        %894 = vmatpush1.msra.mxu0 0.0
        %895 = vmatprep.subr.mxu0 0.0
        %896 = vmatpush1.msra.mxu0 0.0
        %897 = vmatprep.subr.mxu0 0.0
        %898 = vmatpush1.msra.mxu0 0.0
        %899 = vmatprep.subr.mxu0 0.0
        %900 = vmatpush1.msra.mxu0 0.0
        %901 = vmatprep.subr.mxu0 0.0
        %902 = vmatpush1.msra.mxu0 0.0
        %903 = vmatprep.subr.mxu0 0.0
        %904 = vmatpush1.msra.mxu0 0.0
        %905 = vmatprep.mubr.f32.mxu0 0.0
        %906 = vmatmul.mubr.f32.gmra.mrb[0].mxu0 %v839
        %v907 = vpop.f32.mrb[0].mxu0
        %v908 = vadd.f32 0.0, %v907
        %v909 = vpop.f32.mrb[0].mxu0
        %910 = vdwg.mxu0
        %v911 = vmul.f32 %v692, 0.35355338
        %v912 = vmul.f32 %v764, 0.35355338
        %v913 = vmul.f32 %v836, 0.35355338
        %v914 = vmul.f32 %v908, 0.35355338
        %v915 = vsel %vm622, %v911, -inf
        %916 = vmax.xlane.f32.xlu0 %v915
        %v917 = vpop.xlane.xlu0 %916
        %v918 = vsel %vm622, %v912, -inf
        %919 = vmax.xlane.f32.xlu0 %v918
        %v920 = vpop.xlane.xlu0 %919
        %v921 = vsel %vm622, %v913, -inf
        %922 = vmax.xlane.f32.xlu0 %v921
        %v923 = vpop.xlane.xlu0 %922
        %v924 = vsel %vm622, %v914, -inf
        %925 = vmax.xlane.f32.xlu0 %v924
        %v926 = vpop.xlane.xlu0 %925
        %v927 = vsub.f32 %v911, %v917
        %v928 = vsub.f32 %v912, %v920
        %v929 = vsub.f32 %v913, %v923
        %v930 = vsub.f32 %v914, %v926
        %v931 = vmul.f32 %v927, 1.442695
        %v932 = vpow.pop %v931
        %v933 = vmul.f32 %v928, 1.442695
        %v934 = vpow.pop %v933
        %v935 = vmul.f32 %v929, 1.442695
        %v936 = vpow.pop %v935
        %v937 = vmul.f32 %v930, 1.442695
        %v938 = vpow.pop %v937
        %v939 = vsel %vm622, %v932, 0.0
        %940 = vadd.xlane.f32.xlu0 %v939
        %v941 = vpop.xlane.xlu0 %940
        %v942 = vsel %vm622, %v934, 0.0
        %943 = vadd.xlane.f32.xlu0 %v942
        %v944 = vpop.xlane.xlu0 %943
        %v945 = vsel %vm622, %v936, 0.0
        %946 = vadd.xlane.f32.xlu0 %v945
        %v947 = vpop.xlane.xlu0 %946
        %v948 = vsel %vm622, %v938, 0.0
        %949 = vadd.xlane.f32.xlu0 %v948
        %v950 = vpop.xlane.xlu0 %949
        %v951 = vrcp.pop %v941
        %v952 = vmul.f32 %v932, %v951
        %v953 = vrcp.pop %v944
        %v954 = vmul.f32 %v934, %v953
        %v955 = vrcp.pop %v947
        %v956 = vmul.f32 %v936, %v955
        %v957 = vrcp.pop %v950
        %v958 = vmul.f32 %v938, %v957
        %959 = vrot.lane.b32.xlu0 %v472, 64
        %v960 = vpop.permute.xlu0 %959
        %961 = vrot.lane.b32.xlu0 %v477, 64
        %v962 = vpop.permute.xlu0 %961
        %963 = vrot.lane.b32.xlu0 %v479, 64
        %v964 = vpop.permute.xlu0 %963
        %965 = vrot.lane.b32.xlu0 %v481, 64
        %v966 = vpop.permute.xlu0 %965
        %971 = vxpose.xlu0.b32.start [1/16] %v960, 128
        %972 = vxpose.xlu0.b32.cont [2/16] 0.0, 128
        %973 = vxpose.xlu0.b32.cont [3/16] 0.0, 128
        %974 = vxpose.xlu0.b32.cont [4/16] 0.0, 128
        %975 = vxpose.xlu0.b32.cont [5/16] 0.0, 128
        %976 = vxpose.xlu0.b32.cont [6/16] 0.0, 128
        %977 = vxpose.xlu0.b32.cont [7/16] 0.0, 128
        %978 = vxpose.xlu0.b32.cont [8/16] 0.0, 128
        %979 = vxpose.xlu0.b32.cont [9/16] 0.0, 128
        %980 = vxpose.xlu0.b32.cont [10/16] 0.0, 128
        %981 = vxpose.xlu0.b32.cont [11/16] 0.0, 128
        %982 = vxpose.xlu0.b32.cont [12/16] 0.0, 128
        %983 = vxpose.xlu0.b32.cont [13/16] 0.0, 128
        %984 = vxpose.xlu0.b32.cont [14/16] 0.0, 128
        %985 = vxpose.xlu0.b32.cont [15/16] 0.0, 128
        %986 = vxpose.xlu0.b32.end [16/16] 0.0, 128
        %v987 = vpop.trf.xlu0
        %v988 = vpop.trf.xlu0
        %v989 = vpop.trf.xlu0
        %v990 = vpop.trf.xlu0
        %v991 = vpop.trf.xlu0
        %v992 = vpop.trf.xlu0
        %v993 = vpop.trf.xlu0
        %v994 = vpop.trf.xlu0
        %v995 = vpop.trf.xlu0
        %v996 = vpop.trf.xlu0
        %v997 = vpop.trf.xlu0
        %v998 = vpop.trf.xlu0
        %v999 = vpop.trf.xlu0
        %v1000 = vpop.trf.xlu0
        %v1001 = vpop.trf.xlu0
        %v1002 = vpop.trf.xlu0
        %1003 = vxpose.xlu0.b32.start [1/16] %v962, 128
        %1004 = vxpose.xlu0.b32.cont [2/16] 0.0, 128
        %1005 = vxpose.xlu0.b32.cont [3/16] 0.0, 128
        %1006 = vxpose.xlu0.b32.cont [4/16] 0.0, 128
        %1007 = vxpose.xlu0.b32.cont [5/16] 0.0, 128
        %1008 = vxpose.xlu0.b32.cont [6/16] 0.0, 128
        %1009 = vxpose.xlu0.b32.cont [7/16] 0.0, 128
        %1010 = vxpose.xlu0.b32.cont [8/16] 0.0, 128
        %1011 = vxpose.xlu0.b32.cont [9/16] 0.0, 128
        %1012 = vxpose.xlu0.b32.cont [10/16] 0.0, 128
        %1013 = vxpose.xlu0.b32.cont [11/16] 0.0, 128
        %1014 = vxpose.xlu0.b32.cont [12/16] 0.0, 128
        %1015 = vxpose.xlu0.b32.cont [13/16] 0.0, 128
        %1016 = vxpose.xlu0.b32.cont [14/16] 0.0, 128
        %1017 = vxpose.xlu0.b32.cont [15/16] 0.0, 128
        %1018 = vxpose.xlu0.b32.end [16/16] 0.0, 128
        %v1019 = vpop.trf.xlu0
        %v1020 = vpop.trf.xlu0
        %v1021 = vpop.trf.xlu0
        %v1022 = vpop.trf.xlu0
        %v1023 = vpop.trf.xlu0
        %v1024 = vpop.trf.xlu0
        %v1025 = vpop.trf.xlu0
        %v1026 = vpop.trf.xlu0
        %v1027 = vpop.trf.xlu0
        %v1028 = vpop.trf.xlu0
        %v1029 = vpop.trf.xlu0
        %v1030 = vpop.trf.xlu0
        %v1031 = vpop.trf.xlu0
        %v1032 = vpop.trf.xlu0
        %v1033 = vpop.trf.xlu0
        %v1034 = vpop.trf.xlu0
        %1035 = vxpose.xlu0.b32.start [1/16] %v964, 128
        %1036 = vxpose.xlu0.b32.cont [2/16] 0.0, 128
        %1037 = vxpose.xlu0.b32.cont [3/16] 0.0, 128
        %1038 = vxpose.xlu0.b32.cont [4/16] 0.0, 128
        %1039 = vxpose.xlu0.b32.cont [5/16] 0.0, 128
        %1040 = vxpose.xlu0.b32.cont [6/16] 0.0, 128
        %1041 = vxpose.xlu0.b32.cont [7/16] 0.0, 128
        %1042 = vxpose.xlu0.b32.cont [8/16] 0.0, 128
        %1043 = vxpose.xlu0.b32.cont [9/16] 0.0, 128
        %1044 = vxpose.xlu0.b32.cont [10/16] 0.0, 128
        %1045 = vxpose.xlu0.b32.cont [11/16] 0.0, 128
        %1046 = vxpose.xlu0.b32.cont [12/16] 0.0, 128
        %1047 = vxpose.xlu0.b32.cont [13/16] 0.0, 128
        %1048 = vxpose.xlu0.b32.cont [14/16] 0.0, 128
        %1049 = vxpose.xlu0.b32.cont [15/16] 0.0, 128
        %1050 = vxpose.xlu0.b32.end [16/16] 0.0, 128
        %v1051 = vpop.trf.xlu0
        %v1052 = vpop.trf.xlu0
        %v1053 = vpop.trf.xlu0
        %v1054 = vpop.trf.xlu0
        %v1055 = vpop.trf.xlu0
        %v1056 = vpop.trf.xlu0
        %v1057 = vpop.trf.xlu0
        %v1058 = vpop.trf.xlu0
        %v1059 = vpop.trf.xlu0
        %v1060 = vpop.trf.xlu0
        %v1061 = vpop.trf.xlu0
        %v1062 = vpop.trf.xlu0
        %v1063 = vpop.trf.xlu0
        %v1064 = vpop.trf.xlu0
        %v1065 = vpop.trf.xlu0
        %v1066 = vpop.trf.xlu0
        %1067 = vxpose.xlu0.b32.start [1/16] %v966, 128
        %1068 = vxpose.xlu0.b32.cont [2/16] 0.0, 128
        %1069 = vxpose.xlu0.b32.cont [3/16] 0.0, 128
        %1070 = vxpose.xlu0.b32.cont [4/16] 0.0, 128
        %1071 = vxpose.xlu0.b32.cont [5/16] 0.0, 128
        %1072 = vxpose.xlu0.b32.cont [6/16] 0.0, 128
        %1073 = vxpose.xlu0.b32.cont [7/16] 0.0, 128
        %1074 = vxpose.xlu0.b32.cont [8/16] 0.0, 128
        %1075 = vxpose.xlu0.b32.cont [9/16] 0.0, 128
        %1076 = vxpose.xlu0.b32.cont [10/16] 0.0, 128
        %1077 = vxpose.xlu0.b32.cont [11/16] 0.0, 128
        %1078 = vxpose.xlu0.b32.cont [12/16] 0.0, 128
        %1079 = vxpose.xlu0.b32.cont [13/16] 0.0, 128
        %1080 = vxpose.xlu0.b32.cont [14/16] 0.0, 128
        %1081 = vxpose.xlu0.b32.cont [15/16] 0.0, 128
        %1082 = vxpose.xlu0.b32.end [16/16] 0.0, 128
        %v1083 = vpop.trf.xlu0
        %v1084 = vpop.trf.xlu0
        %v1085 = vpop.trf.xlu0
        %v1086 = vpop.trf.xlu0
        %v1087 = vpop.trf.xlu0
        %v1088 = vpop.trf.xlu0
        %v1089 = vpop.trf.xlu0
        %v1090 = vpop.trf.xlu0
        %v1091 = vpop.trf.xlu0
        %v1092 = vpop.trf.xlu0
        %v1093 = vpop.trf.xlu0
        %v1094 = vpop.trf.xlu0
        %v1095 = vpop.trf.xlu0
        %v1096 = vpop.trf.xlu0
        %v1097 = vpop.trf.xlu0
        %v1098 = vpop.trf.xlu0
        %v1100 = vsel %vm622, %v987, 0
        %v1103 = vsel %vm622, %v952, 0
        %1105 = vmatprep.subr.mxu0 0.0
        %1106 = vmatpush1.xpose.msra.mxu0 %v1103
        %1107 = vmatprep.subr.mxu0 0.0
        %1108 = vmatpush1.xpose.msra.mxu0 0.0
        %1109 = vmatprep.subr.mxu0 0.0
        %1110 = vmatpush1.xpose.msra.mxu0 0.0
        %1111 = vmatprep.subr.mxu0 0.0
        %1112 = vmatpush1.xpose.msra.mxu0 0.0
        %1113 = vmatprep.subr.mxu0 0.0
        %1114 = vmatpush1.xpose.msra.mxu0 0.0
        %1115 = vmatprep.subr.mxu0 0.0
        %1116 = vmatpush1.xpose.msra.mxu0 0.0
        %1117 = vmatprep.subr.mxu0 0.0
        %1118 = vmatpush1.xpose.msra.mxu0 0.0
        %1119 = vmatprep.subr.mxu0 0.0
        %1120 = vmatpush1.xpose.msra.mxu0 0.0
        %1121 = vmatprep.subr.mxu0 0.0
        %1122 = vmatpush1.xpose.msra.mxu0 0.0
        %1123 = vmatprep.subr.mxu0 0.0
        %1124 = vmatpush1.xpose.msra.mxu0 0.0
        %1125 = vmatprep.subr.mxu0 0.0
        %1126 = vmatpush1.xpose.msra.mxu0 0.0
        %1127 = vmatprep.subr.mxu0 0.0
        %1128 = vmatpush1.xpose.msra.mxu0 0.0
        %1129 = vmatprep.subr.mxu0 0.0
        %1130 = vmatpush1.xpose.msra.mxu0 0.0
        %1131 = vmatprep.subr.mxu0 0.0
        %1132 = vmatpush1.xpose.msra.mxu0 0.0
        %1133 = vmatprep.subr.mxu0 0.0
        %1134 = vmatpush1.xpose.msra.mxu0 0.0
        %1135 = vmatprep.subr.mxu0 0.0
        %1136 = vmatpush1.xpose.msra.mxu0 0.0
        %1137 = vmatprep.subr.mxu0 0.0
        %1138 = vmatpush1.xpose.msra.mxu0 0.0
        %1139 = vmatprep.subr.mxu0 0.0
        %1140 = vmatpush1.xpose.msra.mxu0 0.0
        %1141 = vmatprep.subr.mxu0 0.0
        %1142 = vmatpush1.xpose.msra.mxu0 0.0
        %1143 = vmatprep.subr.mxu0 0.0
        %1144 = vmatpush1.xpose.msra.mxu0 0.0
        %1145 = vmatprep.subr.mxu0 0.0
        %1146 = vmatpush1.xpose.msra.mxu0 0.0
        %1147 = vmatprep.subr.mxu0 0.0
        %1148 = vmatpush1.xpose.msra.mxu0 0.0
        %1149 = vmatprep.subr.mxu0 0.0
        %1150 = vmatpush1.xpose.msra.mxu0 0.0
        %1151 = vmatprep.subr.mxu0 0.0
        %1152 = vmatpush1.xpose.msra.mxu0 0.0
        %1153 = vmatprep.subr.mxu0 0.0
        %1154 = vmatpush1.xpose.msra.mxu0 0.0
        %1155 = vmatprep.subr.mxu0 0.0
        %1156 = vmatpush1.xpose.msra.mxu0 0.0
        %1157 = vmatprep.subr.mxu0 0.0
        %1158 = vmatpush1.xpose.msra.mxu0 0.0
        %1159 = vmatprep.subr.mxu0 0.0
        %1160 = vmatpush1.xpose.msra.mxu0 0.0
        %1161 = vmatprep.subr.mxu0 0.0
        %1162 = vmatpush1.xpose.msra.mxu0 0.0
        %1163 = vmatprep.subr.mxu0 0.0
        %1164 = vmatpush1.xpose.msra.mxu0 0.0
        %1165 = vmatprep.subr.mxu0 0.0
        %1166 = vmatpush1.xpose.msra.mxu0 0.0
        %1167 = vmatprep.subr.mxu0 0.0
        %1168 = vmatpush1.xpose.msra.mxu0 0.0
        %1169 = vmatprep.mubr.f32.mxu0 0.0
        %1170 = vmatmul.mubr.f32.gmra.mrb[0].mxu0 %v1100
        %v1171 = vpop.f32.mrb[0].mxu0
        %v1172 = vadd.f32 0.0, %v1171
        %v1173 = vpop.f32.mrb[0].mxu0
        %1174 = vdwg.mxu0
        %v1176 = vsel %vm622, %v1019, 0
        %v1179 = vsel %vm622, %v954, 0
        %1181 = vmatprep.subr.mxu0 0.0
        %1182 = vmatpush1.xpose.msra.mxu0 %v1179
        %1183 = vmatprep.subr.mxu0 0.0
        %1184 = vmatpush1.xpose.msra.mxu0 0.0
        %1185 = vmatprep.subr.mxu0 0.0
        %1186 = vmatpush1.xpose.msra.mxu0 0.0
        %1187 = vmatprep.subr.mxu0 0.0
        %1188 = vmatpush1.xpose.msra.mxu0 0.0
        %1189 = vmatprep.subr.mxu0 0.0
        %1190 = vmatpush1.xpose.msra.mxu0 0.0
        %1191 = vmatprep.subr.mxu0 0.0
        %1192 = vmatpush1.xpose.msra.mxu0 0.0
        %1193 = vmatprep.subr.mxu0 0.0
        %1194 = vmatpush1.xpose.msra.mxu0 0.0
        %1195 = vmatprep.subr.mxu0 0.0
        %1196 = vmatpush1.xpose.msra.mxu0 0.0
        %1197 = vmatprep.subr.mxu0 0.0
        %1198 = vmatpush1.xpose.msra.mxu0 0.0
        %1199 = vmatprep.subr.mxu0 0.0
        %1200 = vmatpush1.xpose.msra.mxu0 0.0
        %1201 = vmatprep.subr.mxu0 0.0
        %1202 = vmatpush1.xpose.msra.mxu0 0.0
        %1203 = vmatprep.subr.mxu0 0.0
        %1204 = vmatpush1.xpose.msra.mxu0 0.0
        %1205 = vmatprep.subr.mxu0 0.0
        %1206 = vmatpush1.xpose.msra.mxu0 0.0
        %1207 = vmatprep.subr.mxu0 0.0
        %1208 = vmatpush1.xpose.msra.mxu0 0.0
        %1209 = vmatprep.subr.mxu0 0.0
        %1210 = vmatpush1.xpose.msra.mxu0 0.0
        %1211 = vmatprep.subr.mxu0 0.0
        %1212 = vmatpush1.xpose.msra.mxu0 0.0
        %1213 = vmatprep.subr.mxu0 0.0
        %1214 = vmatpush1.xpose.msra.mxu0 0.0
        %1215 = vmatprep.subr.mxu0 0.0
        %1216 = vmatpush1.xpose.msra.mxu0 0.0
        %1217 = vmatprep.subr.mxu0 0.0
        %1218 = vmatpush1.xpose.msra.mxu0 0.0
        %1219 = vmatprep.subr.mxu0 0.0
        %1220 = vmatpush1.xpose.msra.mxu0 0.0
        %1221 = vmatprep.subr.mxu0 0.0
        %1222 = vmatpush1.xpose.msra.mxu0 0.0
        %1223 = vmatprep.subr.mxu0 0.0
        %1224 = vmatpush1.xpose.msra.mxu0 0.0
        %1225 = vmatprep.subr.mxu0 0.0
        %1226 = vmatpush1.xpose.msra.mxu0 0.0
        %1227 = vmatprep.subr.mxu0 0.0
        %1228 = vmatpush1.xpose.msra.mxu0 0.0
        %1229 = vmatprep.subr.mxu0 0.0
        %1230 = vmatpush1.xpose.msra.mxu0 0.0
        %1231 = vmatprep.subr.mxu0 0.0
        %1232 = vmatpush1.xpose.msra.mxu0 0.0
        %1233 = vmatprep.subr.mxu0 0.0
        %1234 = vmatpush1.xpose.msra.mxu0 0.0
        %1235 = vmatprep.subr.mxu0 0.0
        %1236 = vmatpush1.xpose.msra.mxu0 0.0
        %1237 = vmatprep.subr.mxu0 0.0
        %1238 = vmatpush1.xpose.msra.mxu0 0.0
        %1239 = vmatprep.subr.mxu0 0.0
        %1240 = vmatpush1.xpose.msra.mxu0 0.0
        %1241 = vmatprep.subr.mxu0 0.0
        %1242 = vmatpush1.xpose.msra.mxu0 0.0
        %1243 = vmatprep.subr.mxu0 0.0
        %1244 = vmatpush1.xpose.msra.mxu0 0.0
        %1245 = vmatprep.mubr.f32.mxu0 0.0
        %1246 = vmatmul.mubr.f32.gmra.mrb[0].mxu0 %v1176
        %v1247 = vpop.f32.mrb[0].mxu0
        %v1248 = vadd.f32 0.0, %v1247
        %v1249 = vpop.f32.mrb[0].mxu0
        %1250 = vdwg.mxu0
        %v1252 = vsel %vm622, %v1051, 0
        %v1255 = vsel %vm622, %v956, 0
        %1257 = vmatprep.subr.mxu0 0.0
        %1258 = vmatpush1.xpose.msra.mxu0 %v1255
        %1259 = vmatprep.subr.mxu0 0.0
        %1260 = vmatpush1.xpose.msra.mxu0 0.0
        %1261 = vmatprep.subr.mxu0 0.0
        %1262 = vmatpush1.xpose.msra.mxu0 0.0
        %1263 = vmatprep.subr.mxu0 0.0
        %1264 = vmatpush1.xpose.msra.mxu0 0.0
        %1265 = vmatprep.subr.mxu0 0.0
        %1266 = vmatpush1.xpose.msra.mxu0 0.0
        %1267 = vmatprep.subr.mxu0 0.0
        %1268 = vmatpush1.xpose.msra.mxu0 0.0
        %1269 = vmatprep.subr.mxu0 0.0
        %1270 = vmatpush1.xpose.msra.mxu0 0.0
        %1271 = vmatprep.subr.mxu0 0.0
        %1272 = vmatpush1.xpose.msra.mxu0 0.0
        %1273 = vmatprep.subr.mxu0 0.0
        %1274 = vmatpush1.xpose.msra.mxu0 0.0
        %1275 = vmatprep.subr.mxu0 0.0
        %1276 = vmatpush1.xpose.msra.mxu0 0.0
        %1277 = vmatprep.subr.mxu0 0.0
        %1278 = vmatpush1.xpose.msra.mxu0 0.0
        %1279 = vmatprep.subr.mxu0 0.0
        %1280 = vmatpush1.xpose.msra.mxu0 0.0
        %1281 = vmatprep.subr.mxu0 0.0
        %1282 = vmatpush1.xpose.msra.mxu0 0.0
        %1283 = vmatprep.subr.mxu0 0.0
        %1284 = vmatpush1.xpose.msra.mxu0 0.0
        %1285 = vmatprep.subr.mxu0 0.0
        %1286 = vmatpush1.xpose.msra.mxu0 0.0
        %1287 = vmatprep.subr.mxu0 0.0
        %1288 = vmatpush1.xpose.msra.mxu0 0.0
        %1289 = vmatprep.subr.mxu0 0.0
        %1290 = vmatpush1.xpose.msra.mxu0 0.0
        %1291 = vmatprep.subr.mxu0 0.0
        %1292 = vmatpush1.xpose.msra.mxu0 0.0
        %1293 = vmatprep.subr.mxu0 0.0
        %1294 = vmatpush1.xpose.msra.mxu0 0.0
        %1295 = vmatprep.subr.mxu0 0.0
        %1296 = vmatpush1.xpose.msra.mxu0 0.0
        %1297 = vmatprep.subr.mxu0 0.0
        %1298 = vmatpush1.xpose.msra.mxu0 0.0
        %1299 = vmatprep.subr.mxu0 0.0
        %1300 = vmatpush1.xpose.msra.mxu0 0.0
        %1301 = vmatprep.subr.mxu0 0.0
        %1302 = vmatpush1.xpose.msra.mxu0 0.0
        %1303 = vmatprep.subr.mxu0 0.0
        %1304 = vmatpush1.xpose.msra.mxu0 0.0
        %1305 = vmatprep.subr.mxu0 0.0
        %1306 = vmatpush1.xpose.msra.mxu0 0.0
        %1307 = vmatprep.subr.mxu0 0.0
        %1308 = vmatpush1.xpose.msra.mxu0 0.0
        %1309 = vmatprep.subr.mxu0 0.0
        %1310 = vmatpush1.xpose.msra.mxu0 0.0
        %1311 = vmatprep.subr.mxu0 0.0
        %1312 = vmatpush1.xpose.msra.mxu0 0.0
        %1313 = vmatprep.subr.mxu0 0.0
        %1314 = vmatpush1.xpose.msra.mxu0 0.0
        %1315 = vmatprep.subr.mxu0 0.0
        %1316 = vmatpush1.xpose.msra.mxu0 0.0
        %1317 = vmatprep.subr.mxu0 0.0
        %1318 = vmatpush1.xpose.msra.mxu0 0.0
        %1319 = vmatprep.subr.mxu0 0.0
        %1320 = vmatpush1.xpose.msra.mxu0 0.0
        %1321 = vmatprep.mubr.f32.mxu0 0.0
        %1322 = vmatmul.mubr.f32.gmra.mrb[0].mxu0 %v1252
        %v1323 = vpop.f32.mrb[0].mxu0
        %v1324 = vadd.f32 0.0, %v1323
        %v1325 = vpop.f32.mrb[0].mxu0
        %1326 = vdwg.mxu0
        %v1328 = vsel %vm622, %v1083, 0
        %v1331 = vsel %vm622, %v958, 0
        %1333 = vmatprep.subr.mxu0 0.0
        %1334 = vmatpush1.xpose.msra.mxu0 %v1331
        %1335 = vmatprep.subr.mxu0 0.0
        %1336 = vmatpush1.xpose.msra.mxu0 0.0
        %1337 = vmatprep.subr.mxu0 0.0
        %1338 = vmatpush1.xpose.msra.mxu0 0.0
        %1339 = vmatprep.subr.mxu0 0.0
        %1340 = vmatpush1.xpose.msra.mxu0 0.0
        %1341 = vmatprep.subr.mxu0 0.0
        %1342 = vmatpush1.xpose.msra.mxu0 0.0
        %1343 = vmatprep.subr.mxu0 0.0
        %1344 = vmatpush1.xpose.msra.mxu0 0.0
        %1345 = vmatprep.subr.mxu0 0.0
        %1346 = vmatpush1.xpose.msra.mxu0 0.0
        %1347 = vmatprep.subr.mxu0 0.0
        %1348 = vmatpush1.xpose.msra.mxu0 0.0
        %1349 = vmatprep.subr.mxu0 0.0
        %1350 = vmatpush1.xpose.msra.mxu0 0.0
        %1351 = vmatprep.subr.mxu0 0.0
        %1352 = vmatpush1.xpose.msra.mxu0 0.0
        %1353 = vmatprep.subr.mxu0 0.0
        %1354 = vmatpush1.xpose.msra.mxu0 0.0
        %1355 = vmatprep.subr.mxu0 0.0
        %1356 = vmatpush1.xpose.msra.mxu0 0.0
        %1357 = vmatprep.subr.mxu0 0.0
        %1358 = vmatpush1.xpose.msra.mxu0 0.0
        %1359 = vmatprep.subr.mxu0 0.0
        %1360 = vmatpush1.xpose.msra.mxu0 0.0
        %1361 = vmatprep.subr.mxu0 0.0
        %1362 = vmatpush1.xpose.msra.mxu0 0.0
        %1363 = vmatprep.subr.mxu0 0.0
        %1364 = vmatpush1.xpose.msra.mxu0 0.0
        %1365 = vmatprep.subr.mxu0 0.0
        %1366 = vmatpush1.xpose.msra.mxu0 0.0
        %1367 = vmatprep.subr.mxu0 0.0
        %1368 = vmatpush1.xpose.msra.mxu0 0.0
        %1369 = vmatprep.subr.mxu0 0.0
        %1370 = vmatpush1.xpose.msra.mxu0 0.0
        %1371 = vmatprep.subr.mxu0 0.0
        %1372 = vmatpush1.xpose.msra.mxu0 0.0
        %1373 = vmatprep.subr.mxu0 0.0
        %1374 = vmatpush1.xpose.msra.mxu0 0.0
        %1375 = vmatprep.subr.mxu0 0.0
        %1376 = vmatpush1.xpose.msra.mxu0 0.0
        %1377 = vmatprep.subr.mxu0 0.0
        %1378 = vmatpush1.xpose.msra.mxu0 0.0
        %1379 = vmatprep.subr.mxu0 0.0
        %1380 = vmatpush1.xpose.msra.mxu0 0.0
        %1381 = vmatprep.subr.mxu0 0.0
        %1382 = vmatpush1.xpose.msra.mxu0 0.0
        %1383 = vmatprep.subr.mxu0 0.0
        %1384 = vmatpush1.xpose.msra.mxu0 0.0
        %1385 = vmatprep.subr.mxu0 0.0
        %1386 = vmatpush1.xpose.msra.mxu0 0.0
        %1387 = vmatprep.subr.mxu0 0.0
        %1388 = vmatpush1.xpose.msra.mxu0 0.0
        %1389 = vmatprep.subr.mxu0 0.0
        %1390 = vmatpush1.xpose.msra.mxu0 0.0
        %1391 = vmatprep.subr.mxu0 0.0
        %1392 = vmatpush1.xpose.msra.mxu0 0.0
        %1393 = vmatprep.subr.mxu0 0.0
        %1394 = vmatpush1.xpose.msra.mxu0 0.0
        %1395 = vmatprep.subr.mxu0 0.0
        %1396 = vmatpush1.xpose.msra.mxu0 0.0
        %1397 = vmatprep.mubr.f32.mxu0 0.0
        %1398 = vmatmul.mubr.f32.gmra.mrb[0].mxu0 %v1328
        %v1399 = vpop.f32.mrb[0].mxu0
        %v1400 = vadd.f32 0.0, %v1399
        %v1401 = vpop.f32.mrb[0].mxu0
        %1402 = vdwg.mxu0
        %1403 = vxpose.xlu0.b32.start [1/16] %v1172, 128
        %1404 = vxpose.xlu0.b32.cont [2/16] 0.0, 128
        %1405 = vxpose.xlu0.b32.cont [3/16] 0.0, 128
        %1406 = vxpose.xlu0.b32.cont [4/16] 0.0, 128
        %1407 = vxpose.xlu0.b32.cont [5/16] 0.0, 128
        %1408 = vxpose.xlu0.b32.cont [6/16] 0.0, 128
        %1409 = vxpose.xlu0.b32.cont [7/16] 0.0, 128
        %1410 = vxpose.xlu0.b32.cont [8/16] 0.0, 128
        %1411 = vxpose.xlu0.b32.cont [9/16] 0.0, 128
        %1412 = vxpose.xlu0.b32.cont [10/16] 0.0, 128
        %1413 = vxpose.xlu0.b32.cont [11/16] 0.0, 128
        %1414 = vxpose.xlu0.b32.cont [12/16] 0.0, 128
        %1415 = vxpose.xlu0.b32.cont [13/16] 0.0, 128
        %1416 = vxpose.xlu0.b32.cont [14/16] 0.0, 128
        %1417 = vxpose.xlu0.b32.cont [15/16] 0.0, 128
        %1418 = vxpose.xlu0.b32.end [16/16] 0.0, 128
        %v1419 = vpop.trf.xlu0
        %v1420 = vpop.trf.xlu0
        %v1421 = vpop.trf.xlu0
        %v1422 = vpop.trf.xlu0
        %v1423 = vpop.trf.xlu0
        %v1424 = vpop.trf.xlu0
        %v1425 = vpop.trf.xlu0
        %v1426 = vpop.trf.xlu0
        %v1427 = vpop.trf.xlu0
        %v1428 = vpop.trf.xlu0
        %v1429 = vpop.trf.xlu0
        %v1430 = vpop.trf.xlu0
        %v1431 = vpop.trf.xlu0
        %v1432 = vpop.trf.xlu0
        %v1433 = vpop.trf.xlu0
        %v1434 = vpop.trf.xlu0
        %1435 = vxpose.xlu0.b32.start [1/16] %v1248, 128
        %1436 = vxpose.xlu0.b32.cont [2/16] 0.0, 128
        %1437 = vxpose.xlu0.b32.cont [3/16] 0.0, 128
        %1438 = vxpose.xlu0.b32.cont [4/16] 0.0, 128
        %1439 = vxpose.xlu0.b32.cont [5/16] 0.0, 128
        %1440 = vxpose.xlu0.b32.cont [6/16] 0.0, 128
        %1441 = vxpose.xlu0.b32.cont [7/16] 0.0, 128
        %1442 = vxpose.xlu0.b32.cont [8/16] 0.0, 128
        %1443 = vxpose.xlu0.b32.cont [9/16] 0.0, 128
        %1444 = vxpose.xlu0.b32.cont [10/16] 0.0, 128
        %1445 = vxpose.xlu0.b32.cont [11/16] 0.0, 128
        %1446 = vxpose.xlu0.b32.cont [12/16] 0.0, 128
        %1447 = vxpose.xlu0.b32.cont [13/16] 0.0, 128
        %1448 = vxpose.xlu0.b32.cont [14/16] 0.0, 128
        %1449 = vxpose.xlu0.b32.cont [15/16] 0.0, 128
        %1450 = vxpose.xlu0.b32.end [16/16] 0.0, 128
        %v1451 = vpop.trf.xlu0
        %v1452 = vpop.trf.xlu0
        %v1453 = vpop.trf.xlu0
        %v1454 = vpop.trf.xlu0
        %v1455 = vpop.trf.xlu0
        %v1456 = vpop.trf.xlu0
        %v1457 = vpop.trf.xlu0
        %v1458 = vpop.trf.xlu0
        %v1459 = vpop.trf.xlu0
        %v1460 = vpop.trf.xlu0
        %v1461 = vpop.trf.xlu0
        %v1462 = vpop.trf.xlu0
        %v1463 = vpop.trf.xlu0
        %v1464 = vpop.trf.xlu0
        %v1465 = vpop.trf.xlu0
        %v1466 = vpop.trf.xlu0
        %1467 = vxpose.xlu0.b32.start [1/16] %v1324, 128
        %1468 = vxpose.xlu0.b32.cont [2/16] 0.0, 128
        %1469 = vxpose.xlu0.b32.cont [3/16] 0.0, 128
        %1470 = vxpose.xlu0.b32.cont [4/16] 0.0, 128
        %1471 = vxpose.xlu0.b32.cont [5/16] 0.0, 128
        %1472 = vxpose.xlu0.b32.cont [6/16] 0.0, 128
        %1473 = vxpose.xlu0.b32.cont [7/16] 0.0, 128
        %1474 = vxpose.xlu0.b32.cont [8/16] 0.0, 128
        %1475 = vxpose.xlu0.b32.cont [9/16] 0.0, 128
        %1476 = vxpose.xlu0.b32.cont [10/16] 0.0, 128
        %1477 = vxpose.xlu0.b32.cont [11/16] 0.0, 128
        %1478 = vxpose.xlu0.b32.cont [12/16] 0.0, 128
        %1479 = vxpose.xlu0.b32.cont [13/16] 0.0, 128
        %1480 = vxpose.xlu0.b32.cont [14/16] 0.0, 128
        %1481 = vxpose.xlu0.b32.cont [15/16] 0.0, 128
        %1482 = vxpose.xlu0.b32.end [16/16] 0.0, 128
        %v1483 = vpop.trf.xlu0
        %v1484 = vpop.trf.xlu0
        %v1485 = vpop.trf.xlu0
        %v1486 = vpop.trf.xlu0
        %v1487 = vpop.trf.xlu0
        %v1488 = vpop.trf.xlu0
        %v1489 = vpop.trf.xlu0
        %v1490 = vpop.trf.xlu0
        %v1491 = vpop.trf.xlu0
        %v1492 = vpop.trf.xlu0
        %v1493 = vpop.trf.xlu0
        %v1494 = vpop.trf.xlu0
        %v1495 = vpop.trf.xlu0
        %v1496 = vpop.trf.xlu0
        %v1497 = vpop.trf.xlu0
        %v1498 = vpop.trf.xlu0
        %1499 = vxpose.xlu0.b32.start [1/16] %v1400, 128
        %1500 = vxpose.xlu0.b32.cont [2/16] 0.0, 128
        %1501 = vxpose.xlu0.b32.cont [3/16] 0.0, 128
        %1502 = vxpose.xlu0.b32.cont [4/16] 0.0, 128
        %1503 = vxpose.xlu0.b32.cont [5/16] 0.0, 128
        %1504 = vxpose.xlu0.b32.cont [6/16] 0.0, 128
        %1505 = vxpose.xlu0.b32.cont [7/16] 0.0, 128
        %1506 = vxpose.xlu0.b32.cont [8/16] 0.0, 128
        %1507 = vxpose.xlu0.b32.cont [9/16] 0.0, 128
        %1508 = vxpose.xlu0.b32.cont [10/16] 0.0, 128
        %1509 = vxpose.xlu0.b32.cont [11/16] 0.0, 128
        %1510 = vxpose.xlu0.b32.cont [12/16] 0.0, 128
        %1511 = vxpose.xlu0.b32.cont [13/16] 0.0, 128
        %1512 = vxpose.xlu0.b32.cont [14/16] 0.0, 128
        %1513 = vxpose.xlu0.b32.cont [15/16] 0.0, 128
        %1514 = vxpose.xlu0.b32.end [16/16] 0.0, 128
        %v1515 = vpop.trf.xlu0
        %v1516 = vpop.trf.xlu0
        %v1517 = vpop.trf.xlu0
        %v1518 = vpop.trf.xlu0
        %v1519 = vpop.trf.xlu0
        %v1520 = vpop.trf.xlu0
        %v1521 = vpop.trf.xlu0
        %v1522 = vpop.trf.xlu0
        %v1523 = vpop.trf.xlu0
        %v1524 = vpop.trf.xlu0
        %v1525 = vpop.trf.xlu0
        %v1526 = vpop.trf.xlu0
        %v1527 = vpop.trf.xlu0
        %v1528 = vpop.trf.xlu0
        %v1529 = vpop.trf.xlu0
        %v1530 = vpop.trf.xlu0
        %v1531 = vcombine.low %v1419, %v1483
        %v1532 = vcombine.high %v1419, %v1483
        %v1534 = vunpack.c.l.s4 1983009808
        %v1535 = vunpack.c.0.s8 %v1534
        %v1536 = vlaneseq
        %v1537 = vshrl.u32 %v1536, 7
        %v1538 = vsub.s32 %v1535, %v1537
        %v1539 = vrot.slane %v1531, %v1538
        %v1541 = vunpack.c.l.s4 1983009808
        %v1542 = vunpack.c.0.s8 %v1541
        %v1543 = vlaneseq
        %v1544 = vshrl.u32 %v1543, 7
        %v1545 = vsub.s32 %v1542, %v1544
        %v1546 = vrot.slane %v1532, %v1545
        %v1547 = vcombine.low %v1451, %v1515
        %v1548 = vcombine.high %v1451, %v1515
        %v1550 = vunpack.c.l.s4 1983009808
        %v1551 = vunpack.c.0.s8 %v1550
        %v1552 = vlaneseq
        %v1553 = vshrl.u32 %v1552, 7
        %v1554 = vsub.s32 %v1551, %v1553
        %v1555 = vrot.slane %v1547, %v1554
        %v1557 = vunpack.c.l.s4 1983009808
        %v1558 = vunpack.c.0.s8 %v1557
        %v1559 = vlaneseq
        %v1560 = vshrl.u32 %v1559, 7
        %v1561 = vsub.s32 %v1558, %v1560
        %v1562 = vrot.slane %v1548, %v1561
        %v1563 = vcombine.low %v1539, %v1555
        %v1564 = vcombine.high %v1539, %v1555
        %v1566 = vunpack.c.l.s4 1934713408
        %v1567 = vunpack.c.0.s8 %v1566
        %v1568 = vlaneseq
        %v1569 = vshrl.u32 %v1568, 7
        %v1570 = vsub.s32 %v1567, %v1569
        %v1571 = vrot.slane %v1563, %v1570
        %v1573 = vunpack.c.l.s4 1934713408
        %v1574 = vunpack.c.0.s8 %v1573
        %v1575 = vlaneseq
        %v1576 = vshrl.u32 %v1575, 7
        %v1577 = vsub.s32 %v1574, %v1576
        %v1578 = vrot.slane %v1564, %v1577
        %v1579 = vcombine.low %v1546, %v1562
        %v1580 = vcombine.high %v1546, %v1562
        %v1582 = vunpack.c.l.s4 1934713408
        %v1583 = vunpack.c.0.s8 %v1582
        %v1584 = vlaneseq
        %v1585 = vshrl.u32 %v1584, 7
        %v1586 = vsub.s32 %v1583, %v1585
        %v1587 = vrot.slane %v1579, %v1586
        %v1589 = vunpack.c.l.s4 1934713408
        %v1590 = vunpack.c.0.s8 %v1589
        %v1591 = vlaneseq
        %v1592 = vshrl.u32 %v1591, 7
        %v1593 = vsub.s32 %v1590, %v1592
        %v1594 = vrot.slane %v1580, %v1593
        %v1595 = vcombine.high %v1571, 0.0
        %v1596 = vcombine.high %v1578, 0.0
        %v1597 = vcombine.high %v1587, 0.0
        %v1598 = vcombine.high %v1594, 0.0
        %v1599 = vcombine.low %v1571, %v1578
        %v1601 = vunpack.c.l.s4 1983009808
        %v1602 = vunpack.c.0.s8 %v1601
        %v1603 = vlaneseq
        %v1604 = vshrl.u32 %v1603, 7
        %v1605 = vsub.s32 %v1602, %v1604
        %v1606 = vrot.slane %v1599, %v1605
        %v1607 = vcombine.low %v1595, %v1596
        %v1609 = vunpack.c.l.s4 1983009808
        %v1610 = vunpack.c.0.s8 %v1609
        %v1611 = vlaneseq
        %v1612 = vshrl.u32 %v1611, 7
        %v1613 = vsub.s32 %v1610, %v1612
        %v1614 = vrot.slane %v1607, %v1613
        %v1615 = vcombine.low %v1587, %v1594
        %v1617 = vunpack.c.l.s4 1983009808
        %v1618 = vunpack.c.0.s8 %v1617
        %v1619 = vlaneseq
        %v1620 = vshrl.u32 %v1619, 7
        %v1621 = vsub.s32 %v1618, %v1620
        %v1622 = vrot.slane %v1615, %v1621
        %v1623 = vcombine.low %v1597, %v1598
        %v1625 = vunpack.c.l.s4 1983009808
        %v1626 = vunpack.c.0.s8 %v1625
        %v1627 = vlaneseq
        %v1628 = vshrl.u32 %v1627, 7
        %v1629 = vsub.s32 %v1626, %v1628
        %v1630 = vrot.slane %v1623, %v1629
        %v1631 = vcombine.low %v1606, %v1614
        %v1632 = vcombine.high %v1606, %v1614
        %v1634 = vunpack.c.l.s4 1934713408
        %v1635 = vunpack.c.0.s8 %v1634
        %v1636 = vlaneseq
        %v1637 = vshrl.u32 %v1636, 7
        %v1638 = vsub.s32 %v1635, %v1637
        %v1639 = vrot.slane %v1631, %v1638
        %v1641 = vunpack.c.l.s4 1934713408
        %v1642 = vunpack.c.0.s8 %v1641
        %v1643 = vlaneseq
        %v1644 = vshrl.u32 %v1643, 7
        %v1645 = vsub.s32 %v1642, %v1644
        %v1646 = vrot.slane %v1632, %v1645
        %v1647 = vcombine.low %v1622, %v1630
        %v1648 = vcombine.high %v1622, %v1630
        %v1650 = vunpack.c.l.s4 1934713408
        %v1651 = vunpack.c.0.s8 %v1650
        %v1652 = vlaneseq
        %v1653 = vshrl.u32 %v1652, 7
        %v1654 = vsub.s32 %v1651, %v1653
        %v1655 = vrot.slane %v1647, %v1654
        %v1657 = vunpack.c.l.s4 1934713408
        %v1658 = vunpack.c.0.s8 %v1657
        %v1659 = vlaneseq
        %v1660 = vshrl.u32 %v1659, 7
        %v1661 = vsub.s32 %v1658, %v1660
        %v1662 = vrot.slane %v1648, %v1661
        %v1663 = vcombine.low %v1639, %v1655
        %v1664 = vcombine.high %v1639, %v1655
        %v1665 = vcombine.low %v1646, %v1662
        %v1666 = vcombine.high %v1646, %v1662
        %1668 = vrot.lane.b32.xlu0 %v1664, 8
        %v1669 = vpop.permute.xlu0 %1668
        %1672 = vrot.lane.b32.xlu0 %v1665, 16
        %v1673 = vpop.permute.xlu0 %1672
        %1676 = vrot.lane.b32.xlu0 %v1666, 24
        %v1677 = vpop.permute.xlu0 %1676
        %v1679 = vsel %vm622, %v1663, %v1669
        %vm1680 = vcmask 130048
        %v1681 = vsel %vm1680, %v1679, %v1673
        %vm1682 = vcmask 195584
        %v1683 = vsel %vm1682, %v1681, %v1677
        %v1684 = vld [vmem:[#allocation8] sm:$0xff]
        %v1685 = vld [vmem:[#allocation8 + $0x8] sm:$0xff]
        %v1686 = vld [vmem:[#allocation8 + $0x10] sm:$0xff]
        %v1687 = vld [vmem:[#allocation8 + $0x18] sm:$0xff]
        %v1688 = vld [vmem:[%s5] sm:$0x1]
        %v1690 = vlaneseq
        %v1691 = vshrl.u32 %v1690, 7
        %v1692 = vsub.s32 0, %v1691
        %v1693 = vrot.slane %v1688, %v1692
        %v1696 = vsel %vm401, %v1683, 0
        %1698 = vmatprep.subr.mxu0 0.0
        %1699 = vmatpush1.msra.mxu0 %v1684
        %1700 = vmatprep.subr.mxu0 0.0
        %1701 = vmatpush1.msra.mxu0 %v1685
        %1702 = vmatprep.subr.mxu0 0.0
        %1703 = vmatpush1.msra.mxu0 %v1686
        %1704 = vmatprep.subr.mxu0 0.0
        %1705 = vmatpush1.msra.mxu0 %v1687
        %1706 = vmatprep.subr.mxu0 0.0
        %1707 = vmatpush1.msra.mxu0 0.0
        %1708 = vmatprep.subr.mxu0 0.0
        %1709 = vmatpush1.msra.mxu0 0.0
        %1710 = vmatprep.subr.mxu0 0.0
        %1711 = vmatpush1.msra.mxu0 0.0
        %1712 = vmatprep.subr.mxu0 0.0
        %1713 = vmatpush1.msra.mxu0 0.0
        %1714 = vmatprep.subr.mxu0 0.0
        %1715 = vmatpush1.msra.mxu0 0.0
        %1716 = vmatprep.subr.mxu0 0.0
        %1717 = vmatpush1.msra.mxu0 0.0
        %1718 = vmatprep.subr.mxu0 0.0
        %1719 = vmatpush1.msra.mxu0 0.0
        %1720 = vmatprep.subr.mxu0 0.0
        %1721 = vmatpush1.msra.mxu0 0.0
        %1722 = vmatprep.subr.mxu0 0.0
        %1723 = vmatpush1.msra.mxu0 0.0
        %1724 = vmatprep.subr.mxu0 0.0
        %1725 = vmatpush1.msra.mxu0 0.0
        %1726 = vmatprep.subr.mxu0 0.0
        %1727 = vmatpush1.msra.mxu0 0.0
        %1728 = vmatprep.subr.mxu0 0.0
        %1729 = vmatpush1.msra.mxu0 0.0
        %1730 = vmatprep.subr.mxu0 0.0
        %1731 = vmatpush1.msra.mxu0 0.0
        %1732 = vmatprep.subr.mxu0 0.0
        %1733 = vmatpush1.msra.mxu0 0.0
        %1734 = vmatprep.subr.mxu0 0.0
        %1735 = vmatpush1.msra.mxu0 0.0
        %1736 = vmatprep.subr.mxu0 0.0
        %1737 = vmatpush1.msra.mxu0 0.0
        %1738 = vmatprep.subr.mxu0 0.0
        %1739 = vmatpush1.msra.mxu0 0.0
        %1740 = vmatprep.subr.mxu0 0.0
        %1741 = vmatpush1.msra.mxu0 0.0
        %1742 = vmatprep.subr.mxu0 0.0
        %1743 = vmatpush1.msra.mxu0 0.0
        %1744 = vmatprep.subr.mxu0 0.0
        %1745 = vmatpush1.msra.mxu0 0.0
        %1746 = vmatprep.subr.mxu0 0.0
        %1747 = vmatpush1.msra.mxu0 0.0
        %1748 = vmatprep.subr.mxu0 0.0
        %1749 = vmatpush1.msra.mxu0 0.0
        %1750 = vmatprep.subr.mxu0 0.0
        %1751 = vmatpush1.msra.mxu0 0.0
        %1752 = vmatprep.subr.mxu0 0.0
        %1753 = vmatpush1.msra.mxu0 0.0
        %1754 = vmatprep.subr.mxu0 0.0
        %1755 = vmatpush1.msra.mxu0 0.0
        %1756 = vmatprep.subr.mxu0 0.0
        %1757 = vmatpush1.msra.mxu0 0.0
        %1758 = vmatprep.subr.mxu0 0.0
        %1759 = vmatpush1.msra.mxu0 0.0
        %1760 = vmatprep.subr.mxu0 0.0
        %1761 = vmatpush1.msra.mxu0 0.0
        %1762 = vmatprep.mubr.f32.mxu0 0.0
        %1763 = vmatmul.mubr.f32.gmra.mrb[0].mxu0 %v1696
        %v1764 = vpop.f32.mrb[0].mxu0
        %v1765 = vadd.f32 %v1693, %v1764
        %v1766 = vpop.f32.mrb[0].mxu0
        %1767 = vdwg.mxu0
        %v1768 = vadd.f32 %v389, %v1765
        %v1769 = vsel %vm401, %v1768, 0.0
        %1770 = vadd.xlane.f32.xlu0 %v1769
        %v1771 = vpop.xlane.xlu0 %1770
        %v1772 = vrcp.pop 32.0
        %v1773 = vmul.f32 %v1771, %v1772
        %v1774 = vsub.f32 %v1768, %v1773
        %v1775 = vmul.f32 %v1774, %v1774
        %v1776 = vsel %vm401, %v1775, 0.0
        %1777 = vadd.xlane.f32.xlu0 %v1776
        %v1778 = vpop.xlane.xlu0 %1777
        %v1779 = vmul.f32 %v1778, %v1772
        %v1780 = vadd.f32 %v1779, 1e-05
        %v1781 = vrsqrt.pop %v1780
        %v1782 = vmul.f32 %v1774, %v1781
        %v1783 = vld [vmem:[%s6] sm:$0x1]
        %v1785 = vlaneseq
        %v1786 = vshrl.u32 %v1785, 7
        %v1787 = vsub.s32 0, %v1786
        %v1788 = vrot.slane %v1783, %v1787
        %v1790 = vmul.f32 %v1782, %v1788
        %v1791 = vld [vmem:[%s7] sm:$0x1]
        %v1793 = vlaneseq
        %v1794 = vshrl.u32 %v1793, 7
        %v1795 = vsub.s32 0, %v1794
        %v1796 = vrot.slane %v1791, %v1795
        %v1798 = vadd.f32 %v1790, %v1796
        %s1799 = scalar_lea.vmem %s2, 32
        %v1800 = vld [vmem:[%s1799] sm:$0xff]
        %v1801 = vld [vmem:[%s1799 + $0x8] sm:$0xff]
        %v1802 = vld [vmem:[%s1799 + $0x10] sm:$0xff]
        %v1803 = vld [vmem:[%s1799 + $0x18] sm:$0xff]
        %s1804 = scalar_lea.vmem [#allocation5], 1
        %v1805 = vld [vmem:[%s1804] sm:$0x1]
        %v1807 = vlaneseq
        %v1808 = vshrl.u32 %v1807, 7
        %v1809 = vsub.s32 0, %v1808
        %v1810 = vrot.slane %v1805, %v1809
        %v1813 = vsel %vm401, %v1798, 0
        %1815 = vmatprep.subr.mxu0 0.0
        %1816 = vmatpush1.msra.mxu0 %v1800
        %1817 = vmatprep.subr.mxu0 0.0
        %1818 = vmatpush1.msra.mxu0 %v1801
        %1819 = vmatprep.subr.mxu0 0.0
        %1820 = vmatpush1.msra.mxu0 %v1802
        %1821 = vmatprep.subr.mxu0 0.0
        %1822 = vmatpush1.msra.mxu0 %v1803
        %1823 = vmatprep.subr.mxu0 0.0
        %1824 = vmatpush1.msra.mxu0 0.0
        %1825 = vmatprep.subr.mxu0 0.0
        %1826 = vmatpush1.msra.mxu0 0.0
        %1827 = vmatprep.subr.mxu0 0.0
        %1828 = vmatpush1.msra.mxu0 0.0
        %1829 = vmatprep.subr.mxu0 0.0
        %1830 = vmatpush1.msra.mxu0 0.0
        %1831 = vmatprep.subr.mxu0 0.0
        %1832 = vmatpush1.msra.mxu0 0.0
        %1833 = vmatprep.subr.mxu0 0.0
        %1834 = vmatpush1.msra.mxu0 0.0
        %1835 = vmatprep.subr.mxu0 0.0
        %1836 = vmatpush1.msra.mxu0 0.0
        %1837 = vmatprep.subr.mxu0 0.0
        %1838 = vmatpush1.msra.mxu0 0.0
        %1839 = vmatprep.subr.mxu0 0.0
        %1840 = vmatpush1.msra.mxu0 0.0
        %1841 = vmatprep.subr.mxu0 0.0
        %1842 = vmatpush1.msra.mxu0 0.0
        %1843 = vmatprep.subr.mxu0 0.0
        %1844 = vmatpush1.msra.mxu0 0.0
        %1845 = vmatprep.subr.mxu0 0.0
        %1846 = vmatpush1.msra.mxu0 0.0
        %1847 = vmatprep.subr.mxu0 0.0
        %1848 = vmatpush1.msra.mxu0 0.0
        %1849 = vmatprep.subr.mxu0 0.0
        %1850 = vmatpush1.msra.mxu0 0.0
        %1851 = vmatprep.subr.mxu0 0.0
        %1852 = vmatpush1.msra.mxu0 0.0
        %1853 = vmatprep.subr.mxu0 0.0
        %1854 = vmatpush1.msra.mxu0 0.0
        %1855 = vmatprep.subr.mxu0 0.0
        %1856 = vmatpush1.msra.mxu0 0.0
        %1857 = vmatprep.subr.mxu0 0.0
        %1858 = vmatpush1.msra.mxu0 0.0
        %1859 = vmatprep.subr.mxu0 0.0
        %1860 = vmatpush1.msra.mxu0 0.0
        %1861 = vmatprep.subr.mxu0 0.0
        %1862 = vmatpush1.msra.mxu0 0.0
        %1863 = vmatprep.subr.mxu0 0.0
        %1864 = vmatpush1.msra.mxu0 0.0
        %1865 = vmatprep.subr.mxu0 0.0
        %1866 = vmatpush1.msra.mxu0 0.0
        %1867 = vmatprep.subr.mxu0 0.0
        %1868 = vmatpush1.msra.mxu0 0.0
        %1869 = vmatprep.subr.mxu0 0.0
        %1870 = vmatpush1.msra.mxu0 0.0
        %1871 = vmatprep.subr.mxu0 0.0
        %1872 = vmatpush1.msra.mxu0 0.0
        %1873 = vmatprep.subr.mxu0 0.0
        %1874 = vmatpush1.msra.mxu0 0.0
        %1875 = vmatprep.subr.mxu0 0.0
        %1876 = vmatpush1.msra.mxu0 0.0
        %1877 = vmatprep.subr.mxu0 0.0
        %1878 = vmatpush1.msra.mxu0 0.0
        %1879 = vmatprep.mubr.f32.mxu0 0.0
        %1880 = vmatmul.mubr.f32.gmra.mrb[0].mxu0 %v1813
        %v1881 = vpop.f32.mrb[0].mxu0
        %v1882 = vadd.f32 %v1810, %v1881
        %v1883 = vpop.f32.mrb[0].mxu0
        %1884 = vdwg.mxu0
        %1886 = vrot.lane.b32.xlu0 %v1882, 120
        %v1887 = vpop.permute.xlu0 %1886
        %1888 = vrot.lane.b32.xlu0 %v1882, 112
        %v1889 = vpop.permute.xlu0 %1888
        %1890 = vrot.lane.b32.xlu0 %v1882, 104
        %v1891 = vpop.permute.xlu0 %1890
        %1892 = vrot.lane.b32.xlu0 %v1882, 96
        %v1893 = vpop.permute.xlu0 %1892
        %1894 = vrot.lane.b32.xlu0 %v1887, 96
        %v1895 = vpop.permute.xlu0 %1894
        %1896 = vrot.lane.b32.xlu0 %v1889, 96
        %v1897 = vpop.permute.xlu0 %1896
        %1898 = vrot.lane.b32.xlu0 %v1891, 96
        %v1899 = vpop.permute.xlu0 %1898
        %1904 = vxpose.xlu0.b32.start [1/16] %v1893, 128
        %1905 = vxpose.xlu0.b32.cont [2/16] 0.0, 128
        %1906 = vxpose.xlu0.b32.cont [3/16] 0.0, 128
        %1907 = vxpose.xlu0.b32.cont [4/16] 0.0, 128
        %1908 = vxpose.xlu0.b32.cont [5/16] 0.0, 128
        %1909 = vxpose.xlu0.b32.cont [6/16] 0.0, 128
        %1910 = vxpose.xlu0.b32.cont [7/16] 0.0, 128
        %1911 = vxpose.xlu0.b32.cont [8/16] 0.0, 128
        %1912 = vxpose.xlu0.b32.cont [9/16] 0.0, 128
        %1913 = vxpose.xlu0.b32.cont [10/16] 0.0, 128
        %1914 = vxpose.xlu0.b32.cont [11/16] 0.0, 128
        %1915 = vxpose.xlu0.b32.cont [12/16] 0.0, 128
        %1916 = vxpose.xlu0.b32.cont [13/16] 0.0, 128
        %1917 = vxpose.xlu0.b32.cont [14/16] 0.0, 128
        %1918 = vxpose.xlu0.b32.cont [15/16] 0.0, 128
        %1919 = vxpose.xlu0.b32.end [16/16] 0.0, 128
        %v1920 = vpop.trf.xlu0
        %v1921 = vpop.trf.xlu0
        %v1922 = vpop.trf.xlu0
        %v1923 = vpop.trf.xlu0
        %v1924 = vpop.trf.xlu0
        %v1925 = vpop.trf.xlu0
        %v1926 = vpop.trf.xlu0
        %v1927 = vpop.trf.xlu0
        %v1928 = vpop.trf.xlu0
        %v1929 = vpop.trf.xlu0
        %v1930 = vpop.trf.xlu0
        %v1931 = vpop.trf.xlu0
        %v1932 = vpop.trf.xlu0
        %v1933 = vpop.trf.xlu0
        %v1934 = vpop.trf.xlu0
        %v1935 = vpop.trf.xlu0
        %1936 = vxpose.xlu0.b32.start [1/16] %v1895, 128
        %1937 = vxpose.xlu0.b32.cont [2/16] 0.0, 128
        %1938 = vxpose.xlu0.b32.cont [3/16] 0.0, 128
        %1939 = vxpose.xlu0.b32.cont [4/16] 0.0, 128
        %1940 = vxpose.xlu0.b32.cont [5/16] 0.0, 128
        %1941 = vxpose.xlu0.b32.cont [6/16] 0.0, 128
        %1942 = vxpose.xlu0.b32.cont [7/16] 0.0, 128
        %1943 = vxpose.xlu0.b32.cont [8/16] 0.0, 128
        %1944 = vxpose.xlu0.b32.cont [9/16] 0.0, 128
        %1945 = vxpose.xlu0.b32.cont [10/16] 0.0, 128
        %1946 = vxpose.xlu0.b32.cont [11/16] 0.0, 128
        %1947 = vxpose.xlu0.b32.cont [12/16] 0.0, 128
        %1948 = vxpose.xlu0.b32.cont [13/16] 0.0, 128
        %1949 = vxpose.xlu0.b32.cont [14/16] 0.0, 128
        %1950 = vxpose.xlu0.b32.cont [15/16] 0.0, 128
        %1951 = vxpose.xlu0.b32.end [16/16] 0.0, 128
        %v1952 = vpop.trf.xlu0
        %v1953 = vpop.trf.xlu0
        %v1954 = vpop.trf.xlu0
        %v1955 = vpop.trf.xlu0
        %v1956 = vpop.trf.xlu0
        %v1957 = vpop.trf.xlu0
        %v1958 = vpop.trf.xlu0
        %v1959 = vpop.trf.xlu0
        %v1960 = vpop.trf.xlu0
        %v1961 = vpop.trf.xlu0
        %v1962 = vpop.trf.xlu0
        %v1963 = vpop.trf.xlu0
        %v1964 = vpop.trf.xlu0
        %v1965 = vpop.trf.xlu0
        %v1966 = vpop.trf.xlu0
        %v1967 = vpop.trf.xlu0
        %1968 = vxpose.xlu0.b32.start [1/16] %v1897, 128
        %1969 = vxpose.xlu0.b32.cont [2/16] 0.0, 128
        %1970 = vxpose.xlu0.b32.cont [3/16] 0.0, 128
        %1971 = vxpose.xlu0.b32.cont [4/16] 0.0, 128
        %1972 = vxpose.xlu0.b32.cont [5/16] 0.0, 128
        %1973 = vxpose.xlu0.b32.cont [6/16] 0.0, 128
        %1974 = vxpose.xlu0.b32.cont [7/16] 0.0, 128
        %1975 = vxpose.xlu0.b32.cont [8/16] 0.0, 128
        %1976 = vxpose.xlu0.b32.cont [9/16] 0.0, 128
        %1977 = vxpose.xlu0.b32.cont [10/16] 0.0, 128
        %1978 = vxpose.xlu0.b32.cont [11/16] 0.0, 128
        %1979 = vxpose.xlu0.b32.cont [12/16] 0.0, 128
        %1980 = vxpose.xlu0.b32.cont [13/16] 0.0, 128
        %1981 = vxpose.xlu0.b32.cont [14/16] 0.0, 128
        %1982 = vxpose.xlu0.b32.cont [15/16] 0.0, 128
        %1983 = vxpose.xlu0.b32.end [16/16] 0.0, 128
        %v1984 = vpop.trf.xlu0
        %v1985 = vpop.trf.xlu0
        %v1986 = vpop.trf.xlu0
        %v1987 = vpop.trf.xlu0
        %v1988 = vpop.trf.xlu0
        %v1989 = vpop.trf.xlu0
        %v1990 = vpop.trf.xlu0
        %v1991 = vpop.trf.xlu0
        %v1992 = vpop.trf.xlu0
        %v1993 = vpop.trf.xlu0
        %v1994 = vpop.trf.xlu0
        %v1995 = vpop.trf.xlu0
        %v1996 = vpop.trf.xlu0
        %v1997 = vpop.trf.xlu0
        %v1998 = vpop.trf.xlu0
        %v1999 = vpop.trf.xlu0
        %2000 = vxpose.xlu0.b32.start [1/16] %v1899, 128
        %2001 = vxpose.xlu0.b32.cont [2/16] 0.0, 128
        %2002 = vxpose.xlu0.b32.cont [3/16] 0.0, 128
        %2003 = vxpose.xlu0.b32.cont [4/16] 0.0, 128
        %2004 = vxpose.xlu0.b32.cont [5/16] 0.0, 128
        %2005 = vxpose.xlu0.b32.cont [6/16] 0.0, 128
        %2006 = vxpose.xlu0.b32.cont [7/16] 0.0, 128
        %2007 = vxpose.xlu0.b32.cont [8/16] 0.0, 128
        %2008 = vxpose.xlu0.b32.cont [9/16] 0.0, 128
        %2009 = vxpose.xlu0.b32.cont [10/16] 0.0, 128
        %2010 = vxpose.xlu0.b32.cont [11/16] 0.0, 128
        %2011 = vxpose.xlu0.b32.cont [12/16] 0.0, 128
        %2012 = vxpose.xlu0.b32.cont [13/16] 0.0, 128
        %2013 = vxpose.xlu0.b32.cont [14/16] 0.0, 128
        %2014 = vxpose.xlu0.b32.cont [15/16] 0.0, 128
        %2015 = vxpose.xlu0.b32.end [16/16] 0.0, 128
        %v2016 = vpop.trf.xlu0
        %v2017 = vpop.trf.xlu0
        %v2018 = vpop.trf.xlu0
        %v2019 = vpop.trf.xlu0
        %v2020 = vpop.trf.xlu0
        %v2021 = vpop.trf.xlu0
        %v2022 = vpop.trf.xlu0
        %v2023 = vpop.trf.xlu0
        %v2024 = vpop.trf.xlu0
        %v2025 = vpop.trf.xlu0
        %v2026 = vpop.trf.xlu0
        %v2027 = vpop.trf.xlu0
        %v2028 = vpop.trf.xlu0
        %v2029 = vpop.trf.xlu0
        %v2030 = vpop.trf.xlu0
        %v2031 = vpop.trf.xlu0
        %v2032 = vsel %vm622, %v1882, 0
        %2034 = vmatprep.subr.mxu0 0.0
        %2035 = vmatpush1.msra.mxu0 %v1920
        %2036 = vmatprep.subr.mxu0 0.0
        %2037 = vmatpush1.msra.mxu0 0.0
        %2038 = vmatprep.subr.mxu0 0.0
        %2039 = vmatpush1.msra.mxu0 0.0
        %2040 = vmatprep.subr.mxu0 0.0
        %2041 = vmatpush1.msra.mxu0 0.0
        %2042 = vmatprep.subr.mxu0 0.0
        %2043 = vmatpush1.msra.mxu0 0.0
        %2044 = vmatprep.subr.mxu0 0.0
        %2045 = vmatpush1.msra.mxu0 0.0
        %2046 = vmatprep.subr.mxu0 0.0
        %2047 = vmatpush1.msra.mxu0 0.0
        %2048 = vmatprep.subr.mxu0 0.0
        %2049 = vmatpush1.msra.mxu0 0.0
        %2050 = vmatprep.subr.mxu0 0.0
        %2051 = vmatpush1.msra.mxu0 0.0
        %2052 = vmatprep.subr.mxu0 0.0
        %2053 = vmatpush1.msra.mxu0 0.0
        %2054 = vmatprep.subr.mxu0 0.0
        %2055 = vmatpush1.msra.mxu0 0.0
        %2056 = vmatprep.subr.mxu0 0.0
        %2057 = vmatpush1.msra.mxu0 0.0
        %2058 = vmatprep.subr.mxu0 0.0
        %2059 = vmatpush1.msra.mxu0 0.0
        %2060 = vmatprep.subr.mxu0 0.0
        %2061 = vmatpush1.msra.mxu0 0.0
        %2062 = vmatprep.subr.mxu0 0.0
        %2063 = vmatpush1.msra.mxu0 0.0
        %2064 = vmatprep.subr.mxu0 0.0
        %2065 = vmatpush1.msra.mxu0 0.0
        %2066 = vmatprep.subr.mxu0 0.0
        %2067 = vmatpush1.msra.mxu0 0.0
        %2068 = vmatprep.subr.mxu0 0.0
        %2069 = vmatpush1.msra.mxu0 0.0
        %2070 = vmatprep.subr.mxu0 0.0
        %2071 = vmatpush1.msra.mxu0 0.0
        %2072 = vmatprep.subr.mxu0 0.0
        %2073 = vmatpush1.msra.mxu0 0.0
        %2074 = vmatprep.subr.mxu0 0.0
        %2075 = vmatpush1.msra.mxu0 0.0
        %2076 = vmatprep.subr.mxu0 0.0
        %2077 = vmatpush1.msra.mxu0 0.0
        %2078 = vmatprep.subr.mxu0 0.0
        %2079 = vmatpush1.msra.mxu0 0.0
        %2080 = vmatprep.subr.mxu0 0.0
        %2081 = vmatpush1.msra.mxu0 0.0
        %2082 = vmatprep.subr.mxu0 0.0
        %2083 = vmatpush1.msra.mxu0 0.0
        %2084 = vmatprep.subr.mxu0 0.0
        %2085 = vmatpush1.msra.mxu0 0.0
        %2086 = vmatprep.subr.mxu0 0.0
        %2087 = vmatpush1.msra.mxu0 0.0
        %2088 = vmatprep.subr.mxu0 0.0
        %2089 = vmatpush1.msra.mxu0 0.0
        %2090 = vmatprep.subr.mxu0 0.0
        %2091 = vmatpush1.msra.mxu0 0.0
        %2092 = vmatprep.subr.mxu0 0.0
        %2093 = vmatpush1.msra.mxu0 0.0
        %2094 = vmatprep.subr.mxu0 0.0
        %2095 = vmatpush1.msra.mxu0 0.0
        %2096 = vmatprep.subr.mxu0 0.0
        %2097 = vmatpush1.msra.mxu0 0.0
        %2098 = vmatprep.mubr.f32.mxu0 0.0
        %2099 = vmatmul.mubr.f32.gmra.mrb[0].mxu0 %v2032
        %v2100 = vpop.f32.mrb[0].mxu0
        %v2101 = vadd.f32 0.0, %v2100
        %v2102 = vpop.f32.mrb[0].mxu0
        %2103 = vdwg.mxu0
        %v2104 = vsel %vm622, %v1887, 0
        %2106 = vmatprep.subr.mxu0 0.0
        %2107 = vmatpush1.msra.mxu0 %v1952
        %2108 = vmatprep.subr.mxu0 0.0
        %2109 = vmatpush1.msra.mxu0 0.0
        %2110 = vmatprep.subr.mxu0 0.0
        %2111 = vmatpush1.msra.mxu0 0.0
        %2112 = vmatprep.subr.mxu0 0.0
        %2113 = vmatpush1.msra.mxu0 0.0
        %2114 = vmatprep.subr.mxu0 0.0
        %2115 = vmatpush1.msra.mxu0 0.0
        %2116 = vmatprep.subr.mxu0 0.0
        %2117 = vmatpush1.msra.mxu0 0.0
        %2118 = vmatprep.subr.mxu0 0.0
        %2119 = vmatpush1.msra.mxu0 0.0
        %2120 = vmatprep.subr.mxu0 0.0
        %2121 = vmatpush1.msra.mxu0 0.0
        %2122 = vmatprep.subr.mxu0 0.0
        %2123 = vmatpush1.msra.mxu0 0.0
        %2124 = vmatprep.subr.mxu0 0.0
        %2125 = vmatpush1.msra.mxu0 0.0
        %2126 = vmatprep.subr.mxu0 0.0
        %2127 = vmatpush1.msra.mxu0 0.0
        %2128 = vmatprep.subr.mxu0 0.0
        %2129 = vmatpush1.msra.mxu0 0.0
        %2130 = vmatprep.subr.mxu0 0.0
        %2131 = vmatpush1.msra.mxu0 0.0
        %2132 = vmatprep.subr.mxu0 0.0
        %2133 = vmatpush1.msra.mxu0 0.0
        %2134 = vmatprep.subr.mxu0 0.0
        %2135 = vmatpush1.msra.mxu0 0.0
        %2136 = vmatprep.subr.mxu0 0.0
        %2137 = vmatpush1.msra.mxu0 0.0
        %2138 = vmatprep.subr.mxu0 0.0
        %2139 = vmatpush1.msra.mxu0 0.0
        %2140 = vmatprep.subr.mxu0 0.0
        %2141 = vmatpush1.msra.mxu0 0.0
        %2142 = vmatprep.subr.mxu0 0.0
        %2143 = vmatpush1.msra.mxu0 0.0
        %2144 = vmatprep.subr.mxu0 0.0
        %2145 = vmatpush1.msra.mxu0 0.0
        %2146 = vmatprep.subr.mxu0 0.0
        %2147 = vmatpush1.msra.mxu0 0.0
        %2148 = vmatprep.subr.mxu0 0.0
        %2149 = vmatpush1.msra.mxu0 0.0
        %2150 = vmatprep.subr.mxu0 0.0
        %2151 = vmatpush1.msra.mxu0 0.0
        %2152 = vmatprep.subr.mxu0 0.0
        %2153 = vmatpush1.msra.mxu0 0.0
        %2154 = vmatprep.subr.mxu0 0.0
        %2155 = vmatpush1.msra.mxu0 0.0
        %2156 = vmatprep.subr.mxu0 0.0
        %2157 = vmatpush1.msra.mxu0 0.0
        %2158 = vmatprep.subr.mxu0 0.0
        %2159 = vmatpush1.msra.mxu0 0.0
        %2160 = vmatprep.subr.mxu0 0.0
        %2161 = vmatpush1.msra.mxu0 0.0
        %2162 = vmatprep.subr.mxu0 0.0
        %2163 = vmatpush1.msra.mxu0 0.0
        %2164 = vmatprep.subr.mxu0 0.0
        %2165 = vmatpush1.msra.mxu0 0.0
        %2166 = vmatprep.subr.mxu0 0.0
        %2167 = vmatpush1.msra.mxu0 0.0
        %2168 = vmatprep.subr.mxu0 0.0
        %2169 = vmatpush1.msra.mxu0 0.0
        %2170 = vmatprep.mubr.f32.mxu0 0.0
        %2171 = vmatmul.mubr.f32.gmra.mrb[0].mxu0 %v2104
        %v2172 = vpop.f32.mrb[0].mxu0
        %v2173 = vadd.f32 0.0, %v2172
        %v2174 = vpop.f32.mrb[0].mxu0
        %2175 = vdwg.mxu0
        %v2176 = vsel %vm622, %v1889, 0
        %2178 = vmatprep.subr.mxu0 0.0
        %2179 = vmatpush1.msra.mxu0 %v1984
        %2180 = vmatprep.subr.mxu0 0.0
        %2181 = vmatpush1.msra.mxu0 0.0
        %2182 = vmatprep.subr.mxu0 0.0
        %2183 = vmatpush1.msra.mxu0 0.0
        %2184 = vmatprep.subr.mxu0 0.0
        %2185 = vmatpush1.msra.mxu0 0.0
        %2186 = vmatprep.subr.mxu0 0.0
        %2187 = vmatpush1.msra.mxu0 0.0
        %2188 = vmatprep.subr.mxu0 0.0
        %2189 = vmatpush1.msra.mxu0 0.0
        %2190 = vmatprep.subr.mxu0 0.0
        %2191 = vmatpush1.msra.mxu0 0.0
        %2192 = vmatprep.subr.mxu0 0.0
        %2193 = vmatpush1.msra.mxu0 0.0
        %2194 = vmatprep.subr.mxu0 0.0
        %2195 = vmatpush1.msra.mxu0 0.0
        %2196 = vmatprep.subr.mxu0 0.0
        %2197 = vmatpush1.msra.mxu0 0.0
        %2198 = vmatprep.subr.mxu0 0.0
        %2199 = vmatpush1.msra.mxu0 0.0
        %2200 = vmatprep.subr.mxu0 0.0
        %2201 = vmatpush1.msra.mxu0 0.0
        %2202 = vmatprep.subr.mxu0 0.0
        %2203 = vmatpush1.msra.mxu0 0.0
        %2204 = vmatprep.subr.mxu0 0.0
        %2205 = vmatpush1.msra.mxu0 0.0
        %2206 = vmatprep.subr.mxu0 0.0
        %2207 = vmatpush1.msra.mxu0 0.0
        %2208 = vmatprep.subr.mxu0 0.0
        %2209 = vmatpush1.msra.mxu0 0.0
        %2210 = vmatprep.subr.mxu0 0.0
        %2211 = vmatpush1.msra.mxu0 0.0
        %2212 = vmatprep.subr.mxu0 0.0
        %2213 = vmatpush1.msra.mxu0 0.0
        %2214 = vmatprep.subr.mxu0 0.0
        %2215 = vmatpush1.msra.mxu0 0.0
        %2216 = vmatprep.subr.mxu0 0.0
        %2217 = vmatpush1.msra.mxu0 0.0
        %2218 = vmatprep.subr.mxu0 0.0
        %2219 = vmatpush1.msra.mxu0 0.0
        %2220 = vmatprep.subr.mxu0 0.0
        %2221 = vmatpush1.msra.mxu0 0.0
        %2222 = vmatprep.subr.mxu0 0.0
        %2223 = vmatpush1.msra.mxu0 0.0
        %2224 = vmatprep.subr.mxu0 0.0
        %2225 = vmatpush1.msra.mxu0 0.0
        %2226 = vmatprep.subr.mxu0 0.0
        %2227 = vmatpush1.msra.mxu0 0.0
        %2228 = vmatprep.subr.mxu0 0.0
        %2229 = vmatpush1.msra.mxu0 0.0
        %2230 = vmatprep.subr.mxu0 0.0
        %2231 = vmatpush1.msra.mxu0 0.0
        %2232 = vmatprep.subr.mxu0 0.0
        %2233 = vmatpush1.msra.mxu0 0.0
        %2234 = vmatprep.subr.mxu0 0.0
        %2235 = vmatpush1.msra.mxu0 0.0
        %2236 = vmatprep.subr.mxu0 0.0
        %2237 = vmatpush1.msra.mxu0 0.0
        %2238 = vmatprep.subr.mxu0 0.0
        %2239 = vmatpush1.msra.mxu0 0.0
        %2240 = vmatprep.subr.mxu0 0.0
        %2241 = vmatpush1.msra.mxu0 0.0
        %2242 = vmatprep.mubr.f32.mxu0 0.0
        %2243 = vmatmul.mubr.f32.gmra.mrb[0].mxu0 %v2176
        %v2244 = vpop.f32.mrb[0].mxu0
        %v2245 = vadd.f32 0.0, %v2244
        %v2246 = vpop.f32.mrb[0].mxu0
        %2247 = vdwg.mxu0
        %v2248 = vsel %vm622, %v1891, 0
        %2250 = vmatprep.subr.mxu0 0.0
        %2251 = vmatpush1.msra.mxu0 %v2016
        %2252 = vmatprep.subr.mxu0 0.0
        %2253 = vmatpush1.msra.mxu0 0.0
        %2254 = vmatprep.subr.mxu0 0.0
        %2255 = vmatpush1.msra.mxu0 0.0
        %2256 = vmatprep.subr.mxu0 0.0
        %2257 = vmatpush1.msra.mxu0 0.0
        %2258 = vmatprep.subr.mxu0 0.0
        %2259 = vmatpush1.msra.mxu0 0.0
        %2260 = vmatprep.subr.mxu0 0.0
        %2261 = vmatpush1.msra.mxu0 0.0
        %2262 = vmatprep.subr.mxu0 0.0
        %2263 = vmatpush1.msra.mxu0 0.0
        %2264 = vmatprep.subr.mxu0 0.0
        %2265 = vmatpush1.msra.mxu0 0.0
        %2266 = vmatprep.subr.mxu0 0.0
        %2267 = vmatpush1.msra.mxu0 0.0
        %2268 = vmatprep.subr.mxu0 0.0
        %2269 = vmatpush1.msra.mxu0 0.0
        %2270 = vmatprep.subr.mxu0 0.0
        %2271 = vmatpush1.msra.mxu0 0.0
        %2272 = vmatprep.subr.mxu0 0.0
        %2273 = vmatpush1.msra.mxu0 0.0
        %2274 = vmatprep.subr.mxu0 0.0
        %2275 = vmatpush1.msra.mxu0 0.0
        %2276 = vmatprep.subr.mxu0 0.0
        %2277 = vmatpush1.msra.mxu0 0.0
        %2278 = vmatprep.subr.mxu0 0.0
        %2279 = vmatpush1.msra.mxu0 0.0
        %2280 = vmatprep.subr.mxu0 0.0
        %2281 = vmatpush1.msra.mxu0 0.0
        %2282 = vmatprep.subr.mxu0 0.0
        %2283 = vmatpush1.msra.mxu0 0.0
        %2284 = vmatprep.subr.mxu0 0.0
        %2285 = vmatpush1.msra.mxu0 0.0
        %2286 = vmatprep.subr.mxu0 0.0
        %2287 = vmatpush1.msra.mxu0 0.0
        %2288 = vmatprep.subr.mxu0 0.0
        %2289 = vmatpush1.msra.mxu0 0.0
        %2290 = vmatprep.subr.mxu0 0.0
        %2291 = vmatpush1.msra.mxu0 0.0
        %2292 = vmatprep.subr.mxu0 0.0
        %2293 = vmatpush1.msra.mxu0 0.0
        %2294 = vmatprep.subr.mxu0 0.0
        %2295 = vmatpush1.msra.mxu0 0.0
        %2296 = vmatprep.subr.mxu0 0.0
        %2297 = vmatpush1.msra.mxu0 0.0
        %2298 = vmatprep.subr.mxu0 0.0
        %2299 = vmatpush1.msra.mxu0 0.0
        %2300 = vmatprep.subr.mxu0 0.0
        %2301 = vmatpush1.msra.mxu0 0.0
        %2302 = vmatprep.subr.mxu0 0.0
        %2303 = vmatpush1.msra.mxu0 0.0
        %2304 = vmatprep.subr.mxu0 0.0
        %2305 = vmatpush1.msra.mxu0 0.0
        %2306 = vmatprep.subr.mxu0 0.0
        %2307 = vmatpush1.msra.mxu0 0.0
        %2308 = vmatprep.subr.mxu0 0.0
        %2309 = vmatpush1.msra.mxu0 0.0
        %2310 = vmatprep.subr.mxu0 0.0
        %2311 = vmatpush1.msra.mxu0 0.0
        %2312 = vmatprep.subr.mxu0 0.0
        %2313 = vmatpush1.msra.mxu0 0.0
        %2314 = vmatprep.mubr.f32.mxu0 0.0
        %2315 = vmatmul.mubr.f32.gmra.mrb[0].mxu0 %v2248
        %v2316 = vpop.f32.mrb[0].mxu0
        %v2317 = vadd.f32 0.0, %v2316
        %v2318 = vpop.f32.mrb[0].mxu0
        %2319 = vdwg.mxu0
        %v2320 = vmul.f32 %v2101, 0.35355338
        %v2321 = vmul.f32 %v2173, 0.35355338
        %v2322 = vmul.f32 %v2245, 0.35355338
        %v2323 = vmul.f32 %v2317, 0.35355338
        %v2324 = vsel %vm622, %v2320, -inf
        %2325 = vmax.xlane.f32.xlu0 %v2324
        %v2326 = vpop.xlane.xlu0 %2325
        %v2327 = vsel %vm622, %v2321, -inf
        %2328 = vmax.xlane.f32.xlu0 %v2327
        %v2329 = vpop.xlane.xlu0 %2328
        %v2330 = vsel %vm622, %v2322, -inf
        %2331 = vmax.xlane.f32.xlu0 %v2330
        %v2332 = vpop.xlane.xlu0 %2331
        %v2333 = vsel %vm622, %v2323, -inf
        %2334 = vmax.xlane.f32.xlu0 %v2333
        %v2335 = vpop.xlane.xlu0 %2334
        %v2336 = vsub.f32 %v2320, %v2326
        %v2337 = vsub.f32 %v2321, %v2329
        %v2338 = vsub.f32 %v2322, %v2332
        %v2339 = vsub.f32 %v2323, %v2335
        %v2340 = vmul.f32 %v2336, 1.442695
        %v2341 = vpow.pop %v2340
        %v2342 = vmul.f32 %v2337, 1.442695
        %v2343 = vpow.pop %v2342
        %v2344 = vmul.f32 %v2338, 1.442695
        %v2345 = vpow.pop %v2344
        %v2346 = vmul.f32 %v2339, 1.442695
        %v2347 = vpow.pop %v2346
        %v2348 = vsel %vm622, %v2341, 0.0
        %2349 = vadd.xlane.f32.xlu0 %v2348
        %v2350 = vpop.xlane.xlu0 %2349
        %v2351 = vsel %vm622, %v2343, 0.0
        %2352 = vadd.xlane.f32.xlu0 %v2351
        %v2353 = vpop.xlane.xlu0 %2352
        %v2354 = vsel %vm622, %v2345, 0.0
        %2355 = vadd.xlane.f32.xlu0 %v2354
        %v2356 = vpop.xlane.xlu0 %2355
        %v2357 = vsel %vm622, %v2347, 0.0
        %2358 = vadd.xlane.f32.xlu0 %v2357
        %v2359 = vpop.xlane.xlu0 %2358
        %v2360 = vrcp.pop %v2350
        %v2361 = vmul.f32 %v2341, %v2360
        %v2362 = vrcp.pop %v2353
        %v2363 = vmul.f32 %v2343, %v2362
        %v2364 = vrcp.pop %v2356
        %v2365 = vmul.f32 %v2345, %v2364
        %v2366 = vrcp.pop %v2359
        %v2367 = vmul.f32 %v2347, %v2366
        %2368 = vrot.lane.b32.xlu0 %v1882, 64
        %v2369 = vpop.permute.xlu0 %2368
        %2370 = vrot.lane.b32.xlu0 %v1887, 64
        %v2371 = vpop.permute.xlu0 %2370
        %2372 = vrot.lane.b32.xlu0 %v1889, 64
        %v2373 = vpop.permute.xlu0 %2372
        %2374 = vrot.lane.b32.xlu0 %v1891, 64
        %v2375 = vpop.permute.xlu0 %2374
        %2380 = vxpose.xlu0.b32.start [1/16] %v2369, 128
        %2381 = vxpose.xlu0.b32.cont [2/16] 0.0, 128
        %2382 = vxpose.xlu0.b32.cont [3/16] 0.0, 128
        %2383 = vxpose.xlu0.b32.cont [4/16] 0.0, 128
        %2384 = vxpose.xlu0.b32.cont [5/16] 0.0, 128
        %2385 = vxpose.xlu0.b32.cont [6/16] 0.0, 128
        %2386 = vxpose.xlu0.b32.cont [7/16] 0.0, 128
        %2387 = vxpose.xlu0.b32.cont [8/16] 0.0, 128
        %2388 = vxpose.xlu0.b32.cont [9/16] 0.0, 128
        %2389 = vxpose.xlu0.b32.cont [10/16] 0.0, 128
        %2390 = vxpose.xlu0.b32.cont [11/16] 0.0, 128
        %2391 = vxpose.xlu0.b32.cont [12/16] 0.0, 128
        %2392 = vxpose.xlu0.b32.cont [13/16] 0.0, 128
        %2393 = vxpose.xlu0.b32.cont [14/16] 0.0, 128
        %2394 = vxpose.xlu0.b32.cont [15/16] 0.0, 128
        %2395 = vxpose.xlu0.b32.end [16/16] 0.0, 128
        %v2396 = vpop.trf.xlu0
        %v2397 = vpop.trf.xlu0
        %v2398 = vpop.trf.xlu0
        %v2399 = vpop.trf.xlu0
        %v2400 = vpop.trf.xlu0
        %v2401 = vpop.trf.xlu0
        %v2402 = vpop.trf.xlu0
        %v2403 = vpop.trf.xlu0
        %v2404 = vpop.trf.xlu0
        %v2405 = vpop.trf.xlu0
        %v2406 = vpop.trf.xlu0
        %v2407 = vpop.trf.xlu0
        %v2408 = vpop.trf.xlu0
        %v2409 = vpop.trf.xlu0
        %v2410 = vpop.trf.xlu0
        %v2411 = vpop.trf.xlu0
        %2412 = vxpose.xlu0.b32.start [1/16] %v2371, 128
        %2413 = vxpose.xlu0.b32.cont [2/16] 0.0, 128
        %2414 = vxpose.xlu0.b32.cont [3/16] 0.0, 128
        %2415 = vxpose.xlu0.b32.cont [4/16] 0.0, 128
        %2416 = vxpose.xlu0.b32.cont [5/16] 0.0, 128
        %2417 = vxpose.xlu0.b32.cont [6/16] 0.0, 128
        %2418 = vxpose.xlu0.b32.cont [7/16] 0.0, 128
        %2419 = vxpose.xlu0.b32.cont [8/16] 0.0, 128
        %2420 = vxpose.xlu0.b32.cont [9/16] 0.0, 128
        %2421 = vxpose.xlu0.b32.cont [10/16] 0.0, 128
        %2422 = vxpose.xlu0.b32.cont [11/16] 0.0, 128
        %2423 = vxpose.xlu0.b32.cont [12/16] 0.0, 128
        %2424 = vxpose.xlu0.b32.cont [13/16] 0.0, 128
        %2425 = vxpose.xlu0.b32.cont [14/16] 0.0, 128
        %2426 = vxpose.xlu0.b32.cont [15/16] 0.0, 128
        %2427 = vxpose.xlu0.b32.end [16/16] 0.0, 128
        %v2428 = vpop.trf.xlu0
        %v2429 = vpop.trf.xlu0
        %v2430 = vpop.trf.xlu0
        %v2431 = vpop.trf.xlu0
        %v2432 = vpop.trf.xlu0
        %v2433 = vpop.trf.xlu0
        %v2434 = vpop.trf.xlu0
        %v2435 = vpop.trf.xlu0
        %v2436 = vpop.trf.xlu0
        %v2437 = vpop.trf.xlu0
        %v2438 = vpop.trf.xlu0
        %v2439 = vpop.trf.xlu0
        %v2440 = vpop.trf.xlu0
        %v2441 = vpop.trf.xlu0
        %v2442 = vpop.trf.xlu0
        %v2443 = vpop.trf.xlu0
        %2444 = vxpose.xlu0.b32.start [1/16] %v2373, 128
        %2445 = vxpose.xlu0.b32.cont [2/16] 0.0, 128
        %2446 = vxpose.xlu0.b32.cont [3/16] 0.0, 128
        %2447 = vxpose.xlu0.b32.cont [4/16] 0.0, 128
        %2448 = vxpose.xlu0.b32.cont [5/16] 0.0, 128
        %2449 = vxpose.xlu0.b32.cont [6/16] 0.0, 128
        %2450 = vxpose.xlu0.b32.cont [7/16] 0.0, 128
        %2451 = vxpose.xlu0.b32.cont [8/16] 0.0, 128
        %2452 = vxpose.xlu0.b32.cont [9/16] 0.0, 128
        %2453 = vxpose.xlu0.b32.cont [10/16] 0.0, 128
        %2454 = vxpose.xlu0.b32.cont [11/16] 0.0, 128
        %2455 = vxpose.xlu0.b32.cont [12/16] 0.0, 128
        %2456 = vxpose.xlu0.b32.cont [13/16] 0.0, 128
        %2457 = vxpose.xlu0.b32.cont [14/16] 0.0, 128
        %2458 = vxpose.xlu0.b32.cont [15/16] 0.0, 128
        %2459 = vxpose.xlu0.b32.end [16/16] 0.0, 128
        %v2460 = vpop.trf.xlu0
        %v2461 = vpop.trf.xlu0
        %v2462 = vpop.trf.xlu0
        %v2463 = vpop.trf.xlu0
        %v2464 = vpop.trf.xlu0
        %v2465 = vpop.trf.xlu0
        %v2466 = vpop.trf.xlu0
        %v2467 = vpop.trf.xlu0
        %v2468 = vpop.trf.xlu0
        %v2469 = vpop.trf.xlu0
        %v2470 = vpop.trf.xlu0
        %v2471 = vpop.trf.xlu0
        %v2472 = vpop.trf.xlu0
        %v2473 = vpop.trf.xlu0
        %v2474 = vpop.trf.xlu0
        %v2475 = vpop.trf.xlu0
        %2476 = vxpose.xlu0.b32.start [1/16] %v2375, 128
        %2477 = vxpose.xlu0.b32.cont [2/16] 0.0, 128
        %2478 = vxpose.xlu0.b32.cont [3/16] 0.0, 128
        %2479 = vxpose.xlu0.b32.cont [4/16] 0.0, 128
        %2480 = vxpose.xlu0.b32.cont [5/16] 0.0, 128
        %2481 = vxpose.xlu0.b32.cont [6/16] 0.0, 128
        %2482 = vxpose.xlu0.b32.cont [7/16] 0.0, 128
        %2483 = vxpose.xlu0.b32.cont [8/16] 0.0, 128
        %2484 = vxpose.xlu0.b32.cont [9/16] 0.0, 128
        %2485 = vxpose.xlu0.b32.cont [10/16] 0.0, 128
        %2486 = vxpose.xlu0.b32.cont [11/16] 0.0, 128
        %2487 = vxpose.xlu0.b32.cont [12/16] 0.0, 128
        %2488 = vxpose.xlu0.b32.cont [13/16] 0.0, 128
        %2489 = vxpose.xlu0.b32.cont [14/16] 0.0, 128
        %2490 = vxpose.xlu0.b32.cont [15/16] 0.0, 128
        %2491 = vxpose.xlu0.b32.end [16/16] 0.0, 128
        %v2492 = vpop.trf.xlu0
        %v2493 = vpop.trf.xlu0
        %v2494 = vpop.trf.xlu0
        %v2495 = vpop.trf.xlu0
        %v2496 = vpop.trf.xlu0
        %v2497 = vpop.trf.xlu0
        %v2498 = vpop.trf.xlu0
        %v2499 = vpop.trf.xlu0
        %v2500 = vpop.trf.xlu0
        %v2501 = vpop.trf.xlu0
        %v2502 = vpop.trf.xlu0
        %v2503 = vpop.trf.xlu0
        %v2504 = vpop.trf.xlu0
        %v2505 = vpop.trf.xlu0
        %v2506 = vpop.trf.xlu0
        %v2507 = vpop.trf.xlu0
        %v2509 = vsel %vm622, %v2396, 0
        %v2512 = vsel %vm622, %v2361, 0
        %2514 = vmatprep.subr.mxu0 0.0
        %2515 = vmatpush1.xpose.msra.mxu0 %v2512
        %2516 = vmatprep.subr.mxu0 0.0
        %2517 = vmatpush1.xpose.msra.mxu0 0.0
        %2518 = vmatprep.subr.mxu0 0.0
        %2519 = vmatpush1.xpose.msra.mxu0 0.0
        %2520 = vmatprep.subr.mxu0 0.0
        %2521 = vmatpush1.xpose.msra.mxu0 0.0
        %2522 = vmatprep.subr.mxu0 0.0
        %2523 = vmatpush1.xpose.msra.mxu0 0.0
        %2524 = vmatprep.subr.mxu0 0.0
        %2525 = vmatpush1.xpose.msra.mxu0 0.0
        %2526 = vmatprep.subr.mxu0 0.0
        %2527 = vmatpush1.xpose.msra.mxu0 0.0
        %2528 = vmatprep.subr.mxu0 0.0
        %2529 = vmatpush1.xpose.msra.mxu0 0.0
        %2530 = vmatprep.subr.mxu0 0.0
        %2531 = vmatpush1.xpose.msra.mxu0 0.0
        %2532 = vmatprep.subr.mxu0 0.0
        %2533 = vmatpush1.xpose.msra.mxu0 0.0
        %2534 = vmatprep.subr.mxu0 0.0
        %2535 = vmatpush1.xpose.msra.mxu0 0.0
        %2536 = vmatprep.subr.mxu0 0.0
        %2537 = vmatpush1.xpose.msra.mxu0 0.0
        %2538 = vmatprep.subr.mxu0 0.0
        %2539 = vmatpush1.xpose.msra.mxu0 0.0
        %2540 = vmatprep.subr.mxu0 0.0
        %2541 = vmatpush1.xpose.msra.mxu0 0.0
        %2542 = vmatprep.subr.mxu0 0.0
        %2543 = vmatpush1.xpose.msra.mxu0 0.0
        %2544 = vmatprep.subr.mxu0 0.0
        %2545 = vmatpush1.xpose.msra.mxu0 0.0
        %2546 = vmatprep.subr.mxu0 0.0
        %2547 = vmatpush1.xpose.msra.mxu0 0.0
        %2548 = vmatprep.subr.mxu0 0.0
        %2549 = vmatpush1.xpose.msra.mxu0 0.0
        %2550 = vmatprep.subr.mxu0 0.0
        %2551 = vmatpush1.xpose.msra.mxu0 0.0
        %2552 = vmatprep.subr.mxu0 0.0
        %2553 = vmatpush1.xpose.msra.mxu0 0.0
        %2554 = vmatprep.subr.mxu0 0.0
        %2555 = vmatpush1.xpose.msra.mxu0 0.0
        %2556 = vmatprep.subr.mxu0 0.0
        %2557 = vmatpush1.xpose.msra.mxu0 0.0
        %2558 = vmatprep.subr.mxu0 0.0
        %2559 = vmatpush1.xpose.msra.mxu0 0.0
        %2560 = vmatprep.subr.mxu0 0.0
        %2561 = vmatpush1.xpose.msra.mxu0 0.0
        %2562 = vmatprep.subr.mxu0 0.0
        %2563 = vmatpush1.xpose.msra.mxu0 0.0
        %2564 = vmatprep.subr.mxu0 0.0
        %2565 = vmatpush1.xpose.msra.mxu0 0.0
        %2566 = vmatprep.subr.mxu0 0.0
        %2567 = vmatpush1.xpose.msra.mxu0 0.0
        %2568 = vmatprep.subr.mxu0 0.0
        %2569 = vmatpush1.xpose.msra.mxu0 0.0
        %2570 = vmatprep.subr.mxu0 0.0
        %2571 = vmatpush1.xpose.msra.mxu0 0.0
        %2572 = vmatprep.subr.mxu0 0.0
        %2573 = vmatpush1.xpose.msra.mxu0 0.0
        %2574 = vmatprep.subr.mxu0 0.0
        %2575 = vmatpush1.xpose.msra.mxu0 0.0
        %2576 = vmatprep.subr.mxu0 0.0
        %2577 = vmatpush1.xpose.msra.mxu0 0.0
        %2578 = vmatprep.mubr.f32.mxu0 0.0
        %2579 = vmatmul.mubr.f32.gmra.mrb[0].mxu0 %v2509
        %v2580 = vpop.f32.mrb[0].mxu0
        %v2581 = vadd.f32 0.0, %v2580
        %v2582 = vpop.f32.mrb[0].mxu0
        %2583 = vdwg.mxu0
        %v2585 = vsel %vm622, %v2428, 0
        %v2588 = vsel %vm622, %v2363, 0
        %2590 = vmatprep.subr.mxu0 0.0
        %2591 = vmatpush1.xpose.msra.mxu0 %v2588
        %2592 = vmatprep.subr.mxu0 0.0
        %2593 = vmatpush1.xpose.msra.mxu0 0.0
        %2594 = vmatprep.subr.mxu0 0.0
        %2595 = vmatpush1.xpose.msra.mxu0 0.0
        %2596 = vmatprep.subr.mxu0 0.0
        %2597 = vmatpush1.xpose.msra.mxu0 0.0
        %2598 = vmatprep.subr.mxu0 0.0
        %2599 = vmatpush1.xpose.msra.mxu0 0.0
        %2600 = vmatprep.subr.mxu0 0.0
        %2601 = vmatpush1.xpose.msra.mxu0 0.0
        %2602 = vmatprep.subr.mxu0 0.0
        %2603 = vmatpush1.xpose.msra.mxu0 0.0
        %2604 = vmatprep.subr.mxu0 0.0
        %2605 = vmatpush1.xpose.msra.mxu0 0.0
        %2606 = vmatprep.subr.mxu0 0.0
        %2607 = vmatpush1.xpose.msra.mxu0 0.0
        %2608 = vmatprep.subr.mxu0 0.0
        %2609 = vmatpush1.xpose.msra.mxu0 0.0
        %2610 = vmatprep.subr.mxu0 0.0
        %2611 = vmatpush1.xpose.msra.mxu0 0.0
        %2612 = vmatprep.subr.mxu0 0.0
        %2613 = vmatpush1.xpose.msra.mxu0 0.0
        %2614 = vmatprep.subr.mxu0 0.0
        %2615 = vmatpush1.xpose.msra.mxu0 0.0
        %2616 = vmatprep.subr.mxu0 0.0
        %2617 = vmatpush1.xpose.msra.mxu0 0.0
        %2618 = vmatprep.subr.mxu0 0.0
        %2619 = vmatpush1.xpose.msra.mxu0 0.0
        %2620 = vmatprep.subr.mxu0 0.0
        %2621 = vmatpush1.xpose.msra.mxu0 0.0
        %2622 = vmatprep.subr.mxu0 0.0
        %2623 = vmatpush1.xpose.msra.mxu0 0.0
        %2624 = vmatprep.subr.mxu0 0.0
        %2625 = vmatpush1.xpose.msra.mxu0 0.0
        %2626 = vmatprep.subr.mxu0 0.0
        %2627 = vmatpush1.xpose.msra.mxu0 0.0
        %2628 = vmatprep.subr.mxu0 0.0
        %2629 = vmatpush1.xpose.msra.mxu0 0.0
        %2630 = vmatprep.subr.mxu0 0.0
        %2631 = vmatpush1.xpose.msra.mxu0 0.0
        %2632 = vmatprep.subr.mxu0 0.0
        %2633 = vmatpush1.xpose.msra.mxu0 0.0
        %2634 = vmatprep.subr.mxu0 0.0
        %2635 = vmatpush1.xpose.msra.mxu0 0.0
        %2636 = vmatprep.subr.mxu0 0.0
        %2637 = vmatpush1.xpose.msra.mxu0 0.0
        %2638 = vmatprep.subr.mxu0 0.0
        %2639 = vmatpush1.xpose.msra.mxu0 0.0
        %2640 = vmatprep.subr.mxu0 0.0
        %2641 = vmatpush1.xpose.msra.mxu0 0.0
        %2642 = vmatprep.subr.mxu0 0.0
        %2643 = vmatpush1.xpose.msra.mxu0 0.0
        %2644 = vmatprep.subr.mxu0 0.0
        %2645 = vmatpush1.xpose.msra.mxu0 0.0
        %2646 = vmatprep.subr.mxu0 0.0
        %2647 = vmatpush1.xpose.msra.mxu0 0.0
        %2648 = vmatprep.subr.mxu0 0.0
        %2649 = vmatpush1.xpose.msra.mxu0 0.0
        %2650 = vmatprep.subr.mxu0 0.0
        %2651 = vmatpush1.xpose.msra.mxu0 0.0
        %2652 = vmatprep.subr.mxu0 0.0
        %2653 = vmatpush1.xpose.msra.mxu0 0.0
        %2654 = vmatprep.mubr.f32.mxu0 0.0
        %2655 = vmatmul.mubr.f32.gmra.mrb[0].mxu0 %v2585
        %v2656 = vpop.f32.mrb[0].mxu0
        %v2657 = vadd.f32 0.0, %v2656
        %v2658 = vpop.f32.mrb[0].mxu0
        %2659 = vdwg.mxu0
        %v2661 = vsel %vm622, %v2460, 0
        %v2664 = vsel %vm622, %v2365, 0
        %2666 = vmatprep.subr.mxu0 0.0
        %2667 = vmatpush1.xpose.msra.mxu0 %v2664
        %2668 = vmatprep.subr.mxu0 0.0
        %2669 = vmatpush1.xpose.msra.mxu0 0.0
        %2670 = vmatprep.subr.mxu0 0.0
        %2671 = vmatpush1.xpose.msra.mxu0 0.0
        %2672 = vmatprep.subr.mxu0 0.0
        %2673 = vmatpush1.xpose.msra.mxu0 0.0
        %2674 = vmatprep.subr.mxu0 0.0
        %2675 = vmatpush1.xpose.msra.mxu0 0.0
        %2676 = vmatprep.subr.mxu0 0.0
        %2677 = vmatpush1.xpose.msra.mxu0 0.0
        %2678 = vmatprep.subr.mxu0 0.0
        %2679 = vmatpush1.xpose.msra.mxu0 0.0
        %2680 = vmatprep.subr.mxu0 0.0
        %2681 = vmatpush1.xpose.msra.mxu0 0.0
        %2682 = vmatprep.subr.mxu0 0.0
        %2683 = vmatpush1.xpose.msra.mxu0 0.0
        %2684 = vmatprep.subr.mxu0 0.0
        %2685 = vmatpush1.xpose.msra.mxu0 0.0
        %2686 = vmatprep.subr.mxu0 0.0
        %2687 = vmatpush1.xpose.msra.mxu0 0.0
        %2688 = vmatprep.subr.mxu0 0.0
        %2689 = vmatpush1.xpose.msra.mxu0 0.0
        %2690 = vmatprep.subr.mxu0 0.0
        %2691 = vmatpush1.xpose.msra.mxu0 0.0
        %2692 = vmatprep.subr.mxu0 0.0
        %2693 = vmatpush1.xpose.msra.mxu0 0.0
        %2694 = vmatprep.subr.mxu0 0.0
        %2695 = vmatpush1.xpose.msra.mxu0 0.0
        %2696 = vmatprep.subr.mxu0 0.0
        %2697 = vmatpush1.xpose.msra.mxu0 0.0
        %2698 = vmatprep.subr.mxu0 0.0
        %2699 = vmatpush1.xpose.msra.mxu0 0.0
        %2700 = vmatprep.subr.mxu0 0.0
        %2701 = vmatpush1.xpose.msra.mxu0 0.0
        %2702 = vmatprep.subr.mxu0 0.0
        %2703 = vmatpush1.xpose.msra.mxu0 0.0
        %2704 = vmatprep.subr.mxu0 0.0
        %2705 = vmatpush1.xpose.msra.mxu0 0.0
        %2706 = vmatprep.subr.mxu0 0.0
        %2707 = vmatpush1.xpose.msra.mxu0 0.0
        %2708 = vmatprep.subr.mxu0 0.0
        %2709 = vmatpush1.xpose.msra.mxu0 0.0
        %2710 = vmatprep.subr.mxu0 0.0
        %2711 = vmatpush1.xpose.msra.mxu0 0.0
        %2712 = vmatprep.subr.mxu0 0.0
        %2713 = vmatpush1.xpose.msra.mxu0 0.0
        %2714 = vmatprep.subr.mxu0 0.0
        %2715 = vmatpush1.xpose.msra.mxu0 0.0
        %2716 = vmatprep.subr.mxu0 0.0
        %2717 = vmatpush1.xpose.msra.mxu0 0.0
        %2718 = vmatprep.subr.mxu0 0.0
        %2719 = vmatpush1.xpose.msra.mxu0 0.0
        %2720 = vmatprep.subr.mxu0 0.0
        %2721 = vmatpush1.xpose.msra.mxu0 0.0
        %2722 = vmatprep.subr.mxu0 0.0
        %2723 = vmatpush1.xpose.msra.mxu0 0.0
        %2724 = vmatprep.subr.mxu0 0.0
        %2725 = vmatpush1.xpose.msra.mxu0 0.0
        %2726 = vmatprep.subr.mxu0 0.0
        %2727 = vmatpush1.xpose.msra.mxu0 0.0
        %2728 = vmatprep.subr.mxu0 0.0
        %2729 = vmatpush1.xpose.msra.mxu0 0.0
        %2730 = vmatprep.mubr.f32.mxu0 0.0
        %2731 = vmatmul.mubr.f32.gmra.mrb[0].mxu0 %v2661
        %v2732 = vpop.f32.mrb[0].mxu0
        %v2733 = vadd.f32 0.0, %v2732
        %v2734 = vpop.f32.mrb[0].mxu0
        %2735 = vdwg.mxu0
        %v2737 = vsel %vm622, %v2492, 0
        %v2740 = vsel %vm622, %v2367, 0
        %2742 = vmatprep.subr.mxu0 0.0
        %2743 = vmatpush1.xpose.msra.mxu0 %v2740
        %2744 = vmatprep.subr.mxu0 0.0
        %2745 = vmatpush1.xpose.msra.mxu0 0.0
        %2746 = vmatprep.subr.mxu0 0.0
        %2747 = vmatpush1.xpose.msra.mxu0 0.0
        %2748 = vmatprep.subr.mxu0 0.0
        %2749 = vmatpush1.xpose.msra.mxu0 0.0
        %2750 = vmatprep.subr.mxu0 0.0
        %2751 = vmatpush1.xpose.msra.mxu0 0.0
        %2752 = vmatprep.subr.mxu0 0.0
        %2753 = vmatpush1.xpose.msra.mxu0 0.0
        %2754 = vmatprep.subr.mxu0 0.0
        %2755 = vmatpush1.xpose.msra.mxu0 0.0
        %2756 = vmatprep.subr.mxu0 0.0
        %2757 = vmatpush1.xpose.msra.mxu0 0.0
        %2758 = vmatprep.subr.mxu0 0.0
        %2759 = vmatpush1.xpose.msra.mxu0 0.0
        %2760 = vmatprep.subr.mxu0 0.0
        %2761 = vmatpush1.xpose.msra.mxu0 0.0
        %2762 = vmatprep.subr.mxu0 0.0
        %2763 = vmatpush1.xpose.msra.mxu0 0.0
        %2764 = vmatprep.subr.mxu0 0.0
        %2765 = vmatpush1.xpose.msra.mxu0 0.0
        %2766 = vmatprep.subr.mxu0 0.0
        %2767 = vmatpush1.xpose.msra.mxu0 0.0
        %2768 = vmatprep.subr.mxu0 0.0
        %2769 = vmatpush1.xpose.msra.mxu0 0.0
        %2770 = vmatprep.subr.mxu0 0.0
        %2771 = vmatpush1.xpose.msra.mxu0 0.0
        %2772 = vmatprep.subr.mxu0 0.0
        %2773 = vmatpush1.xpose.msra.mxu0 0.0
        %2774 = vmatprep.subr.mxu0 0.0
        %2775 = vmatpush1.xpose.msra.mxu0 0.0
        %2776 = vmatprep.subr.mxu0 0.0
        %2777 = vmatpush1.xpose.msra.mxu0 0.0
        %2778 = vmatprep.subr.mxu0 0.0
        %2779 = vmatpush1.xpose.msra.mxu0 0.0
        %2780 = vmatprep.subr.mxu0 0.0
        %2781 = vmatpush1.xpose.msra.mxu0 0.0
        %2782 = vmatprep.subr.mxu0 0.0
        %2783 = vmatpush1.xpose.msra.mxu0 0.0
        %2784 = vmatprep.subr.mxu0 0.0
        %2785 = vmatpush1.xpose.msra.mxu0 0.0
        %2786 = vmatprep.subr.mxu0 0.0
        %2787 = vmatpush1.xpose.msra.mxu0 0.0
        %2788 = vmatprep.subr.mxu0 0.0
        %2789 = vmatpush1.xpose.msra.mxu0 0.0
        %2790 = vmatprep.subr.mxu0 0.0
        %2791 = vmatpush1.xpose.msra.mxu0 0.0
        %2792 = vmatprep.subr.mxu0 0.0
        %2793 = vmatpush1.xpose.msra.mxu0 0.0
        %2794 = vmatprep.subr.mxu0 0.0
        %2795 = vmatpush1.xpose.msra.mxu0 0.0
        %2796 = vmatprep.subr.mxu0 0.0
        %2797 = vmatpush1.xpose.msra.mxu0 0.0
        %2798 = vmatprep.subr.mxu0 0.0
        %2799 = vmatpush1.xpose.msra.mxu0 0.0
        %2800 = vmatprep.subr.mxu0 0.0
        %2801 = vmatpush1.xpose.msra.mxu0 0.0
        %2802 = vmatprep.subr.mxu0 0.0
        %2803 = vmatpush1.xpose.msra.mxu0 0.0
        %2804 = vmatprep.subr.mxu0 0.0
        %2805 = vmatpush1.xpose.msra.mxu0 0.0
        %2806 = vmatprep.mubr.f32.mxu0 0.0
        %2807 = vmatmul.mubr.f32.gmra.mrb[0].mxu0 %v2737
        %v2808 = vpop.f32.mrb[0].mxu0
        %v2809 = vadd.f32 0.0, %v2808
        %v2810 = vpop.f32.mrb[0].mxu0
        %2811 = vdwg.mxu0
        %2812 = vxpose.xlu0.b32.start [1/16] %v2581, 128
        %2813 = vxpose.xlu0.b32.cont [2/16] 0.0, 128
        %2814 = vxpose.xlu0.b32.cont [3/16] 0.0, 128
        %2815 = vxpose.xlu0.b32.cont [4/16] 0.0, 128
        %2816 = vxpose.xlu0.b32.cont [5/16] 0.0, 128
        %2817 = vxpose.xlu0.b32.cont [6/16] 0.0, 128
        %2818 = vxpose.xlu0.b32.cont [7/16] 0.0, 128
        %2819 = vxpose.xlu0.b32.cont [8/16] 0.0, 128
        %2820 = vxpose.xlu0.b32.cont [9/16] 0.0, 128
        %2821 = vxpose.xlu0.b32.cont [10/16] 0.0, 128
        %2822 = vxpose.xlu0.b32.cont [11/16] 0.0, 128
        %2823 = vxpose.xlu0.b32.cont [12/16] 0.0, 128
        %2824 = vxpose.xlu0.b32.cont [13/16] 0.0, 128
        %2825 = vxpose.xlu0.b32.cont [14/16] 0.0, 128
        %2826 = vxpose.xlu0.b32.cont [15/16] 0.0, 128
        %2827 = vxpose.xlu0.b32.end [16/16] 0.0, 128
        %v2828 = vpop.trf.xlu0
        %v2829 = vpop.trf.xlu0
        %v2830 = vpop.trf.xlu0
        %v2831 = vpop.trf.xlu0
        %v2832 = vpop.trf.xlu0
        %v2833 = vpop.trf.xlu0
        %v2834 = vpop.trf.xlu0
        %v2835 = vpop.trf.xlu0
        %v2836 = vpop.trf.xlu0
        %v2837 = vpop.trf.xlu0
        %v2838 = vpop.trf.xlu0
        %v2839 = vpop.trf.xlu0
        %v2840 = vpop.trf.xlu0
        %v2841 = vpop.trf.xlu0
        %v2842 = vpop.trf.xlu0
        %v2843 = vpop.trf.xlu0
        %2844 = vxpose.xlu0.b32.start [1/16] %v2657, 128
        %2845 = vxpose.xlu0.b32.cont [2/16] 0.0, 128
        %2846 = vxpose.xlu0.b32.cont [3/16] 0.0, 128
        %2847 = vxpose.xlu0.b32.cont [4/16] 0.0, 128
        %2848 = vxpose.xlu0.b32.cont [5/16] 0.0, 128
        %2849 = vxpose.xlu0.b32.cont [6/16] 0.0, 128
        %2850 = vxpose.xlu0.b32.cont [7/16] 0.0, 128
        %2851 = vxpose.xlu0.b32.cont [8/16] 0.0, 128
        %2852 = vxpose.xlu0.b32.cont [9/16] 0.0, 128
        %2853 = vxpose.xlu0.b32.cont [10/16] 0.0, 128
        %2854 = vxpose.xlu0.b32.cont [11/16] 0.0, 128
        %2855 = vxpose.xlu0.b32.cont [12/16] 0.0, 128
        %2856 = vxpose.xlu0.b32.cont [13/16] 0.0, 128
        %2857 = vxpose.xlu0.b32.cont [14/16] 0.0, 128
        %2858 = vxpose.xlu0.b32.cont [15/16] 0.0, 128
        %2859 = vxpose.xlu0.b32.end [16/16] 0.0, 128
        %v2860 = vpop.trf.xlu0
        %v2861 = vpop.trf.xlu0
        %v2862 = vpop.trf.xlu0
        %v2863 = vpop.trf.xlu0
        %v2864 = vpop.trf.xlu0
        %v2865 = vpop.trf.xlu0
        %v2866 = vpop.trf.xlu0
        %v2867 = vpop.trf.xlu0
        %v2868 = vpop.trf.xlu0
        %v2869 = vpop.trf.xlu0
        %v2870 = vpop.trf.xlu0
        %v2871 = vpop.trf.xlu0
        %v2872 = vpop.trf.xlu0
        %v2873 = vpop.trf.xlu0
        %v2874 = vpop.trf.xlu0
        %v2875 = vpop.trf.xlu0
        %2876 = vxpose.xlu0.b32.start [1/16] %v2733, 128
        %2877 = vxpose.xlu0.b32.cont [2/16] 0.0, 128
        %2878 = vxpose.xlu0.b32.cont [3/16] 0.0, 128
        %2879 = vxpose.xlu0.b32.cont [4/16] 0.0, 128
        %2880 = vxpose.xlu0.b32.cont [5/16] 0.0, 128
        %2881 = vxpose.xlu0.b32.cont [6/16] 0.0, 128
        %2882 = vxpose.xlu0.b32.cont [7/16] 0.0, 128
        %2883 = vxpose.xlu0.b32.cont [8/16] 0.0, 128
        %2884 = vxpose.xlu0.b32.cont [9/16] 0.0, 128
        %2885 = vxpose.xlu0.b32.cont [10/16] 0.0, 128
        %2886 = vxpose.xlu0.b32.cont [11/16] 0.0, 128
        %2887 = vxpose.xlu0.b32.cont [12/16] 0.0, 128
        %2888 = vxpose.xlu0.b32.cont [13/16] 0.0, 128
        %2889 = vxpose.xlu0.b32.cont [14/16] 0.0, 128
        %2890 = vxpose.xlu0.b32.cont [15/16] 0.0, 128
        %2891 = vxpose.xlu0.b32.end [16/16] 0.0, 128
        %v2892 = vpop.trf.xlu0
        %v2893 = vpop.trf.xlu0
        %v2894 = vpop.trf.xlu0
        %v2895 = vpop.trf.xlu0
        %v2896 = vpop.trf.xlu0
        %v2897 = vpop.trf.xlu0
        %v2898 = vpop.trf.xlu0
        %v2899 = vpop.trf.xlu0
        %v2900 = vpop.trf.xlu0
        %v2901 = vpop.trf.xlu0
        %v2902 = vpop.trf.xlu0
        %v2903 = vpop.trf.xlu0
        %v2904 = vpop.trf.xlu0
        %v2905 = vpop.trf.xlu0
        %v2906 = vpop.trf.xlu0
        %v2907 = vpop.trf.xlu0
        %2908 = vxpose.xlu0.b32.start [1/16] %v2809, 128
        %2909 = vxpose.xlu0.b32.cont [2/16] 0.0, 128
        %2910 = vxpose.xlu0.b32.cont [3/16] 0.0, 128
        %2911 = vxpose.xlu0.b32.cont [4/16] 0.0, 128
        %2912 = vxpose.xlu0.b32.cont [5/16] 0.0, 128
        %2913 = vxpose.xlu0.b32.cont [6/16] 0.0, 128
        %2914 = vxpose.xlu0.b32.cont [7/16] 0.0, 128
        %2915 = vxpose.xlu0.b32.cont [8/16] 0.0, 128
        %2916 = vxpose.xlu0.b32.cont [9/16] 0.0, 128
        %2917 = vxpose.xlu0.b32.cont [10/16] 0.0, 128
        %2918 = vxpose.xlu0.b32.cont [11/16] 0.0, 128
        %2919 = vxpose.xlu0.b32.cont [12/16] 0.0, 128
        %2920 = vxpose.xlu0.b32.cont [13/16] 0.0, 128
        %2921 = vxpose.xlu0.b32.cont [14/16] 0.0, 128
        %2922 = vxpose.xlu0.b32.cont [15/16] 0.0, 128
        %2923 = vxpose.xlu0.b32.end [16/16] 0.0, 128
        %v2924 = vpop.trf.xlu0
        %v2925 = vpop.trf.xlu0
        %v2926 = vpop.trf.xlu0
        %v2927 = vpop.trf.xlu0
        %v2928 = vpop.trf.xlu0
        %v2929 = vpop.trf.xlu0
        %v2930 = vpop.trf.xlu0
        %v2931 = vpop.trf.xlu0
        %v2932 = vpop.trf.xlu0
        %v2933 = vpop.trf.xlu0
        %v2934 = vpop.trf.xlu0
        %v2935 = vpop.trf.xlu0
        %v2936 = vpop.trf.xlu0
        %v2937 = vpop.trf.xlu0
        %v2938 = vpop.trf.xlu0
        %v2939 = vpop.trf.xlu0
        %v2940 = vcombine.low %v2828, %v2892
        %v2941 = vcombine.high %v2828, %v2892
        %v2943 = vunpack.c.l.s4 1983009808
        %v2944 = vunpack.c.0.s8 %v2943
        %v2945 = vlaneseq
        %v2946 = vshrl.u32 %v2945, 7
        %v2947 = vsub.s32 %v2944, %v2946
        %v2948 = vrot.slane %v2940, %v2947
        %v2950 = vunpack.c.l.s4 1983009808
        %v2951 = vunpack.c.0.s8 %v2950
        %v2952 = vlaneseq
        %v2953 = vshrl.u32 %v2952, 7
        %v2954 = vsub.s32 %v2951, %v2953
        %v2955 = vrot.slane %v2941, %v2954
        %v2956 = vcombine.low %v2860, %v2924
        %v2957 = vcombine.high %v2860, %v2924
        %v2959 = vunpack.c.l.s4 1983009808
        %v2960 = vunpack.c.0.s8 %v2959
        %v2961 = vlaneseq
        %v2962 = vshrl.u32 %v2961, 7
        %v2963 = vsub.s32 %v2960, %v2962
        %v2964 = vrot.slane %v2956, %v2963
        %v2966 = vunpack.c.l.s4 1983009808
        %v2967 = vunpack.c.0.s8 %v2966
        %v2968 = vlaneseq
        %v2969 = vshrl.u32 %v2968, 7
        %v2970 = vsub.s32 %v2967, %v2969
        %v2971 = vrot.slane %v2957, %v2970
        %v2972 = vcombine.low %v2948, %v2964
        %v2973 = vcombine.high %v2948, %v2964
        %v2975 = vunpack.c.l.s4 1934713408
        %v2976 = vunpack.c.0.s8 %v2975
        %v2977 = vlaneseq
        %v2978 = vshrl.u32 %v2977, 7
        %v2979 = vsub.s32 %v2976, %v2978
        %v2980 = vrot.slane %v2972, %v2979
        %v2982 = vunpack.c.l.s4 1934713408
        %v2983 = vunpack.c.0.s8 %v2982
        %v2984 = vlaneseq
        %v2985 = vshrl.u32 %v2984, 7
        %v2986 = vsub.s32 %v2983, %v2985
        %v2987 = vrot.slane %v2973, %v2986
        %v2988 = vcombine.low %v2955, %v2971
        %v2989 = vcombine.high %v2955, %v2971
        %v2991 = vunpack.c.l.s4 1934713408
        %v2992 = vunpack.c.0.s8 %v2991
        %v2993 = vlaneseq
        %v2994 = vshrl.u32 %v2993, 7
        %v2995 = vsub.s32 %v2992, %v2994
        %v2996 = vrot.slane %v2988, %v2995
        %v2998 = vunpack.c.l.s4 1934713408
        %v2999 = vunpack.c.0.s8 %v2998
        %v3000 = vlaneseq
        %v3001 = vshrl.u32 %v3000, 7
        %v3002 = vsub.s32 %v2999, %v3001
        %v3003 = vrot.slane %v2989, %v3002
        %v3004 = vcombine.high %v2980, 0.0
        %v3005 = vcombine.high %v2987, 0.0
        %v3006 = vcombine.high %v2996, 0.0
        %v3007 = vcombine.high %v3003, 0.0
        %v3008 = vcombine.low %v2980, %v2987
        %v3010 = vunpack.c.l.s4 1983009808
        %v3011 = vunpack.c.0.s8 %v3010
        %v3012 = vlaneseq
        %v3013 = vshrl.u32 %v3012, 7
        %v3014 = vsub.s32 %v3011, %v3013
        %v3015 = vrot.slane %v3008, %v3014
        %v3016 = vcombine.low %v3004, %v3005
        %v3018 = vunpack.c.l.s4 1983009808
        %v3019 = vunpack.c.0.s8 %v3018
        %v3020 = vlaneseq
        %v3021 = vshrl.u32 %v3020, 7
        %v3022 = vsub.s32 %v3019, %v3021
        %v3023 = vrot.slane %v3016, %v3022
        %v3024 = vcombine.low %v2996, %v3003
        %v3026 = vunpack.c.l.s4 1983009808
        %v3027 = vunpack.c.0.s8 %v3026
        %v3028 = vlaneseq
        %v3029 = vshrl.u32 %v3028, 7
        %v3030 = vsub.s32 %v3027, %v3029
        %v3031 = vrot.slane %v3024, %v3030
        %v3032 = vcombine.low %v3006, %v3007
        %v3034 = vunpack.c.l.s4 1983009808
        %v3035 = vunpack.c.0.s8 %v3034
        %v3036 = vlaneseq
        %v3037 = vshrl.u32 %v3036, 7
        %v3038 = vsub.s32 %v3035, %v3037
        %v3039 = vrot.slane %v3032, %v3038
        %v3040 = vcombine.low %v3015, %v3023
        %v3041 = vcombine.high %v3015, %v3023
        %v3043 = vunpack.c.l.s4 1934713408
        %v3044 = vunpack.c.0.s8 %v3043
        %v3045 = vlaneseq
        %v3046 = vshrl.u32 %v3045, 7
        %v3047 = vsub.s32 %v3044, %v3046
        %v3048 = vrot.slane %v3040, %v3047
        %v3050 = vunpack.c.l.s4 1934713408
        %v3051 = vunpack.c.0.s8 %v3050
        %v3052 = vlaneseq
        %v3053 = vshrl.u32 %v3052, 7
        %v3054 = vsub.s32 %v3051, %v3053
        %v3055 = vrot.slane %v3041, %v3054
        %v3056 = vcombine.low %v3031, %v3039
        %v3057 = vcombine.high %v3031, %v3039
        %v3059 = vunpack.c.l.s4 1934713408
        %v3060 = vunpack.c.0.s8 %v3059
        %v3061 = vlaneseq
        %v3062 = vshrl.u32 %v3061, 7
        %v3063 = vsub.s32 %v3060, %v3062
        %v3064 = vrot.slane %v3056, %v3063
        %v3066 = vunpack.c.l.s4 1934713408
        %v3067 = vunpack.c.0.s8 %v3066
        %v3068 = vlaneseq
        %v3069 = vshrl.u32 %v3068, 7
        %v3070 = vsub.s32 %v3067, %v3069
        %v3071 = vrot.slane %v3057, %v3070
        %v3072 = vcombine.low %v3048, %v3064
        %v3073 = vcombine.high %v3048, %v3064
        %v3074 = vcombine.low %v3055, %v3071
        %v3075 = vcombine.high %v3055, %v3071
        %3077 = vrot.lane.b32.xlu0 %v3073, 8
        %v3078 = vpop.permute.xlu0 %3077
        %3081 = vrot.lane.b32.xlu0 %v3074, 16
        %v3082 = vpop.permute.xlu0 %3081
        %3085 = vrot.lane.b32.xlu0 %v3075, 24
        %v3086 = vpop.permute.xlu0 %3085
        %v3088 = vsel %vm622, %v3072, %v3078
        %v3089 = vsel %vm1680, %v3088, %v3082
        %v3090 = vsel %vm1682, %v3089, %v3086
        %s3091 = scalar_lea.vmem [#allocation8], 32
        %v3092 = vld [vmem:[%s3091] sm:$0xff]
        %v3093 = vld [vmem:[%s3091 + $0x8] sm:$0xff]
        %v3094 = vld [vmem:[%s3091 + $0x10] sm:$0xff]
        %v3095 = vld [vmem:[%s3091 + $0x18] sm:$0xff]
        %s3096 = scalar_lea.vmem %s5, 1
        %v3097 = vld [vmem:[%s3096] sm:$0x1]
        %v3099 = vlaneseq
        %v3100 = vshrl.u32 %v3099, 7
        %v3101 = vsub.s32 0, %v3100
        %v3102 = vrot.slane %v3097, %v3101
        %v3105 = vsel %vm401, %v3090, 0
        %3107 = vmatprep.subr.mxu0 0.0
        %3108 = vmatpush1.msra.mxu0 %v3092
        %3109 = vmatprep.subr.mxu0 0.0
        %3110 = vmatpush1.msra.mxu0 %v3093
        %3111 = vmatprep.subr.mxu0 0.0
        %3112 = vmatpush1.msra.mxu0 %v3094
        %3113 = vmatprep.subr.mxu0 0.0
        %3114 = vmatpush1.msra.mxu0 %v3095
        %3115 = vmatprep.subr.mxu0 0.0
        %3116 = vmatpush1.msra.mxu0 0.0
        %3117 = vmatprep.subr.mxu0 0.0
        %3118 = vmatpush1.msra.mxu0 0.0
        %3119 = vmatprep.subr.mxu0 0.0
        %3120 = vmatpush1.msra.mxu0 0.0
        %3121 = vmatprep.subr.mxu0 0.0
        %3122 = vmatpush1.msra.mxu0 0.0
        %3123 = vmatprep.subr.mxu0 0.0
        %3124 = vmatpush1.msra.mxu0 0.0
        %3125 = vmatprep.subr.mxu0 0.0
        %3126 = vmatpush1.msra.mxu0 0.0
        %3127 = vmatprep.subr.mxu0 0.0
        %3128 = vmatpush1.msra.mxu0 0.0
        %3129 = vmatprep.subr.mxu0 0.0
        %3130 = vmatpush1.msra.mxu0 0.0
        %3131 = vmatprep.subr.mxu0 0.0
        %3132 = vmatpush1.msra.mxu0 0.0
        %3133 = vmatprep.subr.mxu0 0.0
        %3134 = vmatpush1.msra.mxu0 0.0
        %3135 = vmatprep.subr.mxu0 0.0
        %3136 = vmatpush1.msra.mxu0 0.0
        %3137 = vmatprep.subr.mxu0 0.0
        %3138 = vmatpush1.msra.mxu0 0.0
        %3139 = vmatprep.subr.mxu0 0.0
        %3140 = vmatpush1.msra.mxu0 0.0
        %3141 = vmatprep.subr.mxu0 0.0
        %3142 = vmatpush1.msra.mxu0 0.0
        %3143 = vmatprep.subr.mxu0 0.0
        %3144 = vmatpush1.msra.mxu0 0.0
        %3145 = vmatprep.subr.mxu0 0.0
        %3146 = vmatpush1.msra.mxu0 0.0
        %3147 = vmatprep.subr.mxu0 0.0
        %3148 = vmatpush1.msra.mxu0 0.0
        %3149 = vmatprep.subr.mxu0 0.0
        %3150 = vmatpush1.msra.mxu0 0.0
        %3151 = vmatprep.subr.mxu0 0.0
        %3152 = vmatpush1.msra.mxu0 0.0
        %3153 = vmatprep.subr.mxu0 0.0
        %3154 = vmatpush1.msra.mxu0 0.0
        %3155 = vmatprep.subr.mxu0 0.0
        %3156 = vmatpush1.msra.mxu0 0.0
        %3157 = vmatprep.subr.mxu0 0.0
        %3158 = vmatpush1.msra.mxu0 0.0
        %3159 = vmatprep.subr.mxu0 0.0
        %3160 = vmatpush1.msra.mxu0 0.0
        %3161 = vmatprep.subr.mxu0 0.0
        %3162 = vmatpush1.msra.mxu0 0.0
        %3163 = vmatprep.subr.mxu0 0.0
        %3164 = vmatpush1.msra.mxu0 0.0
        %3165 = vmatprep.subr.mxu0 0.0
        %3166 = vmatpush1.msra.mxu0 0.0
        %3167 = vmatprep.subr.mxu0 0.0
        %3168 = vmatpush1.msra.mxu0 0.0
        %3169 = vmatprep.subr.mxu0 0.0
        %3170 = vmatpush1.msra.mxu0 0.0
        %3171 = vmatprep.mubr.f32.mxu0 0.0
        %3172 = vmatmul.mubr.f32.gmra.mrb[0].mxu0 %v3105
        %v3173 = vpop.f32.mrb[0].mxu0
        %v3174 = vadd.f32 %v3102, %v3173
        %v3175 = vpop.f32.mrb[0].mxu0
        %3176 = vdwg.mxu0
        %v3177 = vadd.f32 %v1798, %v3174
        %v3178 = vsel %vm401, %v3177, 0.0
        %3179 = vadd.xlane.f32.xlu0 %v3178
        %v3180 = vpop.xlane.xlu0 %3179
        %v3181 = vmul.f32 %v3180, %v1772
        %v3182 = vsub.f32 %v3177, %v3181
        %v3183 = vmul.f32 %v3182, %v3182
        %v3184 = vsel %vm401, %v3183, 0.0
        %3185 = vadd.xlane.f32.xlu0 %v3184
        %v3186 = vpop.xlane.xlu0 %3185
        %v3187 = vmul.f32 %v3186, %v1772
        %v3188 = vadd.f32 %v3187, 1e-05
        %v3189 = vrsqrt.pop %v3188
        %v3190 = vmul.f32 %v3182, %v3189
        %s3191 = scalar_lea.vmem %s6, 1
        %v3192 = vld [vmem:[%s3191] sm:$0x1]
        %v3194 = vlaneseq
        %v3195 = vshrl.u32 %v3194, 7
        %v3196 = vsub.s32 0, %v3195
        %v3197 = vrot.slane %v3192, %v3196
        %v3199 = vmul.f32 %v3190, %v3197
        %s3200 = scalar_lea.vmem %s7, 1
        %v3201 = vld [vmem:[%s3200] sm:$0x1]
        %v3203 = vlaneseq
        %v3204 = vshrl.u32 %v3203, 7
        %v3205 = vsub.s32 0, %v3204
        %v3206 = vrot.slane %v3201, %v3205
        %v3208 = vadd.f32 %v3199, %v3206
        %v3209 = vld [vmem:[%s8] sm:$0xff]
        %v3210 = vld [vmem:[%s8 + $0x8] sm:$0xff]
        %v3211 = vld [vmem:[%s8 + $0x10] sm:$0xff]
        %v3212 = vld [vmem:[%s8 + $0x18] sm:$0xff]
        %v3213 = vld [vmem:[%s9] sm:$0x1]
        %v3215 = vlaneseq
        %v3216 = vshrl.u32 %v3215, 7
        %v3217 = vsub.s32 0, %v3216
        %v3218 = vrot.slane %v3213, %v3217
        %v3221 = vsel %vm401, %v3208, 0
        %3223 = vmatprep.subr.mxu0 0.0
        %3224 = vmatpush1.msra.mxu0 %v3209
        %3225 = vmatprep.subr.mxu0 0.0
        %3226 = vmatpush1.msra.mxu0 %v3210
        %3227 = vmatprep.subr.mxu0 0.0
        %3228 = vmatpush1.msra.mxu0 %v3211
        %3229 = vmatprep.subr.mxu0 0.0
        %3230 = vmatpush1.msra.mxu0 %v3212
        %3231 = vmatprep.subr.mxu0 0.0
        %3232 = vmatpush1.msra.mxu0 0.0
        %3233 = vmatprep.subr.mxu0 0.0
        %3234 = vmatpush1.msra.mxu0 0.0
        %3235 = vmatprep.subr.mxu0 0.0
        %3236 = vmatpush1.msra.mxu0 0.0
        %3237 = vmatprep.subr.mxu0 0.0
        %3238 = vmatpush1.msra.mxu0 0.0
        %3239 = vmatprep.subr.mxu0 0.0
        %3240 = vmatpush1.msra.mxu0 0.0
        %3241 = vmatprep.subr.mxu0 0.0
        %3242 = vmatpush1.msra.mxu0 0.0
        %3243 = vmatprep.subr.mxu0 0.0
        %3244 = vmatpush1.msra.mxu0 0.0
        %3245 = vmatprep.subr.mxu0 0.0
        %3246 = vmatpush1.msra.mxu0 0.0
        %3247 = vmatprep.subr.mxu0 0.0
        %3248 = vmatpush1.msra.mxu0 0.0
        %3249 = vmatprep.subr.mxu0 0.0
        %3250 = vmatpush1.msra.mxu0 0.0
        %3251 = vmatprep.subr.mxu0 0.0
        %3252 = vmatpush1.msra.mxu0 0.0
        %3253 = vmatprep.subr.mxu0 0.0
        %3254 = vmatpush1.msra.mxu0 0.0
        %3255 = vmatprep.subr.mxu0 0.0
        %3256 = vmatpush1.msra.mxu0 0.0
        %3257 = vmatprep.subr.mxu0 0.0
        %3258 = vmatpush1.msra.mxu0 0.0
        %3259 = vmatprep.subr.mxu0 0.0
        %3260 = vmatpush1.msra.mxu0 0.0
        %3261 = vmatprep.subr.mxu0 0.0
        %3262 = vmatpush1.msra.mxu0 0.0
        %3263 = vmatprep.subr.mxu0 0.0
        %3264 = vmatpush1.msra.mxu0 0.0
        %3265 = vmatprep.subr.mxu0 0.0
        %3266 = vmatpush1.msra.mxu0 0.0
        %3267 = vmatprep.subr.mxu0 0.0
        %3268 = vmatpush1.msra.mxu0 0.0
        %3269 = vmatprep.subr.mxu0 0.0
        %3270 = vmatpush1.msra.mxu0 0.0
        %3271 = vmatprep.subr.mxu0 0.0
        %3272 = vmatpush1.msra.mxu0 0.0
        %3273 = vmatprep.subr.mxu0 0.0
        %3274 = vmatpush1.msra.mxu0 0.0
        %3275 = vmatprep.subr.mxu0 0.0
        %3276 = vmatpush1.msra.mxu0 0.0
        %3277 = vmatprep.subr.mxu0 0.0
        %3278 = vmatpush1.msra.mxu0 0.0
        %3279 = vmatprep.subr.mxu0 0.0
        %3280 = vmatpush1.msra.mxu0 0.0
        %3281 = vmatprep.subr.mxu0 0.0
        %3282 = vmatpush1.msra.mxu0 0.0
        %3283 = vmatprep.subr.mxu0 0.0
        %3284 = vmatpush1.msra.mxu0 0.0
        %3285 = vmatprep.subr.mxu0 0.0
        %3286 = vmatpush1.msra.mxu0 0.0
        %3287 = vmatprep.mubr.f32.mxu0 0.0
        %3288 = vmatmul.mubr.f32.gmra.mrb[0].mxu0 %v3221
        %v3289 = vpop.f32.mrb[0].mxu0
        %v3290 = vadd.f32 %v3218, %v3289
        %v3291 = vpop.f32.mrb[0].mxu0
        %3292 = vdwg.mxu0
        %3293 = vst [vmem:[%s347] sm:$0xff] %v3290
        %s3294 = sand.u32 %s229, 1
        %s3295 = scalar_lea.sflag [#allocation7], %s3294
        %s3296 = sand.u32 %s229, 1
        %s3297 = smul.addr %s3296, 8
        %s3298 = scalar_lea.vmem [#allocation10], %s3297
        // Predicated region
        $region65: #{tpu_custom_call.1} parent=55 // pred_check
          %p3299 = pneg %p239
        $region66: #{tpu_custom_call.1} parent=55 // pred_check_branch
          %3301 = sbr.rel (%p3299) target = $region68
        $region67: #{tpu_custom_call.1} parent=55 // pred_region
          %s3303 = ssub.s32 128, 128
          %3304 = vsyncadd %s3295, %s3303
          %s3305 = smul.addr %s32, 128
          %s3306 = scalar_lea.hbm %s10, %s3305
          %s3308 = sshll.u32 %s3298, 4
          %s3309 = int_to_ptr.vmem [resolvable:$true] %s3308
          %3311 = dma.vmem_to_hbm [thread:$0]  %s3309, 128, %s3306, %s3295
        $region68: #{tpu_custom_call.1} parent=55 // pred_fallthru
          _
      $region56: #{tpu_custom_call.1} parent=5 // pred_fallthru
        _
      %p3312 = scmp.le.s32.totalorder 2, %s27
      // Predicated region
      $region69: #{tpu_custom_call.1} parent=5 // pred_check
        %p3313 = pneg %p3312
      $region70: #{tpu_custom_call.1} parent=5 // pred_check_branch
        %3315 = sbr.rel (%p3313) target = $region72
      $region71: #{tpu_custom_call.1} parent=5 // pred_region
        %s3316 = ssub.s32 %s27, 2
        // Predicated region
        $region73: #{tpu_custom_call.1} parent=71 // pred_check
          %p3317 = pneg %p245
        $region74: #{tpu_custom_call.1} parent=71 // pred_check_branch
          %3319 = sbr.rel (%p3317) target = $region76
        $region75: #{tpu_custom_call.1} parent=71 // pred_region
          %s3320 = sand.u32 %s230, 1
          %s3321 = scalar_lea.sflag [#allocation7], %s3320
          %s3322 = sand.u32 %s230, 1
          %s3323 = smul.addr %s3322, 8
          %s3324 = scalar_lea.vmem [#allocation10], %s3323
          %3325 = dma.done %s3321, 128
        $region76: #{tpu_custom_call.1} parent=71 // pred_fallthru
          _
      $region72: #{tpu_custom_call.1} parent=5 // pred_fallthru
        _
    $region6: #{tpu_custom_call.1} parent=1 // loop_footer
      %s31 = sadd.s32 1, %s27
    $region7: #{tpu_custom_call.1} parent=1 // loop_footer_branch
      %26 = sbr.rel target = $region3
    $region8: #{tpu_custom_call.1} parent=1 // loop_exit
      _
    %3326 = vsyncpa [#allocation6], 1
    %s3327 = scalar_lea.sflag [#allocation6], 1
    %3328 = vsyncpa %s3327, 1
    %3329 = vsyncpa [#allocation9], 1
    %3330 = vsyncpa [#allocation7], 1
    %s3331 = scalar_lea.sflag [#allocation7], 1
    %3332 = vsyncpa %s3331, 1

</llo_original>
